<compile_context>
chip_gen: v7x
topology: tpu7x:2x2x1
jax: 0.10.0
libtpu: 0.0.40
codegen_flags: <defaults>
</compile_context>

<pallas_src>
import math
from functools import partial

import numpy as np
import jax
import jax.numpy as jnp
from jax.experimental import pallas as pl
from jax.experimental.pallas import tpu as pltpu

# ----------------------------- problem sizes -------------------------------
N_OBJ = 4
N_REL = N_OBJ * (N_OBJ - 1)            # 12 directed relations
N_RELP = 16                            # relations padded to a sublane-tile multiple
N_OBJP = 8                             # objects padded to a sublane-tile multiple
D_STATE = 8                            # [px, py, ang, vx, vy, ang_vel, cx, cy]
D_SHAPE = 3
D_RELINFO = 1
F_REL = D_RELINFO + 9 + 2 * D_SHAPE    # 16 relation features
F_OBJ = 3 + D_SHAPE                    # 6 object features
HIDDEN = 32
EFFECT = 16
N_REL_CLASSES = 2

TB = 256                               # (batch*time) slices per grid step (lane axis)

# ------------------------ synthetic (deterministic) scaler ------------------
STATE_MEAN = np.linspace(-0.1, 0.1, D_STATE).astype(np.float32)
STATE_STD = np.linspace(0.5, 1.5, D_STATE).astype(np.float32)
SHAPE_MEAN = np.array([0.0, 0.0, 0.0], np.float32)
SHAPE_STD = np.array([1.0, 1.0, 2.0], np.float32)
MASS_MEAN = 1.0
MASS_STD = 2.0

DIST_THRESH_SQ = 0.35 * 0.35
STD_PX = float(STATE_STD[0])           # scalar constants used inside the kernel
STD_PY = float(STATE_STD[1])


# -------------------------- static graph structure ---------------------------
def _edge_indexing():
    recv = np.zeros(N_REL, np.int32)
    send = np.zeros(N_REL, np.int32)
    for i in range(N_OBJ):
        for j in range(N_OBJ):
            if i == j:
                continue
            r = i * (N_OBJ - 1) + j - (1 if j > i else 0)   # torch's relation index
            recv[r] = i
            send[r] = j
    return recv, send


RECV_OBJ, SEND_OBJ = _edge_indexing()


def _build_static_mats():
    """Selection / aggregation matrices (host numpy -> kernel inputs)."""
    # per-relation quantities from the flattened scaled state (rows: group*16 + r)
    # groups: 0..5 = (send - recv) of [px, py, ang, vx, vy, ang_vel],
    #         6 = recv angle, 7 = send cx, 8 = send cy
    selq = np.zeros((9 * N_RELP, N_OBJ * D_STATE), np.float32)
    for r in range(N_REL):
        i, j = int(RECV_OBJ[r]), int(SEND_OBJ[r])
        for g in range(6):
            selq[g * N_RELP + r, j * D_STATE + g] += 1.0
            selq[g * N_RELP + r, i * D_STATE + g] -= 1.0
        selq[6 * N_RELP + r, i * D_STATE + 2] = 1.0
        selq[7 * N_RELP + r, j * D_STATE + 6] = 1.0
        selq[8 * N_RELP + r, j * D_STATE + 7] = 1.0

    # per-relation shapes: groups 0..2 receiver shape, 3..5 sender shape
    selsh = np.zeros((6 * N_RELP, N_OBJ * D_SHAPE), np.float32)
    for r in range(N_REL):
        i, j = int(RECV_OBJ[r]), int(SEND_OBJ[r])
        for k in range(D_SHAPE):
            selsh[k * N_RELP + r, i * D_SHAPE + k] = 1.0
            selsh[(3 + k) * N_RELP + r, j * D_SHAPE + k] = 1.0

    # per-object quantities: groups 0..3 = [ang, vx, vy, ang_vel]  (rows: group*8 + n)
    selo = np.zeros((4 * N_OBJP, N_OBJ * D_STATE), np.float32)
    for n in range(N_OBJ):
        selo[0 * N_OBJP + n, n * D_STATE + 2] = 1.0
        selo[1 * N_OBJP + n, n * D_STATE + 3] = 1.0
        selo[2 * N_OBJP + n, n * D_STATE + 4] = 1.0
        selo[3 * N_OBJP + n, n * D_STATE + 5] = 1.0

    # per-object shape: groups 0..2
    selosh = np.zeros((3 * N_OBJP, N_OBJ * D_SHAPE), np.float32)
    for n in range(N_OBJ):
        for k in range(D_SHAPE):
            selosh[k * N_OBJP + n, n * D_SHAPE + k] = 1.0

    # receiver aggregation: agg[e*8+n] = sum_r recv_oh[r, n] * masked_eff[e*16+r]
    recv_ohT_pad = np.zeros((N_OBJP, N_RELP), np.float32)
    for r in range(N_REL):
        recv_ohT_pad[int(RECV_OBJ[r]), r] = 1.0
    aggm = np.kron(np.eye(EFFECT, dtype=np.float32), recv_ohT_pad)   # (128, 256)

    as_j = lambda a: jnp.asarray(a)
    return as_j(selq), as_j(selsh), as_j(selo), as_j(selosh), as_j(aggm)


_STATIC_MATS = _build_static_mats()


# ----------------------------- fused Pallas kernel ---------------------------
def _fused_kernel(x_ref, sh_ref, ri_ref,
                  selq_ref, selsh_ref, selo_ref, selosh_ref, aggm_ref,
                  kw1_ref, b1_ref, kw2_ref, b2_ref, kwp_ref, bp_ref,
                  kwo1_ref, bo1_ref, kwo2_ref, bo2_ref,
                  obj_out_ref, rel_out_ref):
    f32 = jnp.float32
    x = x_ref[...]        # (32, TB)  scaled state, rows = obj*8 + feature
    sh = sh_ref[...]      # (12, TB)  scaled shape, rows = obj*3 + feature
    ri = ri_ref[...]      # (16, TB)  relation_info (raw), rows = relation (padded)

    # ---- graph gathers via static selection matmuls (MXU, N = TB lanes) ----
    q = jnp.dot(selq_ref[...], x, preferred_element_type=f32)      # (144, TB)
    qs = jnp.dot(selsh_ref[...], sh, preferred_element_type=f32)   # (96, TB)

    G = N_RELP
    d_px, d_py, d_ang = q[0 * G:1 * G], q[1 * G:2 * G], q[2 * G:3 * G]
    d_vx, d_vy, d_avl = q[3 * G:4 * G], q[4 * G:5 * G], q[5 * G:6 * G]
    r_ang, s_cx, s_cy = q[6 * G:7 * G], q[7 * G:8 * G], q[8 * G:9 * G]
    r_sh0, r_sh1, r_sh2 = qs[0 * G:1 * G], qs[1 * G:2 * G], qs[2 * G:3 * G]
    s_sh0, s_sh1, s_sh2 = qs[3 * G:4 * G], qs[4 * G:5 * G], qs[5 * G:6 * G]

    # ---- edge mask: raw-position squared distance (no sqrt) -----------------
    dxr = STD_PX * d_px
    dyr = STD_PY * d_py
    d2 = dxr * dxr + dyr * dyr
    mask = jnp.where(jnp.logical_and(d2 > 0.0, d2 < DIST_THRESH_SQ),
                     1.0, 0.0).astype(f32)                          # (16, TB)

    # masked gathers == torch's matmul with the masked relation matrices
    m_dpx, m_dpy = mask * d_px, mask * d_py
    m_dvx, m_dvy = mask * d_vx, mask * d_vy
    m_dang, m_davl = mask * d_ang, mask * d_avl
    m_rang = mask * r_ang
    m_scx, m_scy = mask * s_cx, mask * s_cy
    m_rsh0, m_rsh1, m_rsh2 = mask * r_sh0, mask * r_sh1, mask * r_sh2
    m_ssh0, m_ssh1, m_ssh2 = mask * s_sh0, mask * s_sh1, mask * s_sh2

    # ---- rotate into the receiver's local frame -----------------------------
    c1 = jnp.cos(m_rang)
    s1 = jnp.sin(m_rang)
    # second basis row: cos(th+pi/2) = -sin(th), sin(th+pi/2) = cos(th)
    dpos_a = c1 * m_dpx + s1 * m_dpy
    dpos_b = -s1 * m_dpx + c1 * m_dpy
    dvel_a = c1 * m_dvx + s1 * m_dvy
    dvel_b = -s1 * m_dvx + c1 * m_dvy
    ctl_a = c1 * m_scx + s1 * m_scy
    ctl_b = -s1 * m_scx + c1 * m_scy
    sin2 = jnp.sin(2.0 * m_dang)
    cos2 = jnp.cos(2.0 * m_dang)

    # rel_data in Kronecker layout: row = feature*16 + relation  (torch feature order)
    rel_feats = jnp.concatenate(
        [ri, dpos_a, dpos_b, dvel_a, dvel_b, ctl_a, ctl_b,
         sin2, cos2, m_davl, m_rsh0, m_rsh1, m_rsh2, m_ssh0, m_ssh1, m_ssh2],
        axis=0)                                                     # (256, TB)

    # ---- relation MLP (shared weights kron-expanded over the 16 rel slots) --
    h1 = jnp.maximum(
        jnp.dot(kw1_ref[...], rel_feats, preferred_element_type=f32) + b1_ref[...],
        0.0)                                                        # (512, TB)
    eff = jnp.dot(kw2_ref[...], h1, preferred_element_type=f32) + b2_ref[...]   # (256, TB)
    rel_out_ref[...] = (jnp.dot(kwp_ref[...], eff, preferred_element_type=f32)
                        + bp_ref[...])                              # (32, TB)

    # ---- aggregate effects onto receiver objects ----------------------------
    mask_e = jnp.concatenate([mask] * EFFECT, axis=0)               # (256, TB)
    agg = jnp.dot(aggm_ref[...], eff * mask_e,
                  preferred_element_type=f32)                       # (128, TB)

    # ---- per-object features in the object's own frame ----------------------
    qo = jnp.dot(selo_ref[...], x, preferred_element_type=f32)      # (32, TB)
    qosh = jnp.dot(selosh_ref[...], sh, preferred_element_type=f32)  # (24, TB)
    P = N_OBJP
    o_ang, o_vx, o_vy, o_avl = qo[0 * P:1 * P], qo[1 * P:2 * P], qo[2 * P:3 * P], qo[3 * P:4 * P]
    o_sh0, o_sh1, o_sh2 = qosh[0 * P:1 * P], qosh[1 * P:2 * P], qosh[2 * P:3 * P]
    oc = jnp.cos(o_ang)
    osn = jnp.sin(o_ang)
    v_a = oc * o_vx + osn * o_vy
    v_b = -osn * o_vx + oc * o_vy

    obj_in = jnp.concatenate([v_a, v_b, o_avl, o_sh0, o_sh1, o_sh2, agg],
                             axis=0)                                # (176, TB)

    # ---- object MLP ----------------------------------------------------------
    ho = jnp.maximum(
        jnp.dot(kwo1_ref[...], obj_in, preferred_element_type=f32) + bo1_ref[...],
        0.0)                                                        # (256, TB)
    obj_out_ref[...] = (jnp.dot(kwo2_ref[...], ho, preferred_element_type=f32)
                        + bo2_ref[...])                             # (8, TB)


# ------------------------------ params / glue --------------------------------
def _init_linear(key, fan_in, fan_out):
    kw, kb = jax.random.split(key)
    scale = 1.0 / math.sqrt(fan_in)
    w = jax.random.uniform(kw, (fan_in, fan_out), jnp.float32, -scale, scale)
    b = jax.random.uniform(kb, (fan_out,), jnp.float32, -scale, scale)
    return w, b


def init_params(key):
    keys = jax.random.split(key, 5)
    wr1, br1 = _init_linear(keys[0], F_REL, HIDDEN)
    wr2, br2 = _init_linear(keys[1], HIDDEN, EFFECT)
    wrp, brp = _init_linear(keys[2], EFFECT, N_REL_CLASSES)
    wo1, bo1 = _init_linear(keys[3], F_OBJ + EFFECT, HIDDEN)
    wo2, bo2 = _init_linear(keys[4], HIDDEN, 1)
    return dict(wr1=wr1, br1=br1, wr2=wr2, br2=br2, wrp=wrp, brp=brp,
                wo1=wo1, bo1=bo1, wo2=wo2, bo2=bo2)


def _kron_weights(params):
    """Expand shared MLP weights over the padded relation / object slots."""
    eye_r = jnp.eye(N_RELP, dtype=jnp.float32)
    eye_o = jnp.eye(N_OBJP, dtype=jnp.float32)
    ones_r = jnp.ones((N_RELP, 1), jnp.float32)
    ones_o = jnp.ones((N_OBJP, 1), jnp.float32)
    kw1 = jnp.kron(params["wr1"].T, eye_r)                    # (512, 256)
    b1k = jnp.kron(params["br1"].reshape(-1, 1), ones_r)      # (512, 1)
    kw2 = jnp.kron(params["wr2"].T, eye_r)                    # (256, 512)
    b2k = jnp.kron(params["br2"].reshape(-1, 1), ones_r)      # (256, 1)
    kwp = jnp.kron(params["wrp"].T, eye_r)                    # (32, 256)
    bpk = jnp.kron(params["brp"].reshape(-1, 1), ones_r)      # (32, 1)
    kwo1 = jnp.kron(params["wo1"].T, eye_o)                   # (256, 176)
    bo1k = jnp.kron(params["bo1"].reshape(-1, 1), ones_o)     # (256, 1)
    kwo2 = jnp.kron(params["wo2"].T, eye_o)                   # (8, 256)
    bo2k = jnp.kron(params["bo2"].reshape(-1, 1), ones_o)     # (8, 1)
    return kw1, b1k, kw2, b2k, kwp, bpk, kwo1, bo1k, kwo2, bo2k


def graph_belief_regulator_forward(objects_state, objects_shape, relation_info, params):
    B, T, N, _ = objects_state.shape
    assert N == N_OBJ
    BT = B * T
    nblocks = max(1, -(-BT // TB))
    BTp = nblocks * TB
    pad = BTp - BT

    # ---- scaler.transform folded into the wrapper (plain XLA elementwise) ----
    ds = (objects_state.astype(jnp.float32) - jnp.asarray(STATE_MEAN)) / jnp.asarray(STATE_STD)
    dsh = (objects_shape.astype(jnp.float32) - jnp.asarray(SHAPE_MEAN)) / jnp.asarray(SHAPE_STD)

    # feature-major, batch-in-lanes layout (layout plumbing only)
    x_t = jnp.pad(ds.reshape(BT, N_OBJ * D_STATE), ((0, pad), (0, 0))).T          # (32, BTp)
    sh_t = jnp.pad(dsh.reshape(BT, N_OBJ * D_SHAPE), ((0, pad), (0, 0))).T        # (12, BTp)
    ri_t = jnp.pad(relation_info.astype(jnp.float32).reshape(BT, N_REL * D_RELINFO),
                   ((0, pad), (0, N_RELP - N_REL))).T                             # (16, BTp)

    selq, selsh, selo, selosh, aggm = _STATIC_MATS
    kron_ws = _kron_weights(params)

    data_spec = lambda rows: pl.BlockSpec((rows, TB), lambda i: (0, i))
    const_spec = lambda arr: pl.BlockSpec(arr.shape, lambda i: (0, 0))

    consts = (selq, selsh, selo, selosh, aggm) + kron_ws

    obj_raw, rel_raw = pl.pallas_call(
        _fused_kernel,
        out_shape=(
            jax.ShapeDtypeStruct((N_OBJP, BTp), jnp.float32),
            jax.ShapeDtypeStruct((N_REL_CLASSES * N_RELP, BTp), jnp.float32),
        ),
        grid_spec=pltpu.PrefetchScalarGridSpec(
            num_scalar_prefetch=0,
            grid=(nblocks,),
            in_specs=[
                data_spec(N_OBJ * D_STATE),
                data_spec(N_OBJ * D_SHAPE),
                data_spec(N_RELP),
            ] + [const_spec(c) for c in consts],
            out_specs=[
                pl.BlockSpec((N_OBJP, TB), lambda i: (0, i)),
                pl.BlockSpec((N_REL_CLASSES * N_RELP, TB), lambda i: (0, i)),
            ],
        ),
        compiler_params=pltpu.CompilerParams(
            dimension_semantics=("parallel",),
            vmem_limit_bytes=32 * 1024 * 1024,
        ),
    )(x_t, sh_t, ri_t, *consts)

    # ---- post_proces (scaler.inv_transform_mass) + back to torch layout ------
    obj_pred = obj_raw[:N_OBJ, :BT].T.reshape(B, T, N_OBJ, 1)
    obj_pred = obj_pred * MASS_STD + MASS_MEAN

    rel_pred = rel_raw.reshape(N_REL_CLASSES, N_RELP, BTp)[:, :N_REL, :BT]
    rel_pred = jnp.transpose(rel_pred, (2, 1, 0)).reshape(B, T, N_REL, N_REL_CLASSES)

    return {"obj_to_predict": obj_pred, "rel_to_predict": rel_pred}


# ---------------------------------- main --------------------------------------
if __name__ == "__main__":
    B, T = 2, 3
    key = jax.random.PRNGKey(0)
    k1, k2, k3, kp = jax.random.split(key, 4)
    # positions scaled so that some pairs fall under the 0.35 edge threshold
    objects_state = jax.random.normal(k1, (B, T, N_OBJ, D_STATE), jnp.float32) * 0.3
    objects_shape = jax.random.normal(k2, (B, T, N_OBJ, D_SHAPE), jnp.float32)
    relation_info = jax.random.normal(k3, (B, T, N_REL, D_RELINFO), jnp.float32)
    params = init_params(kp)

    fwd = jax.jit(partial(graph_belief_regulator_forward, params=params))
    out = fwd(objects_state, objects_shape, relation_info)
    jax.block_until_ready(out)
    assert out["obj_to_predict"].shape == (B, T, N_OBJ, 1)
    assert out["rel_to_predict"].shape == (B, T, N_REL, N_REL_CLASSES)
    print("KERNEL_OK")
</pallas_src>

<mosaic_0001>
module attributes {stable_mosaic.version = 11 : i64} {
  func.func @_fused_kernel(%arg0: i32, %arg1: memref<32x256xf32, #tpu.memory_space<vmem>>, %arg2: memref<12x256xf32, #tpu.memory_space<vmem>>, %arg3: memref<16x256xf32, #tpu.memory_space<vmem>>, %arg4: memref<144x32xf32, #tpu.memory_space<vmem>>, %arg5: memref<96x12xf32, #tpu.memory_space<vmem>>, %arg6: memref<32x32xf32, #tpu.memory_space<vmem>>, %arg7: memref<24x12xf32, #tpu.memory_space<vmem>>, %arg8: memref<128x256xf32, #tpu.memory_space<vmem>>, %arg9: memref<512x256xf32, #tpu.memory_space<vmem>>, %arg10: memref<512x1xf32, #tpu.memory_space<vmem>>, %arg11: memref<256x512xf32, #tpu.memory_space<vmem>>, %arg12: memref<256x1xf32, #tpu.memory_space<vmem>>, %arg13: memref<32x256xf32, #tpu.memory_space<vmem>>, %arg14: memref<32x1xf32, #tpu.memory_space<vmem>>, %arg15: memref<256x176xf32, #tpu.memory_space<vmem>>, %arg16: memref<256x1xf32, #tpu.memory_space<vmem>>, %arg17: memref<8x256xf32, #tpu.memory_space<vmem>>, %arg18: memref<8x1xf32, #tpu.memory_space<vmem>>, %arg19: memref<8x256xf32, #tpu.memory_space<vmem>>, %arg20: memref<32x256xf32, #tpu.memory_space<vmem>>) attributes {dimension_semantics = [#tpu.dimension_semantics<parallel>], iteration_bounds = array<i64: 1>, scalar_prefetch = 0 : i64, scratch_operands = 0 : i64, tpu.core_type = #tpu.core_type<tc>, window_params = [{transform_indices = @transform_0, window_bounds = array<i64: 32, 256>}, {transform_indices = @transform_1, window_bounds = array<i64: 12, 256>}, {transform_indices = @transform_2, window_bounds = array<i64: 16, 256>}, {pipeline_mode = #tpu.pipeline_mode<synchronous>, transform_indices = @transform_3, window_bounds = array<i64: 144, 32>}, {pipeline_mode = #tpu.pipeline_mode<synchronous>, transform_indices = @transform_4, window_bounds = array<i64: 96, 12>}, {pipeline_mode = #tpu.pipeline_mode<synchronous>, transform_indices = @transform_5, window_bounds = array<i64: 32, 32>}, {pipeline_mode = #tpu.pipeline_mode<synchronous>, transform_indices = @transform_6, window_bounds = array<i64: 24, 12>}, {pipeline_mode = #tpu.pipeline_mode<synchronous>, transform_indices = @transform_7, window_bounds = array<i64: 128, 256>}, {pipeline_mode = #tpu.pipeline_mode<synchronous>, transform_indices = @transform_8, window_bounds = array<i64: 512, 256>}, {pipeline_mode = #tpu.pipeline_mode<synchronous>, transform_indices = @transform_9, window_bounds = array<i64: 512, 1>}, {pipeline_mode = #tpu.pipeline_mode<synchronous>, transform_indices = @transform_10, window_bounds = array<i64: 256, 512>}, {pipeline_mode = #tpu.pipeline_mode<synchronous>, transform_indices = @transform_11, window_bounds = array<i64: 256, 1>}, {pipeline_mode = #tpu.pipeline_mode<synchronous>, transform_indices = @transform_12, window_bounds = array<i64: 32, 256>}, {pipeline_mode = #tpu.pipeline_mode<synchronous>, transform_indices = @transform_13, window_bounds = array<i64: 32, 1>}, {pipeline_mode = #tpu.pipeline_mode<synchronous>, transform_indices = @transform_14, window_bounds = array<i64: 256, 176>}, {pipeline_mode = #tpu.pipeline_mode<synchronous>, transform_indices = @transform_15, window_bounds = array<i64: 256, 1>}, {pipeline_mode = #tpu.pipeline_mode<synchronous>, transform_indices = @transform_16, window_bounds = array<i64: 8, 256>}, {pipeline_mode = #tpu.pipeline_mode<synchronous>, transform_indices = @transform_17, window_bounds = array<i64: 8, 1>}, {transform_indices = @transform_18, window_bounds = array<i64: 8, 256>}, {transform_indices = @transform_19, window_bounds = array<i64: 32, 256>}]} {
    %c0 = arith.constant 0 : index
    %c0_0 = arith.constant 0 : index
    %0 = vector.load %arg1[%c0, %c0_0] : memref<32x256xf32, #tpu.memory_space<vmem>>, vector<32x256xf32>
    %c0_1 = arith.constant 0 : index
    %c0_2 = arith.constant 0 : index
    %1 = vector.load %arg2[%c0_1, %c0_2] : memref<12x256xf32, #tpu.memory_space<vmem>>, vector<12x256xf32>
    %c0_3 = arith.constant 0 : index
    %c0_4 = arith.constant 0 : index
    %2 = vector.load %arg3[%c0_3, %c0_4] : memref<16x256xf32, #tpu.memory_space<vmem>>, vector<16x256xf32>
    %c0_5 = arith.constant 0 : index
    %c0_6 = arith.constant 0 : index
    %3 = vector.load %arg4[%c0_5, %c0_6] : memref<144x32xf32, #tpu.memory_space<vmem>>, vector<144x32xf32>
    %cst = arith.constant dense<0.000000e+00> : vector<144x256xf32>
    %4 = tpu.matmul %3, %0, %cst {dimension_numbers = #tpu.dot_dimension_numbers<[1], [0], [0], [1], [0, 0, 1, 1], [], []>} : vector<144x32xf32>, vector<32x256xf32>, vector<144x256xf32> -> vector<144x256xf32>
    %c0_7 = arith.constant 0 : index
    %c0_8 = arith.constant 0 : index
    %5 = vector.load %arg5[%c0_7, %c0_8] : memref<96x12xf32, #tpu.memory_space<vmem>>, vector<96x12xf32>
    %cst_9 = arith.constant dense<0.000000e+00> : vector<96x256xf32>
    %6 = tpu.matmul %5, %1, %cst_9 {dimension_numbers = #tpu.dot_dimension_numbers<[1], [0], [0], [1], [0, 0, 1, 1], [], []>} : vector<96x12xf32>, vector<12x256xf32>, vector<96x256xf32> -> vector<96x256xf32>
    %7 = vector.extract_strided_slice %4 {offsets = [0, 0], sizes = [16, 256], strides = [1, 1]} : vector<144x256xf32> to vector<16x256xf32>
    %8 = vector.extract_strided_slice %4 {offsets = [16, 0], sizes = [16, 256], strides = [1, 1]} : vector<144x256xf32> to vector<16x256xf32>
    %9 = vector.extract_strided_slice %4 {offsets = [32, 0], sizes = [16, 256], strides = [1, 1]} : vector<144x256xf32> to vector<16x256xf32>
    %10 = vector.extract_strided_slice %4 {offsets = [48, 0], sizes = [16, 256], strides = [1, 1]} : vector<144x256xf32> to vector<16x256xf32>
    %11 = vector.extract_strided_slice %4 {offsets = [64, 0], sizes = [16, 256], strides = [1, 1]} : vector<144x256xf32> to vector<16x256xf32>
    %12 = vector.extract_strided_slice %4 {offsets = [80, 0], sizes = [16, 256], strides = [1, 1]} : vector<144x256xf32> to vector<16x256xf32>
    %13 = vector.extract_strided_slice %4 {offsets = [96, 0], sizes = [16, 256], strides = [1, 1]} : vector<144x256xf32> to vector<16x256xf32>
    %14 = vector.extract_strided_slice %4 {offsets = [112, 0], sizes = [16, 256], strides = [1, 1]} : vector<144x256xf32> to vector<16x256xf32>
    %15 = vector.extract_strided_slice %4 {offsets = [128, 0], sizes = [16, 256], strides = [1, 1]} : vector<144x256xf32> to vector<16x256xf32>
    %16 = vector.extract_strided_slice %6 {offsets = [0, 0], sizes = [16, 256], strides = [1, 1]} : vector<96x256xf32> to vector<16x256xf32>
    %17 = vector.extract_strided_slice %6 {offsets = [16, 0], sizes = [16, 256], strides = [1, 1]} : vector<96x256xf32> to vector<16x256xf32>
    %18 = vector.extract_strided_slice %6 {offsets = [32, 0], sizes = [16, 256], strides = [1, 1]} : vector<96x256xf32> to vector<16x256xf32>
    %19 = vector.extract_strided_slice %6 {offsets = [48, 0], sizes = [16, 256], strides = [1, 1]} : vector<96x256xf32> to vector<16x256xf32>
    %20 = vector.extract_strided_slice %6 {offsets = [64, 0], sizes = [16, 256], strides = [1, 1]} : vector<96x256xf32> to vector<16x256xf32>
    %21 = vector.extract_strided_slice %6 {offsets = [80, 0], sizes = [16, 256], strides = [1, 1]} : vector<96x256xf32> to vector<16x256xf32>
    %cst_10 = arith.constant 5.000000e-01 : f32
    %22 = vector.broadcast %cst_10 : f32 to vector<16x256xf32>
    %23 = arith.mulf %22, %7 : vector<16x256xf32>
    %cst_11 = arith.constant 0.642857134 : f32
    %24 = vector.broadcast %cst_11 : f32 to vector<16x256xf32>
    %25 = arith.mulf %24, %8 : vector<16x256xf32>
    %26 = arith.mulf %23, %23 : vector<16x256xf32>
    %27 = arith.mulf %25, %25 : vector<16x256xf32>
    %28 = arith.addf %26, %27 : vector<16x256xf32>
    %cst_12 = arith.constant 0.000000e+00 : f32
    %29 = vector.broadcast %cst_12 : f32 to vector<16x256xf32>
    %30 = arith.cmpf ogt, %28, %29 : vector<16x256xf32>
    %cst_13 = arith.constant 1.225000e-01 : f32
    %31 = vector.broadcast %cst_13 : f32 to vector<16x256xf32>
    %32 = arith.cmpf olt, %28, %31 : vector<16x256xf32>
    %33 = arith.andi %30, %32 : vector<16x256xi1>
    %cst_14 = arith.constant 1.000000e+00 : f32
    %cst_15 = arith.constant 0.000000e+00 : f32
    %34 = vector.broadcast %cst_14 : f32 to vector<16x256xf32>
    %35 = vector.broadcast %cst_15 : f32 to vector<16x256xf32>
    %36 = arith.select %33, %34, %35 : vector<16x256xi1>, vector<16x256xf32>
    %37 = arith.mulf %36, %7 : vector<16x256xf32>
    %38 = arith.mulf %36, %8 : vector<16x256xf32>
    %39 = arith.mulf %36, %10 : vector<16x256xf32>
    %40 = arith.mulf %36, %11 : vector<16x256xf32>
    %41 = arith.mulf %36, %9 : vector<16x256xf32>
    %42 = arith.mulf %36, %12 : vector<16x256xf32>
    %43 = arith.mulf %36, %13 : vector<16x256xf32>
    %44 = arith.mulf %36, %14 : vector<16x256xf32>
    %45 = arith.mulf %36, %15 : vector<16x256xf32>
    %46 = arith.mulf %36, %16 : vector<16x256xf32>
    %47 = arith.mulf %36, %17 : vector<16x256xf32>
    %48 = arith.mulf %36, %18 : vector<16x256xf32>
    %49 = arith.mulf %36, %19 : vector<16x256xf32>
    %50 = arith.mulf %36, %20 : vector<16x256xf32>
    %51 = arith.mulf %36, %21 : vector<16x256xf32>
    %52 = math.cos %43 : vector<16x256xf32>
    %53 = math.sin %43 : vector<16x256xf32>
    %54 = arith.mulf %52, %37 : vector<16x256xf32>
    %55 = arith.mulf %53, %38 : vector<16x256xf32>
    %56 = arith.addf %54, %55 : vector<16x256xf32>
    %cst_16 = arith.constant 0.000000e+00 : f32
    %57 = vector.broadcast %cst_16 : f32 to vector<16x256xf32>
    %58 = arith.subf %57, %53 : vector<16x256xf32>
    %59 = arith.mulf %58, %37 : vector<16x256xf32>
    %60 = arith.mulf %52, %38 : vector<16x256xf32>
    %61 = arith.addf %59, %60 : vector<16x256xf32>
    %62 = arith.mulf %52, %39 : vector<16x256xf32>
    %63 = arith.mulf %53, %40 : vector<16x256xf32>
    %64 = arith.addf %62, %63 : vector<16x256xf32>
    %cst_17 = arith.constant 0.000000e+00 : f32
    %65 = vector.broadcast %cst_17 : f32 to vector<16x256xf32>
    %66 = arith.subf %65, %53 : vector<16x256xf32>
    %67 = arith.mulf %66, %39 : vector<16x256xf32>
    %68 = arith.mulf %52, %40 : vector<16x256xf32>
    %69 = arith.addf %67, %68 : vector<16x256xf32>
    %70 = arith.mulf %52, %44 : vector<16x256xf32>
    %71 = arith.mulf %53, %45 : vector<16x256xf32>
    %72 = arith.addf %70, %71 : vector<16x256xf32>
    %cst_18 = arith.constant 0.000000e+00 : f32
    %73 = vector.broadcast %cst_18 : f32 to vector<16x256xf32>
    %74 = arith.subf %73, %53 : vector<16x256xf32>
    %75 = arith.mulf %74, %44 : vector<16x256xf32>
    %76 = arith.mulf %52, %45 : vector<16x256xf32>
    %77 = arith.addf %75, %76 : vector<16x256xf32>
    %cst_19 = arith.constant 2.000000e+00 : f32
    %78 = vector.broadcast %cst_19 : f32 to vector<16x256xf32>
    %79 = arith.mulf %78, %41 : vector<16x256xf32>
    %80 = math.sin %79 : vector<16x256xf32>
    %cst_20 = arith.constant 2.000000e+00 : f32
    %81 = vector.broadcast %cst_20 : f32 to vector<16x256xf32>
    %82 = arith.mulf %81, %41 : vector<16x256xf32>
    %83 = math.cos %82 : vector<16x256xf32>
    %84 = tpu.concatenate %2, %56, %61, %64, %69, %72, %77, %80, %83, %42, %46, %47, %48, %49, %50, %51 in 0 : vector<16x256xf32>, vector<16x256xf32>, vector<16x256xf32>, vector<16x256xf32>, vector<16x256xf32>, vector<16x256xf32>, vector<16x256xf32>, vector<16x256xf32>, vector<16x256xf32>, vector<16x256xf32>, vector<16x256xf32>, vector<16x256xf32>, vector<16x256xf32>, vector<16x256xf32>, vector<16x256xf32>, vector<16x256xf32> -> vector<256x256xf32>
    %c0_21 = arith.constant 0 : index
    %c0_22 = arith.constant 0 : index
    %85 = vector.load %arg9[%c0_21, %c0_22] : memref<512x256xf32, #tpu.memory_space<vmem>>, vector<512x256xf32>
    %cst_23 = arith.constant dense<0.000000e+00> : vector<512x256xf32>
    %86 = tpu.matmul %85, %84, %cst_23 {dimension_numbers = #tpu.dot_dimension_numbers<[1], [0], [0], [1], [0, 0, 1, 1], [], []>} : vector<512x256xf32>, vector<256x256xf32>, vector<512x256xf32> -> vector<512x256xf32>
    %c0_24 = arith.constant 0 : index
    %c0_25 = arith.constant 0 : index
    %87 = vector.load %arg10[%c0_24, %c0_25] : memref<512x1xf32, #tpu.memory_space<vmem>>, vector<512x1xf32>
    %88 = vector.broadcast %87 : vector<512x1xf32> to vector<512x256xf32>
    %89 = arith.addf %86, %88 : vector<512x256xf32>
    %cst_26 = arith.constant 0.000000e+00 : f32
    %90 = vector.broadcast %cst_26 : f32 to vector<512x256xf32>
    %91 = arith.maximumf %89, %90 : vector<512x256xf32>
    %c0_27 = arith.constant 0 : index
    %c0_28 = arith.constant 0 : index
    %92 = vector.load %arg11[%c0_27, %c0_28] : memref<256x512xf32, #tpu.memory_space<vmem>>, vector<256x512xf32>
    %cst_29 = arith.constant dense<0.000000e+00> : vector<256x256xf32>
    %93 = tpu.matmul %92, %91, %cst_29 {dimension_numbers = #tpu.dot_dimension_numbers<[1], [0], [0], [1], [0, 0, 1, 1], [], []>} : vector<256x512xf32>, vector<512x256xf32>, vector<256x256xf32> -> vector<256x256xf32>
    %c0_30 = arith.constant 0 : index
    %c0_31 = arith.constant 0 : index
    %94 = vector.load %arg12[%c0_30, %c0_31] : memref<256x1xf32, #tpu.memory_space<vmem>>, vector<256x1xf32>
    %95 = vector.broadcast %94 : vector<256x1xf32> to vector<256x256xf32>
    %96 = arith.addf %93, %95 : vector<256x256xf32>
    %c0_32 = arith.constant 0 : index
    %c0_33 = arith.constant 0 : index
    %97 = vector.load %arg13[%c0_32, %c0_33] : memref<32x256xf32, #tpu.memory_space<vmem>>, vector<32x256xf32>
    %cst_34 = arith.constant dense<0.000000e+00> : vector<32x256xf32>
    %98 = tpu.matmul %97, %96, %cst_34 {dimension_numbers = #tpu.dot_dimension_numbers<[1], [0], [0], [1], [0, 0, 1, 1], [], []>} : vector<32x256xf32>, vector<256x256xf32>, vector<32x256xf32> -> vector<32x256xf32>
    %c0_35 = arith.constant 0 : index
    %c0_36 = arith.constant 0 : index
    %99 = vector.load %arg14[%c0_35, %c0_36] : memref<32x1xf32, #tpu.memory_space<vmem>>, vector<32x1xf32>
    %100 = vector.broadcast %99 : vector<32x1xf32> to vector<32x256xf32>
    %101 = arith.addf %98, %100 : vector<32x256xf32>
    %c0_37 = arith.constant 0 : index
    %c0_38 = arith.constant 0 : index
    %102 = vector.load %arg20[%c0_37, %c0_38] : memref<32x256xf32, #tpu.memory_space<vmem>>, vector<32x256xf32>
    tpu.vector_store %arg20[%c0_37, %c0_38], %101 {strides = array<i32>} : memref<32x256xf32, #tpu.memory_space<vmem>>, vector<32x256xf32>,
    %103 = tpu.concatenate %36, %36, %36, %36, %36, %36, %36, %36, %36, %36, %36, %36, %36, %36, %36, %36 in 0 : vector<16x256xf32>, vector<16x256xf32>, vector<16x256xf32>, vector<16x256xf32>, vector<16x256xf32>, vector<16x256xf32>, vector<16x256xf32>, vector<16x256xf32>, vector<16x256xf32>, vector<16x256xf32>, vector<16x256xf32>, vector<16x256xf32>, vector<16x256xf32>, vector<16x256xf32>, vector<16x256xf32>, vector<16x256xf32> -> vector<256x256xf32>
    %c0_39 = arith.constant 0 : index
    %c0_40 = arith.constant 0 : index
    %104 = vector.load %arg8[%c0_39, %c0_40] : memref<128x256xf32, #tpu.memory_space<vmem>>, vector<128x256xf32>
    %105 = arith.mulf %96, %103 : vector<256x256xf32>
    %cst_41 = arith.constant dense<0.000000e+00> : vector<128x256xf32>
    %106 = tpu.matmul %104, %105, %cst_41 {dimension_numbers = #tpu.dot_dimension_numbers<[1], [0], [0], [1], [0, 0, 1, 1], [], []>} : vector<128x256xf32>, vector<256x256xf32>, vector<128x256xf32> -> vector<128x256xf32>
    %c0_42 = arith.constant 0 : index
    %c0_43 = arith.constant 0 : index
    %107 = vector.load %arg6[%c0_42, %c0_43] : memref<32x32xf32, #tpu.memory_space<vmem>>, vector<32x32xf32>
    %cst_44 = arith.constant dense<0.000000e+00> : vector<32x256xf32>
    %108 = tpu.matmul %107, %0, %cst_44 {dimension_numbers = #tpu.dot_dimension_numbers<[1], [0], [0], [1], [0, 0, 1, 1], [], []>} : vector<32x32xf32>, vector<32x256xf32>, vector<32x256xf32> -> vector<32x256xf32>
    %c0_45 = arith.constant 0 : index
    %c0_46 = arith.constant 0 : index
    %109 = vector.load %arg7[%c0_45, %c0_46] : memref<24x12xf32, #tpu.memory_space<vmem>>, vector<24x12xf32>
    %cst_47 = arith.constant dense<0.000000e+00> : vector<24x256xf32>
    %110 = tpu.matmul %109, %1, %cst_47 {dimension_numbers = #tpu.dot_dimension_numbers<[1], [0], [0], [1], [0, 0, 1, 1], [], []>} : vector<24x12xf32>, vector<12x256xf32>, vector<24x256xf32> -> vector<24x256xf32>
    %111 = vector.extract_strided_slice %108 {offsets = [0, 0], sizes = [8, 256], strides = [1, 1]} : vector<32x256xf32> to vector<8x256xf32>
    %112 = vector.extract_strided_slice %108 {offsets = [8, 0], sizes = [8, 256], strides = [1, 1]} : vector<32x256xf32> to vector<8x256xf32>
    %113 = vector.extract_strided_slice %108 {offsets = [16, 0], sizes = [8, 256], strides = [1, 1]} : vector<32x256xf32> to vector<8x256xf32>
    %114 = vector.extract_strided_slice %108 {offsets = [24, 0], sizes = [8, 256], strides = [1, 1]} : vector<32x256xf32> to vector<8x256xf32>
    %115 = vector.extract_strided_slice %110 {offsets = [0, 0], sizes = [8, 256], strides = [1, 1]} : vector<24x256xf32> to vector<8x256xf32>
    %116 = vector.extract_strided_slice %110 {offsets = [8, 0], sizes = [8, 256], strides = [1, 1]} : vector<24x256xf32> to vector<8x256xf32>
    %117 = vector.extract_strided_slice %110 {offsets = [16, 0], sizes = [8, 256], strides = [1, 1]} : vector<24x256xf32> to vector<8x256xf32>
    %118 = math.cos %111 : vector<8x256xf32>
    %119 = math.sin %111 : vector<8x256xf32>
    %120 = arith.mulf %118, %112 : vector<8x256xf32>
    %121 = arith.mulf %119, %113 : vector<8x256xf32>
    %122 = arith.addf %120, %121 : vector<8x256xf32>
    %cst_48 = arith.constant 0.000000e+00 : f32
    %123 = vector.broadcast %cst_48 : f32 to vector<8x256xf32>
    %124 = arith.subf %123, %119 : vector<8x256xf32>
    %125 = arith.mulf %124, %112 : vector<8x256xf32>
    %126 = arith.mulf %118, %113 : vector<8x256xf32>
    %127 = arith.addf %125, %126 : vector<8x256xf32>
    %128 = tpu.concatenate %122, %127, %114, %115, %116, %117, %106 in 0 : vector<8x256xf32>, vector<8x256xf32>, vector<8x256xf32>, vector<8x256xf32>, vector<8x256xf32>, vector<8x256xf32>, vector<128x256xf32> -> vector<176x256xf32>
    %c0_49 = arith.constant 0 : index
    %c0_50 = arith.constant 0 : index
    %129 = vector.load %arg15[%c0_49, %c0_50] : memref<256x176xf32, #tpu.memory_space<vmem>>, vector<256x176xf32>
    %cst_51 = arith.constant dense<0.000000e+00> : vector<256x256xf32>
    %130 = tpu.matmul %129, %128, %cst_51 {dimension_numbers = #tpu.dot_dimension_numbers<[1], [0], [0], [1], [0, 0, 1, 1], [], []>} : vector<256x176xf32>, vector<176x256xf32>, vector<256x256xf32> -> vector<256x256xf32>
    %c0_52 = arith.constant 0 : index
    %c0_53 = arith.constant 0 : index
    %131 = vector.load %arg16[%c0_52, %c0_53] : memref<256x1xf32, #tpu.memory_space<vmem>>, vector<256x1xf32>
    %132 = vector.broadcast %131 : vector<256x1xf32> to vector<256x256xf32>
    %133 = arith.addf %130, %132 : vector<256x256xf32>
    %cst_54 = arith.constant 0.000000e+00 : f32
    %134 = vector.broadcast %cst_54 : f32 to vector<256x256xf32>
    %135 = arith.maximumf %133, %134 : vector<256x256xf32>
    %c0_55 = arith.constant 0 : index
    %c0_56 = arith.constant 0 : index
    %136 = vector.load %arg17[%c0_55, %c0_56] : memref<8x256xf32, #tpu.memory_space<vmem>>, vector<8x256xf32>
    %cst_57 = arith.constant dense<0.000000e+00> : vector<8x256xf32>
    %137 = tpu.matmul %136, %135, %cst_57 {dimension_numbers = #tpu.dot_dimension_numbers<[1], [0], [0], [1], [0, 0, 1, 1], [], []>} : vector<8x256xf32>, vector<256x256xf32>, vector<8x256xf32> -> vector<8x256xf32>
    %c0_58 = arith.constant 0 : index
    %c0_59 = arith.constant 0 : index
    %138 = vector.load %arg18[%c0_58, %c0_59] : memref<8x1xf32, #tpu.memory_space<vmem>>, vector<8x1xf32>
    %139 = vector.broadcast %138 : vector<8x1xf32> to vector<8x256xf32>
    %140 = arith.addf %137, %139 : vector<8x256xf32>
    %c0_60 = arith.constant 0 : index
    %c0_61 = arith.constant 0 : index
    %141 = vector.load %arg19[%c0_60, %c0_61] : memref<8x256xf32, #tpu.memory_space<vmem>>, vector<8x256xf32>
    tpu.vector_store %arg19[%c0_60, %c0_61], %140 {strides = array<i32>} : memref<8x256xf32, #tpu.memory_space<vmem>>, vector<8x256xf32>,
    return
  }
  func.func @transform_0(%arg0: i32) -> (i32, i32) {
    %c0_i32 = arith.constant 0 : i32
    %c0_i32_0 = arith.constant 0 : i32
    return %c0_i32, %arg0 : i32, i32
  }
  func.func @transform_1(%arg0: i32) -> (i32, i32) {
    %c0_i32 = arith.constant 0 : i32
    %c0_i32_0 = arith.constant 0 : i32
    return %c0_i32, %arg0 : i32, i32
  }
  func.func @transform_2(%arg0: i32) -> (i32, i32) {
    %c0_i32 = arith.constant 0 : i32
    %c0_i32_0 = arith.constant 0 : i32
    return %c0_i32, %arg0 : i32, i32
  }
  func.func @transform_3(%arg0: i32) -> (i32, i32) {
    %c0_i32 = arith.constant 0 : i32
    %c0_i32_0 = arith.constant 0 : i32
    %c0_i32_1 = arith.constant 0 : i32
    return %c0_i32, %c0_i32_0 : i32, i32
  }
  func.func @transform_4(%arg0: i32) -> (i32, i32) {
    %c0_i32 = arith.constant 0 : i32
    %c0_i32_0 = arith.constant 0 : i32
    %c0_i32_1 = arith.constant 0 : i32
    return %c0_i32, %c0_i32_0 : i32, i32
  }
  func.func @transform_5(%arg0: i32) -> (i32, i32) {
    %c0_i32 = arith.constant 0 : i32
    %c0_i32_0 = arith.constant 0 : i32
    %c0_i32_1 = arith.constant 0 : i32
    return %c0_i32, %c0_i32_0 : i32, i32
  }
  func.func @transform_6(%arg0: i32) -> (i32, i32) {
    %c0_i32 = arith.constant 0 : i32
    %c0_i32_0 = arith.constant 0 : i32
    %c0_i32_1 = arith.constant 0 : i32
    return %c0_i32, %c0_i32_0 : i32, i32
  }
  func.func @transform_7(%arg0: i32) -> (i32, i32) {
    %c0_i32 = arith.constant 0 : i32
    %c0_i32_0 = arith.constant 0 : i32
    %c0_i32_1 = arith.constant 0 : i32
    return %c0_i32, %c0_i32_0 : i32, i32
  }
  func.func @transform_8(%arg0: i32) -> (i32, i32) {
    %c0_i32 = arith.constant 0 : i32
    %c0_i32_0 = arith.constant 0 : i32
    %c0_i32_1 = arith.constant 0 : i32
    return %c0_i32, %c0_i32_0 : i32, i32
  }
  func.func @transform_9(%arg0: i32) -> (i32, i32) {
    %c0_i32 = arith.constant 0 : i32
    %c0_i32_0 = arith.constant 0 : i32
    %c0_i32_1 = arith.constant 0 : i32
    return %c0_i32, %c0_i32_0 : i32, i32
  }
  func.func @transform_10(%arg0: i32) -> (i32, i32) {
    %c0_i32 = arith.constant 0 : i32
    %c0_i32_0 = arith.constant 0 : i32
    %c0_i32_1 = arith.constant 0 : i32
    return %c0_i32, %c0_i32_0 : i32, i32
  }
  func.func @transform_11(%arg0: i32) -> (i32, i32) {
    %c0_i32 = arith.constant 0 : i32
    %c0_i32_0 = arith.constant 0 : i32
    %c0_i32_1 = arith.constant 0 : i32
    return %c0_i32, %c0_i32_0 : i32, i32
  }
  func.func @transform_12(%arg0: i32) -> (i32, i32) {
    %c0_i32 = arith.constant 0 : i32
    %c0_i32_0 = arith.constant 0 : i32
    %c0_i32_1 = arith.constant 0 : i32
    return %c0_i32, %c0_i32_0 : i32, i32
  }
  func.func @transform_13(%arg0: i32) -> (i32, i32) {
    %c0_i32 = arith.constant 0 : i32
    %c0_i32_0 = arith.constant 0 : i32
    %c0_i32_1 = arith.constant 0 : i32
    return %c0_i32, %c0_i32_0 : i32, i32
  }
  func.func @transform_14(%arg0: i32) -> (i32, i32) {
    %c0_i32 = arith.constant 0 : i32
    %c0_i32_0 = arith.constant 0 : i32
    %c0_i32_1 = arith.constant 0 : i32
    return %c0_i32, %c0_i32_0 : i32, i32
  }
  func.func @transform_15(%arg0: i32) -> (i32, i32) {
    %c0_i32 = arith.constant 0 : i32
    %c0_i32_0 = arith.constant 0 : i32
    %c0_i32_1 = arith.constant 0 : i32
    return %c0_i32, %c0_i32_0 : i32, i32
  }
  func.func @transform_16(%arg0: i32) -> (i32, i32) {
    %c0_i32 = arith.constant 0 : i32
    %c0_i32_0 = arith.constant 0 : i32
    %c0_i32_1 = arith.constant 0 : i32
    return %c0_i32, %c0_i32_0 : i32, i32
  }
  func.func @transform_17(%arg0: i32) -> (i32, i32) {
    %c0_i32 = arith.constant 0 : i32
    %c0_i32_0 = arith.constant 0 : i32
    %c0_i32_1 = arith.constant 0 : i32
    return %c0_i32, %c0_i32_0 : i32, i32
  }
  func.func @transform_18(%arg0: i32) -> (i32, i32) {
    %c0_i32 = arith.constant 0 : i32
    %c0_i32_0 = arith.constant 0 : i32
    return %c0_i32, %arg0 : i32, i32
  }
  func.func @transform_19(%arg0: i32) -> (i32, i32) {
    %c0_i32 = arith.constant 0 : i32
    %c0_i32_0 = arith.constant 0 : i32
    return %c0_i32, %arg0 : i32, i32
  }
}

</mosaic_0001>

<llo_original>
// kernel: graph_belief_regulator_forward.1
$region0: #{graph_belief_regulator_forward.1}
  #allocation0 [shape = 'u32[]', space=smem, size = 0x4, offset = 0x4, fixed_abs, tag = 'smem constant byte address 0x4 - core index']
  #allocation1 [shape = 'u32[144,128]{1,0:T(1,128)}', space=vmem, size = 0x12000, scoped, tag = 'internal scratch']
  %s0 = inlined_call_operand.vmem [shape: f32[32,256], index: 0, kind: input, shape index: {}]
  %s1 = inlined_call_operand.vmem [shape: f32[12,256], index: 1, kind: input, shape index: {}]
  %s2 = inlined_call_operand.vmem [shape: f32[16,256], index: 2, kind: input, shape index: {}]
  %s3 = inlined_call_operand.vmem [shape: f32[144,32], index: 3, kind: input, shape index: {}]
  %s4 = inlined_call_operand.vmem [shape: f32[96,12], index: 4, kind: input, shape index: {}]
  %s5 = inlined_call_operand.vmem [shape: f32[32,32], index: 5, kind: input, shape index: {}]
  %s6 = inlined_call_operand.vmem [shape: f32[24,12], index: 6, kind: input, shape index: {}]
  %s7 = inlined_call_operand.vmem [shape: f32[128,256], index: 7, kind: input, shape index: {}]
  %s8 = inlined_call_operand.vmem [shape: f32[512,256], index: 8, kind: input, shape index: {}]
  %s9 = inlined_call_operand.vmem [shape: f32[512,1], index: 9, kind: input, shape index: {}]
  %s10 = inlined_call_operand.vmem [shape: f32[256,512], index: 10, kind: input, shape index: {}]
  %s11 = inlined_call_operand.vmem [shape: f32[256,1], index: 11, kind: input, shape index: {}]
  %s12 = inlined_call_operand.vmem [shape: f32[32,256], index: 12, kind: input, shape index: {}]
  %s13 = inlined_call_operand.vmem [shape: f32[32,1], index: 13, kind: input, shape index: {}]
  %s14 = inlined_call_operand.vmem [shape: f32[256,176], index: 14, kind: input, shape index: {}]
  %s15 = inlined_call_operand.vmem [shape: f32[256,1], index: 15, kind: input, shape index: {}]
  %s16 = inlined_call_operand.vmem [shape: f32[8,256], index: 16, kind: input, shape index: {}]
  %s17 = inlined_call_operand.vmem [shape: f32[8,1], index: 17, kind: input, shape index: {}]
  %s18 = inlined_call_operand.vmem [shape: f32[8,256], index: 18, kind: output, shape index: {0}]
  %s19 = inlined_call_operand.vmem [shape: f32[32,256], index: 19, kind: output, shape index: {1}]
  %20 = xla_tuple %s18, %s19
  %s21 = sld [smem:[#allocation0]]
  $region90: #{graph_belief_regulator_forward.1} parent=0
    _
  %s23 = ssub.s32 1, %s21
  %s24 = scalar_select 0, %s23, %s21
  // Predicated region
  $region2: #{graph_belief_regulator_forward.1} parent=0 // pred_check
    _
  $region3: #{graph_belief_regulator_forward.1} parent=0 // pred_check_branch
    %26 = sbr.rel (0) target = $region5
  $region4: #{graph_belief_regulator_forward.1} parent=0 // pred_region
    _
  $region5: #{graph_belief_regulator_forward.1} parent=0 // pred_fallthru
    _
  // Predicated region
  $region6: #{graph_belief_regulator_forward.1} parent=0 // pred_check
    _
  $region7: #{graph_belief_regulator_forward.1} parent=0 // pred_check_branch
    %28 = sbr.rel (0) target = $region9
  $region8: #{graph_belief_regulator_forward.1} parent=0 // pred_region
    _
  $region9: #{graph_belief_regulator_forward.1} parent=0 // pred_fallthru
    _
  // Predicated region
  $region10: #{graph_belief_regulator_forward.1} parent=0 // pred_check
    _
  $region11: #{graph_belief_regulator_forward.1} parent=0 // pred_check_branch
    %30 = sbr.rel (0) target = $region13
  $region12: #{graph_belief_regulator_forward.1} parent=0 // pred_region
    _
  $region13: #{graph_belief_regulator_forward.1} parent=0 // pred_fallthru
    _
  // Predicated region
  $region14: #{graph_belief_regulator_forward.1} parent=0 // pred_check
    _
  $region15: #{graph_belief_regulator_forward.1} parent=0 // pred_check_branch
    %32 = sbr.rel (0) target = $region17
  $region16: #{graph_belief_regulator_forward.1} parent=0 // pred_region
    _
  $region17: #{graph_belief_regulator_forward.1} parent=0 // pred_fallthru
    _
  // Predicated region
  $region18: #{graph_belief_regulator_forward.1} parent=0 // pred_check
    _
  $region19: #{graph_belief_regulator_forward.1} parent=0 // pred_check_branch
    %34 = sbr.rel (0) target = $region21
  $region20: #{graph_belief_regulator_forward.1} parent=0 // pred_region
    _
  $region21: #{graph_belief_regulator_forward.1} parent=0 // pred_fallthru
    _
  // Predicated region
  $region22: #{graph_belief_regulator_forward.1} parent=0 // pred_check
    _
  $region23: #{graph_belief_regulator_forward.1} parent=0 // pred_check_branch
    %36 = sbr.rel (0) target = $region25
  $region24: #{graph_belief_regulator_forward.1} parent=0 // pred_region
    _
  $region25: #{graph_belief_regulator_forward.1} parent=0 // pred_fallthru
    _
  // Predicated region
  $region26: #{graph_belief_regulator_forward.1} parent=0 // pred_check
    _
  $region27: #{graph_belief_regulator_forward.1} parent=0 // pred_check_branch
    %38 = sbr.rel (0) target = $region29
  $region28: #{graph_belief_regulator_forward.1} parent=0 // pred_region
    _
  $region29: #{graph_belief_regulator_forward.1} parent=0 // pred_fallthru
    _
  // Predicated region
  $region30: #{graph_belief_regulator_forward.1} parent=0 // pred_check
    _
  $region31: #{graph_belief_regulator_forward.1} parent=0 // pred_check_branch
    %40 = sbr.rel (0) target = $region33
  $region32: #{graph_belief_regulator_forward.1} parent=0 // pred_region
    _
  $region33: #{graph_belief_regulator_forward.1} parent=0 // pred_fallthru
    _
  // Predicated region
  $region34: #{graph_belief_regulator_forward.1} parent=0 // pred_check
    _
  $region35: #{graph_belief_regulator_forward.1} parent=0 // pred_check_branch
    %42 = sbr.rel (0) target = $region37
  $region36: #{graph_belief_regulator_forward.1} parent=0 // pred_region
    _
  $region37: #{graph_belief_regulator_forward.1} parent=0 // pred_fallthru
    _
  // Predicated region
  $region38: #{graph_belief_regulator_forward.1} parent=0 // pred_check
    _
  $region39: #{graph_belief_regulator_forward.1} parent=0 // pred_check_branch
    %44 = sbr.rel (0) target = $region41
  $region40: #{graph_belief_regulator_forward.1} parent=0 // pred_region
    _
  $region41: #{graph_belief_regulator_forward.1} parent=0 // pred_fallthru
    _
  // Predicated region
  $region42: #{graph_belief_regulator_forward.1} parent=0 // pred_check
    _
  $region43: #{graph_belief_regulator_forward.1} parent=0 // pred_check_branch
    %46 = sbr.rel (0) target = $region45
  $region44: #{graph_belief_regulator_forward.1} parent=0 // pred_region
    _
  $region45: #{graph_belief_regulator_forward.1} parent=0 // pred_fallthru
    _
  // Predicated region
  $region46: #{graph_belief_regulator_forward.1} parent=0 // pred_check
    _
  $region47: #{graph_belief_regulator_forward.1} parent=0 // pred_check_branch
    %48 = sbr.rel (0) target = $region49
  $region48: #{graph_belief_regulator_forward.1} parent=0 // pred_region
    _
  $region49: #{graph_belief_regulator_forward.1} parent=0 // pred_fallthru
    _
  // Predicated region
  $region50: #{graph_belief_regulator_forward.1} parent=0 // pred_check
    _
  $region51: #{graph_belief_regulator_forward.1} parent=0 // pred_check_branch
    %50 = sbr.rel (0) target = $region53
  $region52: #{graph_belief_regulator_forward.1} parent=0 // pred_region
    _
  $region53: #{graph_belief_regulator_forward.1} parent=0 // pred_fallthru
    _
  // Predicated region
  $region54: #{graph_belief_regulator_forward.1} parent=0 // pred_check
    _
  $region55: #{graph_belief_regulator_forward.1} parent=0 // pred_check_branch
    %52 = sbr.rel (0) target = $region57
  $region56: #{graph_belief_regulator_forward.1} parent=0 // pred_region
    _
  $region57: #{graph_belief_regulator_forward.1} parent=0 // pred_fallthru
    _
  // Predicated region
  $region58: #{graph_belief_regulator_forward.1} parent=0 // pred_check
    _
  $region59: #{graph_belief_regulator_forward.1} parent=0 // pred_check_branch
    %54 = sbr.rel (0) target = $region61
  $region60: #{graph_belief_regulator_forward.1} parent=0 // pred_region
    _
  $region61: #{graph_belief_regulator_forward.1} parent=0 // pred_fallthru
    _
  // Predicated region
  $region62: #{graph_belief_regulator_forward.1} parent=0 // pred_check
    _
  $region63: #{graph_belief_regulator_forward.1} parent=0 // pred_check_branch
    %56 = sbr.rel (0) target = $region65
  $region64: #{graph_belief_regulator_forward.1} parent=0 // pred_region
    _
  $region65: #{graph_belief_regulator_forward.1} parent=0 // pred_fallthru
    _
  // Predicated region
  $region66: #{graph_belief_regulator_forward.1} parent=0 // pred_check
    _
  $region67: #{graph_belief_regulator_forward.1} parent=0 // pred_check_branch
    %58 = sbr.rel (0) target = $region69
  $region68: #{graph_belief_regulator_forward.1} parent=0 // pred_region
    _
  $region69: #{graph_belief_regulator_forward.1} parent=0 // pred_fallthru
    _
  // Predicated region
  $region70: #{graph_belief_regulator_forward.1} parent=0 // pred_check
    _
  $region71: #{graph_belief_regulator_forward.1} parent=0 // pred_check_branch
    %60 = sbr.rel (0) target = $region73
  $region72: #{graph_belief_regulator_forward.1} parent=0 // pred_region
    _
  $region73: #{graph_belief_regulator_forward.1} parent=0 // pred_fallthru
    _
  %v61 = vld [vmem:[%s0] sm:$0xff]
  %v62 = vld [vmem:[%s0 + $0x8] sm:$0xff]
  %v63 = vld [vmem:[%s0 + $0x10] sm:$0xff]
  %v64 = vld [vmem:[%s0 + $0x18] sm:$0xff]
  %v65 = vld [vmem:[%s0 + $0x20] sm:$0xff]
  %v66 = vld [vmem:[%s0 + $0x28] sm:$0xff]
  %v67 = vld [vmem:[%s0 + $0x30] sm:$0xff]
  %v68 = vld [vmem:[%s0 + $0x38] sm:$0xff]
  %v69 = vld [vmem:[%s1] sm:$0xff]
  %v70 = vld [vmem:[%s1 + $0x8] sm:$0xff]
  %v71 = vld [vmem:[%s1 + $0x10] sm:$0xf]
  %v72 = vld [vmem:[%s1 + $0x18] sm:$0xf]
  %v73 = vld [vmem:[%s2] sm:$0xff]
  %v74 = vld [vmem:[%s2 + $0x8] sm:$0xff]
  %v75 = vld [vmem:[%s2 + $0x10] sm:$0xff]
  %v76 = vld [vmem:[%s2 + $0x18] sm:$0xff]
  %v77 = vld [vmem:[%s3] sm:$0xff]
  %v78 = vld [vmem:[%s3 + $0x8] sm:$0xff]
  %v79 = vld [vmem:[%s3 + $0x10] sm:$0xff]
  %v80 = vld [vmem:[%s3 + $0x18] sm:$0xff]
  %v81 = vld [vmem:[%s3 + $0x20] sm:$0xff]
  %v82 = vld [vmem:[%s3 + $0x28] sm:$0xff]
  %v83 = vld [vmem:[%s3 + $0x30] sm:$0xff]
  %v84 = vld [vmem:[%s3 + $0x38] sm:$0xff]
  %v85 = vld [vmem:[%s3 + $0x40] sm:$0xff]
  %v86 = vld [vmem:[%s3 + $0x48] sm:$0xff]
  %v87 = vld [vmem:[%s3 + $0x50] sm:$0xff]
  %v88 = vld [vmem:[%s3 + $0x58] sm:$0xff]
  %v89 = vld [vmem:[%s3 + $0x60] sm:$0xff]
  %v90 = vld [vmem:[%s3 + $0x68] sm:$0xff]
  %v91 = vld [vmem:[%s3 + $0x70] sm:$0xff]
  %v92 = vld [vmem:[%s3 + $0x78] sm:$0xff]
  %v93 = vld [vmem:[%s3 + $0x80] sm:$0xff]
  %v94 = vld [vmem:[%s3 + $0x88] sm:$0xff]
  %vm95 = vcmask 261120
  %v97 = vsel %vm95, %v77, 0
  %v100 = vsel %vm95, %v78, 0
  %v103 = vsel %vm95, %v79, 0
  %v106 = vsel %vm95, %v80, 0
  %v109 = vsel %vm95, %v81, 0
  %v112 = vsel %vm95, %v82, 0
  %v115 = vsel %vm95, %v83, 0
  %v118 = vsel %vm95, %v84, 0
  %v121 = vsel %vm95, %v85, 0
  %v124 = vsel %vm95, %v86, 0
  %v127 = vsel %vm95, %v87, 0
  %v130 = vsel %vm95, %v88, 0
  %v133 = vsel %vm95, %v89, 0
  %v136 = vsel %vm95, %v90, 0
  %v139 = vsel %vm95, %v91, 0
  %v142 = vsel %vm95, %v92, 0
  %v145 = vsel %vm95, %v93, 0
  %v148 = vsel %vm95, %v94, 0
  %150 = vmatprep.subr.mxu0 %v62
  %151 = vmatpush1.msra.mxu0 %v61
  %152 = vmatprep.subr.mxu0 %v64
  %153 = vmatpush1.msra.mxu0 %v63
  %154 = vmatprep.subr.mxu0 %v66
  %155 = vmatpush1.msra.mxu0 %v65
  %156 = vmatprep.subr.mxu0 %v68
  %157 = vmatpush1.msra.mxu0 %v67
  %158 = vmatprep.subr.mxu0 0.0
  %159 = vmatpush1.msra.mxu0 0.0
  %160 = vmatprep.subr.mxu0 0.0
  %161 = vmatpush1.msra.mxu0 0.0
  %162 = vmatprep.subr.mxu0 0.0
  %163 = vmatpush1.msra.mxu0 0.0
  %164 = vmatprep.subr.mxu0 0.0
  %165 = vmatpush1.msra.mxu0 0.0
  %166 = vmatprep.subr.mxu0 0.0
  %167 = vmatpush1.msra.mxu0 0.0
  %168 = vmatprep.subr.mxu0 0.0
  %169 = vmatpush1.msra.mxu0 0.0
  %170 = vmatprep.subr.mxu0 0.0
  %171 = vmatpush1.msra.mxu0 0.0
  %172 = vmatprep.subr.mxu0 0.0
  %173 = vmatpush1.msra.mxu0 0.0
  %174 = vmatprep.subr.mxu0 0.0
  %175 = vmatpush1.msra.mxu0 0.0
  %176 = vmatprep.subr.mxu0 0.0
  %177 = vmatpush1.msra.mxu0 0.0
  %178 = vmatprep.subr.mxu0 0.0
  %179 = vmatpush1.msra.mxu0 0.0
  %180 = vmatprep.subr.mxu0 0.0
  %181 = vmatpush1.msra.mxu0 0.0
  %182 = vmatprep.subr.mxu0 0.0
  %183 = vmatpush1.msra.mxu0 0.0
  %184 = vmatprep.subr.mxu0 0.0
  %185 = vmatpush1.msra.mxu0 0.0
  %186 = vmatprep.subr.mxu0 0.0
  %187 = vmatpush1.msra.mxu0 0.0
  %188 = vmatprep.subr.mxu0 0.0
  %189 = vmatpush1.msra.mxu0 0.0
  %190 = vmatprep.subr.mxu0 0.0
  %191 = vmatpush1.msra.mxu0 0.0
  %192 = vmatprep.subr.mxu0 0.0
  %193 = vmatpush1.msra.mxu0 0.0
  %194 = vmatprep.subr.mxu0 0.0
  %195 = vmatpush1.msra.mxu0 0.0
  %196 = vmatprep.subr.mxu0 0.0
  %197 = vmatpush1.msra.mxu0 0.0
  %198 = vmatprep.subr.mxu0 0.0
  %199 = vmatpush1.msra.mxu0 0.0
  %200 = vmatprep.subr.mxu0 0.0
  %201 = vmatpush1.msra.mxu0 0.0
  %202 = vmatprep.subr.mxu0 0.0
  %203 = vmatpush1.msra.mxu0 0.0
  %204 = vmatprep.subr.mxu0 0.0
  %205 = vmatpush1.msra.mxu0 0.0
  %206 = vmatprep.subr.mxu0 0.0
  %207 = vmatpush1.msra.mxu0 0.0
  %208 = vmatprep.subr.mxu0 0.0
  %209 = vmatpush1.msra.mxu0 0.0
  %210 = vmatprep.subr.mxu0 0.0
  %211 = vmatpush1.msra.mxu0 0.0
  %212 = vmatprep.subr.mxu0 0.0
  %213 = vmatpush1.msra.mxu0 0.0
  %214 = vmatprep.mubr.f32.mxu0 0.0
  %215 = vmatmul.mubr.f32.gmra.mrb[0].mxu0 %v97
  %v216 = vpop.f32.mrb[0].mxu0
  %v217 = vadd.f32 0.0, %v216
  %v218 = vpop.f32.mrb[0].mxu0
  %v219 = vadd.f32 0.0, %v218
  %220 = vmatprep.mubr.f32.mxu0 0.0
  %221 = vmatmul.mubr.f32.gmra.mrb[0].mxu0 %v100
  %v222 = vpop.f32.mrb[0].mxu0
  %v223 = vadd.f32 0.0, %v222
  %v224 = vpop.f32.mrb[0].mxu0
  %v225 = vadd.f32 0.0, %v224
  %226 = vmatprep.mubr.f32.mxu0 0.0
  %227 = vmatmul.mubr.f32.gmra.mrb[0].mxu0 %v103
  %v228 = vpop.f32.mrb[0].mxu0
  %v229 = vadd.f32 0.0, %v228
  %v230 = vpop.f32.mrb[0].mxu0
  %v231 = vadd.f32 0.0, %v230
  %232 = vmatprep.mubr.f32.mxu0 0.0
  %233 = vmatmul.mubr.f32.gmra.mrb[0].mxu0 %v106
  %v234 = vpop.f32.mrb[0].mxu0
  %v235 = vadd.f32 0.0, %v234
  %v236 = vpop.f32.mrb[0].mxu0
  %v237 = vadd.f32 0.0, %v236
  %238 = vmatprep.mubr.f32.mxu0 0.0
  %239 = vmatmul.mubr.f32.gmra.mrb[0].mxu0 %v109
  %v240 = vpop.f32.mrb[0].mxu0
  %v241 = vadd.f32 0.0, %v240
  %v242 = vpop.f32.mrb[0].mxu0
  %v243 = vadd.f32 0.0, %v242
  %244 = vmatprep.mubr.f32.mxu0 0.0
  %245 = vmatmul.mubr.f32.gmra.mrb[0].mxu0 %v112
  %v246 = vpop.f32.mrb[0].mxu0
  %v247 = vadd.f32 0.0, %v246
  %v248 = vpop.f32.mrb[0].mxu0
  %v249 = vadd.f32 0.0, %v248
  %250 = vmatprep.mubr.f32.mxu0 0.0
  %251 = vmatmul.mubr.f32.gmra.mrb[0].mxu0 %v115
  %v252 = vpop.f32.mrb[0].mxu0
  %v253 = vadd.f32 0.0, %v252
  %v254 = vpop.f32.mrb[0].mxu0
  %v255 = vadd.f32 0.0, %v254
  %256 = vmatprep.mubr.f32.mxu0 0.0
  %257 = vmatmul.mubr.f32.gmra.mrb[0].mxu0 %v118
  %v258 = vpop.f32.mrb[0].mxu0
  %v259 = vadd.f32 0.0, %v258
  %v260 = vpop.f32.mrb[0].mxu0
  %v261 = vadd.f32 0.0, %v260
  %262 = vmatprep.mubr.f32.mxu0 0.0
  %263 = vmatmul.mubr.f32.gmra.mrb[0].mxu0 %v121
  %v264 = vpop.f32.mrb[0].mxu0
  %v265 = vadd.f32 0.0, %v264
  %v266 = vpop.f32.mrb[0].mxu0
  %v267 = vadd.f32 0.0, %v266
  %268 = vmatprep.mubr.f32.mxu0 0.0
  %269 = vmatmul.mubr.f32.gmra.mrb[0].mxu0 %v124
  %v270 = vpop.f32.mrb[0].mxu0
  %v271 = vadd.f32 0.0, %v270
  %v272 = vpop.f32.mrb[0].mxu0
  %v273 = vadd.f32 0.0, %v272
  %274 = vmatprep.mubr.f32.mxu0 0.0
  %275 = vmatmul.mubr.f32.gmra.mrb[0].mxu0 %v127
  %v276 = vpop.f32.mrb[0].mxu0
  %v277 = vadd.f32 0.0, %v276
  %v278 = vpop.f32.mrb[0].mxu0
  %v279 = vadd.f32 0.0, %v278
  %280 = vmatprep.mubr.f32.mxu0 0.0
  %281 = vmatmul.mubr.f32.gmra.mrb[0].mxu0 %v130
  %v282 = vpop.f32.mrb[0].mxu0
  %v283 = vadd.f32 0.0, %v282
  %v284 = vpop.f32.mrb[0].mxu0
  %v285 = vadd.f32 0.0, %v284
  %286 = vmatprep.mubr.f32.mxu0 0.0
  %287 = vmatmul.mubr.f32.gmra.mrb[0].mxu0 %v133
  %v288 = vpop.f32.mrb[0].mxu0
  %v289 = vadd.f32 0.0, %v288
  %v290 = vpop.f32.mrb[0].mxu0
  %v291 = vadd.f32 0.0, %v290
  %292 = vmatprep.mubr.f32.mxu0 0.0
  %293 = vmatmul.mubr.f32.gmra.mrb[0].mxu0 %v136
  %v294 = vpop.f32.mrb[0].mxu0
  %v295 = vadd.f32 0.0, %v294
  %v296 = vpop.f32.mrb[0].mxu0
  %v297 = vadd.f32 0.0, %v296
  %298 = vmatprep.mubr.f32.mxu0 0.0
  %299 = vmatmul.mubr.f32.gmra.mrb[0].mxu0 %v139
  %v300 = vpop.f32.mrb[0].mxu0
  %v301 = vadd.f32 0.0, %v300
  %v302 = vpop.f32.mrb[0].mxu0
  %v303 = vadd.f32 0.0, %v302
  %304 = vmatprep.mubr.f32.mxu0 0.0
  %305 = vmatmul.mubr.f32.gmra.mrb[0].mxu0 %v142
  %v306 = vpop.f32.mrb[0].mxu0
  %v307 = vadd.f32 0.0, %v306
  %v308 = vpop.f32.mrb[0].mxu0
  %v309 = vadd.f32 0.0, %v308
  %310 = vmatprep.mubr.f32.mxu0 0.0
  %311 = vmatmul.mubr.f32.gmra.mrb[0].mxu0 %v145
  %v312 = vpop.f32.mrb[0].mxu0
  %v313 = vadd.f32 0.0, %v312
  %v314 = vpop.f32.mrb[0].mxu0
  %v315 = vadd.f32 0.0, %v314
  %316 = vmatprep.mubr.f32.mxu0 0.0
  %317 = vmatmul.mubr.f32.gmra.mrb[0].mxu0 %v148
  %v318 = vpop.f32.mrb[0].mxu0
  %v319 = vadd.f32 0.0, %v318
  %v320 = vpop.f32.mrb[0].mxu0
  %v321 = vadd.f32 0.0, %v320
  %322 = vdwg.mxu0
  %v323 = vld [vmem:[%s4] sm:$0xff]
  %v324 = vld [vmem:[%s4 + $0x8] sm:$0xff]
  %v325 = vld [vmem:[%s4 + $0x10] sm:$0xff]
  %v326 = vld [vmem:[%s4 + $0x18] sm:$0xff]
  %v327 = vld [vmem:[%s4 + $0x20] sm:$0xff]
  %v328 = vld [vmem:[%s4 + $0x28] sm:$0xff]
  %v329 = vld [vmem:[%s4 + $0x30] sm:$0xff]
  %v330 = vld [vmem:[%s4 + $0x38] sm:$0xff]
  %v331 = vld [vmem:[%s4 + $0x40] sm:$0xff]
  %v332 = vld [vmem:[%s4 + $0x48] sm:$0xff]
  %v333 = vld [vmem:[%s4 + $0x50] sm:$0xff]
  %v334 = vld [vmem:[%s4 + $0x58] sm:$0xff]
  %vm335 = vcmask 97280
  %v337 = vsel %vm335, %v323, 0
  %v340 = vsel %vm335, %v324, 0
  %v343 = vsel %vm335, %v325, 0
  %v346 = vsel %vm335, %v326, 0
  %v349 = vsel %vm335, %v327, 0
  %v352 = vsel %vm335, %v328, 0
  %v355 = vsel %vm335, %v329, 0
  %v358 = vsel %vm335, %v330, 0
  %v361 = vsel %vm335, %v331, 0
  %v364 = vsel %vm335, %v332, 0
  %v367 = vsel %vm335, %v333, 0
  %v370 = vsel %vm335, %v334, 0
  %vm372 = vcmask 1043456
  %v374 = vsel %vm372, %v71, 0
  %v377 = vsel %vm372, %v72, 0
  %379 = vmatprep.subr.mxu0 %v70
  %380 = vmatpush1.msra.mxu0 %v69
  %381 = vmatprep.subr.mxu0 %v377
  %382 = vmatpush1.msra.mxu0 %v374
  %383 = vmatprep.subr.mxu0 0.0
  %384 = vmatpush1.msra.mxu0 0.0
  %385 = vmatprep.subr.mxu0 0.0
  %386 = vmatpush1.msra.mxu0 0.0
  %387 = vmatprep.subr.mxu0 0.0
  %388 = vmatpush1.msra.mxu0 0.0
  %389 = vmatprep.subr.mxu0 0.0
  %390 = vmatpush1.msra.mxu0 0.0
  %391 = vmatprep.subr.mxu0 0.0
  %392 = vmatpush1.msra.mxu0 0.0
  %393 = vmatprep.subr.mxu0 0.0
  %394 = vmatpush1.msra.mxu0 0.0
  %395 = vmatprep.subr.mxu0 0.0
  %396 = vmatpush1.msra.mxu0 0.0
  %397 = vmatprep.subr.mxu0 0.0
  %398 = vmatpush1.msra.mxu0 0.0
  %399 = vmatprep.subr.mxu0 0.0
  %400 = vmatpush1.msra.mxu0 0.0
  %401 = vmatprep.subr.mxu0 0.0
  %402 = vmatpush1.msra.mxu0 0.0
  %403 = vmatprep.subr.mxu0 0.0
  %404 = vmatpush1.msra.mxu0 0.0
  %405 = vmatprep.subr.mxu0 0.0
  %406 = vmatpush1.msra.mxu0 0.0
  %407 = vmatprep.subr.mxu0 0.0
  %408 = vmatpush1.msra.mxu0 0.0
  %409 = vmatprep.subr.mxu0 0.0
  %410 = vmatpush1.msra.mxu0 0.0
  %411 = vmatprep.subr.mxu0 0.0
  %412 = vmatpush1.msra.mxu0 0.0
  %413 = vmatprep.subr.mxu0 0.0
  %414 = vmatpush1.msra.mxu0 0.0
  %415 = vmatprep.subr.mxu0 0.0
  %416 = vmatpush1.msra.mxu0 0.0
  %417 = vmatprep.subr.mxu0 0.0
  %418 = vmatpush1.msra.mxu0 0.0
  %419 = vmatprep.subr.mxu0 0.0
  %420 = vmatpush1.msra.mxu0 0.0
  %421 = vmatprep.subr.mxu0 0.0
  %422 = vmatpush1.msra.mxu0 0.0
  %423 = vmatprep.subr.mxu0 0.0
  %424 = vmatpush1.msra.mxu0 0.0
  %425 = vmatprep.subr.mxu0 0.0
  %426 = vmatpush1.msra.mxu0 0.0
  %427 = vmatprep.subr.mxu0 0.0
  %428 = vmatpush1.msra.mxu0 0.0
  %429 = vmatprep.subr.mxu0 0.0
  %430 = vmatpush1.msra.mxu0 0.0
  %431 = vmatprep.subr.mxu0 0.0
  %432 = vmatpush1.msra.mxu0 0.0
  %433 = vmatprep.subr.mxu0 0.0
  %434 = vmatpush1.msra.mxu0 0.0
  %435 = vmatprep.subr.mxu0 0.0
  %436 = vmatpush1.msra.mxu0 0.0
  %437 = vmatprep.subr.mxu0 0.0
  %438 = vmatpush1.msra.mxu0 0.0
  %439 = vmatprep.subr.mxu0 0.0
  %440 = vmatpush1.msra.mxu0 0.0
  %441 = vmatprep.subr.mxu0 0.0
  %442 = vmatpush1.msra.mxu0 0.0
  %443 = vmatprep.mubr.f32.mxu0 0.0
  %444 = vmatmul.mubr.f32.gmra.mrb[0].mxu0 %v337
  %v445 = vpop.f32.mrb[0].mxu0
  %v446 = vadd.f32 0.0, %v445
  %v447 = vpop.f32.mrb[0].mxu0
  %v448 = vadd.f32 0.0, %v447
  %449 = vmatprep.mubr.f32.mxu0 0.0
  %450 = vmatmul.mubr.f32.gmra.mrb[0].mxu0 %v340
  %v451 = vpop.f32.mrb[0].mxu0
  %v452 = vadd.f32 0.0, %v451
  %v453 = vpop.f32.mrb[0].mxu0
  %v454 = vadd.f32 0.0, %v453
  %455 = vmatprep.mubr.f32.mxu0 0.0
  %456 = vmatmul.mubr.f32.gmra.mrb[0].mxu0 %v343
  %v457 = vpop.f32.mrb[0].mxu0
  %v458 = vadd.f32 0.0, %v457
  %v459 = vpop.f32.mrb[0].mxu0
  %v460 = vadd.f32 0.0, %v459
  %461 = vmatprep.mubr.f32.mxu0 0.0
  %462 = vmatmul.mubr.f32.gmra.mrb[0].mxu0 %v346
  %v463 = vpop.f32.mrb[0].mxu0
  %v464 = vadd.f32 0.0, %v463
  %v465 = vpop.f32.mrb[0].mxu0
  %v466 = vadd.f32 0.0, %v465
  %467 = vmatprep.mubr.f32.mxu0 0.0
  %468 = vmatmul.mubr.f32.gmra.mrb[0].mxu0 %v349
  %v469 = vpop.f32.mrb[0].mxu0
  %v470 = vadd.f32 0.0, %v469
  %v471 = vpop.f32.mrb[0].mxu0
  %v472 = vadd.f32 0.0, %v471
  %473 = vmatprep.mubr.f32.mxu0 0.0
  %474 = vmatmul.mubr.f32.gmra.mrb[0].mxu0 %v352
  %v475 = vpop.f32.mrb[0].mxu0
  %v476 = vadd.f32 0.0, %v475
  %v477 = vpop.f32.mrb[0].mxu0
  %v478 = vadd.f32 0.0, %v477
  %479 = vmatprep.mubr.f32.mxu0 0.0
  %480 = vmatmul.mubr.f32.gmra.mrb[0].mxu0 %v355
  %v481 = vpop.f32.mrb[0].mxu0
  %v482 = vadd.f32 0.0, %v481
  %v483 = vpop.f32.mrb[0].mxu0
  %v484 = vadd.f32 0.0, %v483
  %485 = vmatprep.mubr.f32.mxu0 0.0
  %486 = vmatmul.mubr.f32.gmra.mrb[0].mxu0 %v358
  %v487 = vpop.f32.mrb[0].mxu0
  %v488 = vadd.f32 0.0, %v487
  %v489 = vpop.f32.mrb[0].mxu0
  %v490 = vadd.f32 0.0, %v489
  %491 = vmatprep.mubr.f32.mxu0 0.0
  %492 = vmatmul.mubr.f32.gmra.mrb[0].mxu0 %v361
  %v493 = vpop.f32.mrb[0].mxu0
  %v494 = vadd.f32 0.0, %v493
  %v495 = vpop.f32.mrb[0].mxu0
  %v496 = vadd.f32 0.0, %v495
  %497 = vmatprep.mubr.f32.mxu0 0.0
  %498 = vmatmul.mubr.f32.gmra.mrb[0].mxu0 %v364
  %v499 = vpop.f32.mrb[0].mxu0
  %v500 = vadd.f32 0.0, %v499
  %v501 = vpop.f32.mrb[0].mxu0
  %v502 = vadd.f32 0.0, %v501
  %503 = vmatprep.mubr.f32.mxu0 0.0
  %504 = vmatmul.mubr.f32.gmra.mrb[0].mxu0 %v367
  %v505 = vpop.f32.mrb[0].mxu0
  %v506 = vadd.f32 0.0, %v505
  %v507 = vpop.f32.mrb[0].mxu0
  %v508 = vadd.f32 0.0, %v507
  %509 = vmatprep.mubr.f32.mxu0 0.0
  %510 = vmatmul.mubr.f32.gmra.mrb[0].mxu0 %v370
  %v511 = vpop.f32.mrb[0].mxu0
  %v512 = vadd.f32 0.0, %v511
  %v513 = vpop.f32.mrb[0].mxu0
  %v514 = vadd.f32 0.0, %v513
  %515 = vdwg.mxu0
  %v516 = vmul.f32 %v217, 0.5
  %v517 = vmul.f32 %v219, 0.5
  %v518 = vmul.f32 %v223, 0.5
  %v519 = vmul.f32 %v225, 0.5
  %v520 = vmul.f32 %v229, 0.64285713
  %v521 = vmul.f32 %v231, 0.64285713
  %v522 = vmul.f32 %v235, 0.64285713
  %v523 = vmul.f32 %v237, 0.64285713
  %v524 = vmul.f32 %v516, %v516
  %v525 = vmul.f32 %v517, %v517
  %v526 = vmul.f32 %v518, %v518
  %v527 = vmul.f32 %v519, %v519
  %v528 = vmul.f32 %v520, %v520
  %v529 = vmul.f32 %v521, %v521
  %v530 = vmul.f32 %v522, %v522
  %v531 = vmul.f32 %v523, %v523
  %v532 = vadd.f32 %v524, %v528
  %v533 = vadd.f32 %v525, %v529
  %v534 = vadd.f32 %v526, %v530
  %v535 = vadd.f32 %v527, %v531
  %vm536 = vcmp.gt.f32.partialorder %v532, 0.0
  %vm537 = vcmp.gt.f32.partialorder %v533, 0.0
  %vm538 = vcmp.gt.f32.partialorder %v534, 0.0
  %vm539 = vcmp.gt.f32.partialorder %v535, 0.0
  %vm540 = vcmp.lt.f32.partialorder %v532, 0.1225
  %vm541 = vcmp.lt.f32.partialorder %v533, 0.1225
  %vm542 = vcmp.lt.f32.partialorder %v534, 0.1225
  %vm543 = vcmp.lt.f32.partialorder %v535, 0.1225
  %vm544 = vmand %vm536, %vm540
  %vm545 = vmand %vm537, %vm541
  %vm546 = vmand %vm538, %vm542
  %vm547 = vmand %vm539, %vm543
  %v548 = vsel %vm544, 1.0, 0.0
  %v549 = vsel %vm545, 1.0, 0.0
  %v550 = vsel %vm546, 1.0, 0.0
  %v551 = vsel %vm547, 1.0, 0.0
  %v552 = vmul.f32 %v548, %v217
  %v553 = vmul.f32 %v549, %v219
  %v554 = vmul.f32 %v550, %v223
  %v555 = vmul.f32 %v551, %v225
  %v556 = vmul.f32 %v548, %v229
  %v557 = vmul.f32 %v549, %v231
  %v558 = vmul.f32 %v550, %v235
  %v559 = vmul.f32 %v551, %v237
  %v560 = vmul.f32 %v548, %v253
  %v561 = vmul.f32 %v549, %v255
  %v562 = vmul.f32 %v550, %v259
  %v563 = vmul.f32 %v551, %v261
  %v564 = vmul.f32 %v548, %v265
  %v565 = vmul.f32 %v549, %v267
  %v566 = vmul.f32 %v550, %v271
  %v567 = vmul.f32 %v551, %v273
  %v568 = vmul.f32 %v548, %v241
  %v569 = vmul.f32 %v549, %v243
  %v570 = vmul.f32 %v550, %v247
  %v571 = vmul.f32 %v551, %v249
  %v572 = vmul.f32 %v548, %v277
  %v573 = vmul.f32 %v549, %v279
  %v574 = vmul.f32 %v550, %v283
  %v575 = vmul.f32 %v551, %v285
  %v576 = vmul.f32 %v548, %v289
  %v577 = vmul.f32 %v549, %v291
  %v578 = vmul.f32 %v550, %v295
  %v579 = vmul.f32 %v551, %v297
  %v580 = vmul.f32 %v548, %v301
  %v581 = vmul.f32 %v549, %v303
  %v582 = vmul.f32 %v550, %v307
  %v583 = vmul.f32 %v551, %v309
  %v584 = vmul.f32 %v548, %v313
  %v585 = vmul.f32 %v549, %v315
  %v586 = vmul.f32 %v550, %v319
  %v587 = vmul.f32 %v551, %v321
  %v588 = vmul.f32 %v548, %v446
  %v589 = vmul.f32 %v549, %v448
  %v590 = vmul.f32 %v550, %v452
  %v591 = vmul.f32 %v551, %v454
  %v592 = vmul.f32 %v548, %v458
  %v593 = vmul.f32 %v549, %v460
  %v594 = vmul.f32 %v550, %v464
  %v595 = vmul.f32 %v551, %v466
  %v596 = vmul.f32 %v548, %v470
  %v597 = vmul.f32 %v549, %v472
  %v598 = vmul.f32 %v550, %v476
  %v599 = vmul.f32 %v551, %v478
  %v600 = vmul.f32 %v548, %v482
  %v601 = vmul.f32 %v549, %v484
  %v602 = vmul.f32 %v550, %v488
  %v603 = vmul.f32 %v551, %v490
  %v604 = vmul.f32 %v548, %v494
  %v605 = vmul.f32 %v549, %v496
  %v606 = vmul.f32 %v550, %v500
  %v607 = vmul.f32 %v551, %v502
  %v608 = vmul.f32 %v548, %v506
  %v609 = vmul.f32 %v549, %v508
  %v610 = vmul.f32 %v550, %v512
  %v611 = vmul.f32 %v551, %v514
  %v612 = vand.u32 2147483647, %v576
  %vm613 = vcmp.le.f32.partialorder %v612, 0.7853982
  %vm614 = vcmp.lt.s32.totalorder %v576, 0
  %v615 = vand.u32 %v576, 2139095040
  %v616 = vshrl.u32 %v615, 23
  %v617 = vsub.s32 %v616, 127
  %v618 = vand.u32 2147483647, %v576
  %v619 = vand.u32 %v618, 8388607
  %v620 = vor.u32 %v619, 8388608
  %v621 = vsub.s32 0, %v620
  %v622 = vadd.s32 %v617, 1
  %vm623 = vcmp.gt.s32.totalorder %v622, 0
  %v624 = vsel %vm623, %v622, 0
  %v625 = vshrl.u32 %v624, 5
  %v626 = vand.u32 %v624, 31
  %v627 = vsub.s32 32, %v626
  %v628 = vshrl.u32 683565275, %v627
  %v629 = vshll.u32 683565275, %v626
  %v630 = vshrl.u32 2475754826, %v627
  %v631 = vor.u32 %v629, %v630
  %v632 = vshll.u32 2475754826, %v626
  %v633 = vshrl.u32 2131351028, %v627
  %v634 = vor.u32 %v632, %v633
  %v635 = vshll.u32 2131351028, %v626
  %v636 = vshrl.u32 2102212464, %v627
  %v637 = vor.u32 %v635, %v636
  %v638 = vshll.u32 2102212464, %v626
  %v639 = vshrl.u32 920167782, %v627
  %v640 = vor.u32 %v638, %v639
  %v641 = vshll.u32 920167782, %v626
  %v642 = vshrl.u32 1326507024, %v627
  %v643 = vor.u32 %v641, %v642
  %vm644 = vcmp.lt.s32.totalorder %v625, 1
  %vm645 = vcmp.lt.s32.totalorder %v625, 2
  %vm646 = vcmp.lt.s32.totalorder %v625, 3
  %vm647 = vcmp.lt.s32.totalorder %v625, 4
  %v648 = vsel %vm644, %v628, %v631
  %v649 = vsel %vm647, %v637, 2102212464
  %v650 = vsel %vm646, %v634, %v649
  %v651 = vsel %vm645, %v648, %v650
  %v652 = vsel %vm644, %v631, %v634
  %v653 = vsel %vm647, %v640, 920167782
  %v654 = vsel %vm646, %v637, %v653
  %v655 = vsel %vm645, %v652, %v654
  %v656 = vsel %vm644, %v634, %v637
  %v657 = vsel %vm647, %v643, 1326507024
  %v658 = vsel %vm646, %v640, %v657
  %v659 = vsel %vm645, %v656, %v658
  %v660 = vshll.u32 %v620, 8
  %v661 = vmul.u32.u64.compose %v660, %v659
  %v662 = vextract.low.u32 %v661
  %v663 = vextract.high.u32 %v661
  %v664 = vmul.u32.u64.compose %v660, %v655
  %v665 = vextract.low.u32 %v664
  %v666 = vextract.high.u32 %v664
  %v667 = vmul.u32 %v660, %v651
  %v668 = vadd.s32 %v663, %v665
  %vm669 = vc.u32 %v663, %v665
  %v670 = vadd.s32 %v666, 1
  %v671 = vsel %vm669, %v670, %v666
  %v672 = vadd.s32 %v667, %v671
  %v673 = vadd.s32 %v672, 536870912
  %v674 = vshrl.u32 %v673, 30
  %v675 = vshll.u32 %v674, 30
  %v676 = vsub.s32 %v672, %v675
  %vm677 = vcmp.lt.s32.totalorder %v676, 0
  %v678 = vsub.s32 0, %v676
  %v679 = vsel %vm677, %v678, %v676
  %v680 = vclz %v679
  %v681 = vsub.s32 %v680, 2
  %vm682 = vcmp.gt.s32.totalorder 0, %v681
  %v683 = vsel %vm682, 0, %v681
  %v684 = vsub.s32 32, %v683
  %v685 = vshll.u32 %v676, %v683
  %v686 = vshrl.u32 %v668, %v684
  %v687 = vor.u32 %v685, %v686
  %v688 = vsub.s32 4294967266, %v683
  %v689 = vadd.s32 %v688, 127
  %v690 = vshll.u32 %v689, 23
  %v691 = vor.u32 4788187, %v690
  %v692 = vand.u32 2147483647, %v691
  %v694 = vcvt.s32.f32 %v687
  %v695 = vmul.f32 %v694, %v692
  %v696 = vxor.u32 %v695, 2147483648
  %v697 = vsel %vm614, %v696, %v695
  %v698 = vsub.s32 4, %v674
  %v699 = vsel %vm614, %v698, %v674
  %v700 = vsel %vm613, %v576, %v697
  %v701 = vsel %vm613, 0, %v699
  %v702 = vcosq.f32.pop %v700
  %v703 = vsinq.f32.pop %v700
  %vm704 = vweird.f32 %v576
  %v705 = vand.u32 %v701, 3
  %vm706 = vcmp.lt.s32.totalorder %v705, 2
  %vm707 = vcmp.eq.s32.totalorder %v705, 0
  %v708 = vxor.u32 %v703, 2147483648
  %v709 = vsel %vm707, %v702, %v708
  %vm710 = vcmp.eq.s32.totalorder %v705, 2
  %v711 = vxor.u32 %v702, 2147483648
  %v712 = vsel %vm710, %v711, %v703
  %v713 = vsel %vm706, %v709, %v712
  %v714 = vsel %vm704, nan, %v713
  %v715 = vand.u32 2147483647, %v577
  %vm716 = vcmp.le.f32.partialorder %v715, 0.7853982
  %vm717 = vcmp.lt.s32.totalorder %v577, 0
  %v718 = vand.u32 %v577, 2139095040
  %v719 = vshrl.u32 %v718, 23
  %v720 = vsub.s32 %v719, 127
  %v721 = vand.u32 2147483647, %v577
  %v722 = vand.u32 %v721, 8388607
  %v723 = vor.u32 %v722, 8388608
  %v724 = vsub.s32 0, %v723
  %v725 = vadd.s32 %v720, 1
  %vm726 = vcmp.gt.s32.totalorder %v725, 0
  %v727 = vsel %vm726, %v725, 0
  %v728 = vshrl.u32 %v727, 5
  %v729 = vand.u32 %v727, 31
  %v730 = vsub.s32 32, %v729
  %v731 = vshrl.u32 683565275, %v730
  %v732 = vshll.u32 683565275, %v729
  %v733 = vshrl.u32 2475754826, %v730
  %v734 = vor.u32 %v732, %v733
  %v735 = vshll.u32 2475754826, %v729
  %v736 = vshrl.u32 2131351028, %v730
  %v737 = vor.u32 %v735, %v736
  %v738 = vshll.u32 2131351028, %v729
  %v739 = vshrl.u32 2102212464, %v730
  %v740 = vor.u32 %v738, %v739
  %v741 = vshll.u32 2102212464, %v729
  %v742 = vshrl.u32 920167782, %v730
  %v743 = vor.u32 %v741, %v742
  %v744 = vshll.u32 920167782, %v729
  %v745 = vshrl.u32 1326507024, %v730
  %v746 = vor.u32 %v744, %v745
  %vm747 = vcmp.lt.s32.totalorder %v728, 1
  %vm748 = vcmp.lt.s32.totalorder %v728, 2
  %vm749 = vcmp.lt.s32.totalorder %v728, 3
  %vm750 = vcmp.lt.s32.totalorder %v728, 4
  %v751 = vsel %vm747, %v731, %v734
  %v752 = vsel %vm750, %v740, 2102212464
  %v753 = vsel %vm749, %v737, %v752
  %v754 = vsel %vm748, %v751, %v753
  %v755 = vsel %vm747, %v734, %v737
  %v756 = vsel %vm750, %v743, 920167782
  %v757 = vsel %vm749, %v740, %v756
  %v758 = vsel %vm748, %v755, %v757
  %v759 = vsel %vm747, %v737, %v740
  %v760 = vsel %vm750, %v746, 1326507024
  %v761 = vsel %vm749, %v743, %v760
  %v762 = vsel %vm748, %v759, %v761
  %v763 = vshll.u32 %v723, 8
  %v764 = vmul.u32.u64.compose %v763, %v762
  %v765 = vextract.low.u32 %v764
  %v766 = vextract.high.u32 %v764
  %v767 = vmul.u32.u64.compose %v763, %v758
  %v768 = vextract.low.u32 %v767
  %v769 = vextract.high.u32 %v767
  %v770 = vmul.u32 %v763, %v754
  %v771 = vadd.s32 %v766, %v768
  %vm772 = vc.u32 %v766, %v768
  %v773 = vadd.s32 %v769, 1
  %v774 = vsel %vm772, %v773, %v769
  %v775 = vadd.s32 %v770, %v774
  %v776 = vadd.s32 %v775, 536870912
  %v777 = vshrl.u32 %v776, 30
  %v778 = vshll.u32 %v777, 30
  %v779 = vsub.s32 %v775, %v778
  %vm780 = vcmp.lt.s32.totalorder %v779, 0
  %v781 = vsub.s32 0, %v779
  %v782 = vsel %vm780, %v781, %v779
  %v783 = vclz %v782
  %v784 = vsub.s32 %v783, 2
  %vm785 = vcmp.gt.s32.totalorder 0, %v784
  %v786 = vsel %vm785, 0, %v784
  %v787 = vsub.s32 32, %v786
  %v788 = vshll.u32 %v779, %v786
  %v789 = vshrl.u32 %v771, %v787
  %v790 = vor.u32 %v788, %v789
  %v791 = vsub.s32 4294967266, %v786
  %v792 = vadd.s32 %v791, 127
  %v793 = vshll.u32 %v792, 23
  %v794 = vor.u32 4788187, %v793
  %v795 = vand.u32 2147483647, %v794
  %v797 = vcvt.s32.f32 %v790
  %v798 = vmul.f32 %v797, %v795
  %v799 = vxor.u32 %v798, 2147483648
  %v800 = vsel %vm717, %v799, %v798
  %v801 = vsub.s32 4, %v777
  %v802 = vsel %vm717, %v801, %v777
  %v803 = vsel %vm716, %v577, %v800
  %v804 = vsel %vm716, 0, %v802
  %v805 = vcosq.f32.pop %v803
  %v806 = vsinq.f32.pop %v803
  %vm807 = vweird.f32 %v577
  %v808 = vand.u32 %v804, 3
  %vm809 = vcmp.lt.s32.totalorder %v808, 2
  %vm810 = vcmp.eq.s32.totalorder %v808, 0
  %v811 = vxor.u32 %v806, 2147483648
  %v812 = vsel %vm810, %v805, %v811
  %vm813 = vcmp.eq.s32.totalorder %v808, 2
  %v814 = vxor.u32 %v805, 2147483648
  %v815 = vsel %vm813, %v814, %v806
  %v816 = vsel %vm809, %v812, %v815
  %v817 = vsel %vm807, nan, %v816
  %v818 = vand.u32 2147483647, %v578
  %vm819 = vcmp.le.f32.partialorder %v818, 0.7853982
  %vm820 = vcmp.lt.s32.totalorder %v578, 0
  %v821 = vand.u32 %v578, 2139095040
  %v822 = vshrl.u32 %v821, 23
  %v823 = vsub.s32 %v822, 127
  %v824 = vand.u32 2147483647, %v578
  %v825 = vand.u32 %v824, 8388607
  %v826 = vor.u32 %v825, 8388608
  %v827 = vsub.s32 0, %v826
  %v828 = vadd.s32 %v823, 1
  %vm829 = vcmp.gt.s32.totalorder %v828, 0
  %v830 = vsel %vm829, %v828, 0
  %v831 = vshrl.u32 %v830, 5
  %v832 = vand.u32 %v830, 31
  %v833 = vsub.s32 32, %v832
  %v834 = vshrl.u32 683565275, %v833
  %v835 = vshll.u32 683565275, %v832
  %v836 = vshrl.u32 2475754826, %v833
  %v837 = vor.u32 %v835, %v836
  %v838 = vshll.u32 2475754826, %v832
  %v839 = vshrl.u32 2131351028, %v833
  %v840 = vor.u32 %v838, %v839
  %v841 = vshll.u32 2131351028, %v832
  %v842 = vshrl.u32 2102212464, %v833
  %v843 = vor.u32 %v841, %v842
  %v844 = vshll.u32 2102212464, %v832
  %v845 = vshrl.u32 920167782, %v833
  %v846 = vor.u32 %v844, %v845
  %v847 = vshll.u32 920167782, %v832
  %v848 = vshrl.u32 1326507024, %v833
  %v849 = vor.u32 %v847, %v848
  %vm850 = vcmp.lt.s32.totalorder %v831, 1
  %vm851 = vcmp.lt.s32.totalorder %v831, 2
  %vm852 = vcmp.lt.s32.totalorder %v831, 3
  %vm853 = vcmp.lt.s32.totalorder %v831, 4
  %v854 = vsel %vm850, %v834, %v837
  %v855 = vsel %vm853, %v843, 2102212464
  %v856 = vsel %vm852, %v840, %v855
  %v857 = vsel %vm851, %v854, %v856
  %v858 = vsel %vm850, %v837, %v840
  %v859 = vsel %vm853, %v846, 920167782
  %v860 = vsel %vm852, %v843, %v859
  %v861 = vsel %vm851, %v858, %v860
  %v862 = vsel %vm850, %v840, %v843
  %v863 = vsel %vm853, %v849, 1326507024
  %v864 = vsel %vm852, %v846, %v863
  %v865 = vsel %vm851, %v862, %v864
  %v866 = vshll.u32 %v826, 8
  %v867 = vmul.u32.u64.compose %v866, %v865
  %v868 = vextract.low.u32 %v867
  %v869 = vextract.high.u32 %v867
  %v870 = vmul.u32.u64.compose %v866, %v861
  %v871 = vextract.low.u32 %v870
  %v872 = vextract.high.u32 %v870
  %v873 = vmul.u32 %v866, %v857
  %v874 = vadd.s32 %v869, %v871
  %vm875 = vc.u32 %v869, %v871
  %v876 = vadd.s32 %v872, 1
  %v877 = vsel %vm875, %v876, %v872
  %v878 = vadd.s32 %v873, %v877
  %v879 = vadd.s32 %v878, 536870912
  %v880 = vshrl.u32 %v879, 30
  %v881 = vshll.u32 %v880, 30
  %v882 = vsub.s32 %v878, %v881
  %vm883 = vcmp.lt.s32.totalorder %v882, 0
  %v884 = vsub.s32 0, %v882
  %v885 = vsel %vm883, %v884, %v882
  %v886 = vclz %v885
  %v887 = vsub.s32 %v886, 2
  %vm888 = vcmp.gt.s32.totalorder 0, %v887
  %v889 = vsel %vm888, 0, %v887
  %v890 = vsub.s32 32, %v889
  %v891 = vshll.u32 %v882, %v889
  %v892 = vshrl.u32 %v874, %v890
  %v893 = vor.u32 %v891, %v892
  %v894 = vsub.s32 4294967266, %v889
  %v895 = vadd.s32 %v894, 127
  %v896 = vshll.u32 %v895, 23
  %v897 = vor.u32 4788187, %v896
  %v898 = vand.u32 2147483647, %v897
  %v900 = vcvt.s32.f32 %v893
  %v901 = vmul.f32 %v900, %v898
  %v902 = vxor.u32 %v901, 2147483648
  %v903 = vsel %vm820, %v902, %v901
  %v904 = vsub.s32 4, %v880
  %v905 = vsel %vm820, %v904, %v880
  %v906 = vsel %vm819, %v578, %v903
  %v907 = vsel %vm819, 0, %v905
  %v908 = vcosq.f32.pop %v906
  %v909 = vsinq.f32.pop %v906
  %vm910 = vweird.f32 %v578
  %v911 = vand.u32 %v907, 3
  %vm912 = vcmp.lt.s32.totalorder %v911, 2
  %vm913 = vcmp.eq.s32.totalorder %v911, 0
  %v914 = vxor.u32 %v909, 2147483648
  %v915 = vsel %vm913, %v908, %v914
  %vm916 = vcmp.eq.s32.totalorder %v911, 2
  %v917 = vxor.u32 %v908, 2147483648
  %v918 = vsel %vm916, %v917, %v909
  %v919 = vsel %vm912, %v915, %v918
  %v920 = vsel %vm910, nan, %v919
  %v921 = vand.u32 2147483647, %v579
  %vm922 = vcmp.le.f32.partialorder %v921, 0.7853982
  %vm923 = vcmp.lt.s32.totalorder %v579, 0
  %v924 = vand.u32 %v579, 2139095040
  %v925 = vshrl.u32 %v924, 23
  %v926 = vsub.s32 %v925, 127
  %v927 = vand.u32 2147483647, %v579
  %v928 = vand.u32 %v927, 8388607
  %v929 = vor.u32 %v928, 8388608
  %v930 = vsub.s32 0, %v929
  %v931 = vadd.s32 %v926, 1
  %vm932 = vcmp.gt.s32.totalorder %v931, 0
  %v933 = vsel %vm932, %v931, 0
  %v934 = vshrl.u32 %v933, 5
  %v935 = vand.u32 %v933, 31
  %v936 = vsub.s32 32, %v935
  %v937 = vshrl.u32 683565275, %v936
  %v938 = vshll.u32 683565275, %v935
  %v939 = vshrl.u32 2475754826, %v936
  %v940 = vor.u32 %v938, %v939
  %v941 = vshll.u32 2475754826, %v935
  %v942 = vshrl.u32 2131351028, %v936
  %v943 = vor.u32 %v941, %v942
  %v944 = vshll.u32 2131351028, %v935
  %v945 = vshrl.u32 2102212464, %v936
  %v946 = vor.u32 %v944, %v945
  %v947 = vshll.u32 2102212464, %v935
  %v948 = vshrl.u32 920167782, %v936
  %v949 = vor.u32 %v947, %v948
  %v950 = vshll.u32 920167782, %v935
  %v951 = vshrl.u32 1326507024, %v936
  %v952 = vor.u32 %v950, %v951
  %vm953 = vcmp.lt.s32.totalorder %v934, 1
  %vm954 = vcmp.lt.s32.totalorder %v934, 2
  %vm955 = vcmp.lt.s32.totalorder %v934, 3
  %vm956 = vcmp.lt.s32.totalorder %v934, 4
  %v957 = vsel %vm953, %v937, %v940
  %v958 = vsel %vm956, %v946, 2102212464
  %v959 = vsel %vm955, %v943, %v958
  %v960 = vsel %vm954, %v957, %v959
  %v961 = vsel %vm953, %v940, %v943
  %v962 = vsel %vm956, %v949, 920167782
  %v963 = vsel %vm955, %v946, %v962
  %v964 = vsel %vm954, %v961, %v963
  %v965 = vsel %vm953, %v943, %v946
  %v966 = vsel %vm956, %v952, 1326507024
  %v967 = vsel %vm955, %v949, %v966
  %v968 = vsel %vm954, %v965, %v967
  %v969 = vshll.u32 %v929, 8
  %v970 = vmul.u32.u64.compose %v969, %v968
  %v971 = vextract.low.u32 %v970
  %v972 = vextract.high.u32 %v970
  %v973 = vmul.u32.u64.compose %v969, %v964
  %v974 = vextract.low.u32 %v973
  %v975 = vextract.high.u32 %v973
  %v976 = vmul.u32 %v969, %v960
  %v977 = vadd.s32 %v972, %v974
  %vm978 = vc.u32 %v972, %v974
  %v979 = vadd.s32 %v975, 1
  %v980 = vsel %vm978, %v979, %v975
  %v981 = vadd.s32 %v976, %v980
  %v982 = vadd.s32 %v981, 536870912
  %v983 = vshrl.u32 %v982, 30
  %v984 = vshll.u32 %v983, 30
  %v985 = vsub.s32 %v981, %v984
  %vm986 = vcmp.lt.s32.totalorder %v985, 0
  %v987 = vsub.s32 0, %v985
  %v988 = vsel %vm986, %v987, %v985
  %v989 = vclz %v988
  %v990 = vsub.s32 %v989, 2
  %vm991 = vcmp.gt.s32.totalorder 0, %v990
  %v992 = vsel %vm991, 0, %v990
  %v993 = vsub.s32 32, %v992
  %v994 = vshll.u32 %v985, %v992
  %v995 = vshrl.u32 %v977, %v993
  %v996 = vor.u32 %v994, %v995
  %v997 = vsub.s32 4294967266, %v992
  %v998 = vadd.s32 %v997, 127
  %v999 = vshll.u32 %v998, 23
  %v1000 = vor.u32 4788187, %v999
  %v1001 = vand.u32 2147483647, %v1000
  %v1003 = vcvt.s32.f32 %v996
  %v1004 = vmul.f32 %v1003, %v1001
  %v1005 = vxor.u32 %v1004, 2147483648
  %v1006 = vsel %vm923, %v1005, %v1004
  %v1007 = vsub.s32 4, %v983
  %v1008 = vsel %vm923, %v1007, %v983
  %v1009 = vsel %vm922, %v579, %v1006
  %v1010 = vsel %vm922, 0, %v1008
  %v1011 = vcosq.f32.pop %v1009
  %v1012 = vsinq.f32.pop %v1009
  %vm1013 = vweird.f32 %v579
  %v1014 = vand.u32 %v1010, 3
  %vm1015 = vcmp.lt.s32.totalorder %v1014, 2
  %vm1016 = vcmp.eq.s32.totalorder %v1014, 0
  %v1017 = vxor.u32 %v1012, 2147483648
  %v1018 = vsel %vm1016, %v1011, %v1017
  %vm1019 = vcmp.eq.s32.totalorder %v1014, 2
  %v1020 = vxor.u32 %v1011, 2147483648
  %v1021 = vsel %vm1019, %v1020, %v1012
  %v1022 = vsel %vm1015, %v1018, %v1021
  %v1023 = vsel %vm1013, nan, %v1022
  %v1024 = vand.u32 2147483647, %v576
  %vm1025 = vcmp.le.f32.partialorder %v1024, 0.7853982
  %vm1026 = vcmp.lt.s32.totalorder %v576, 0
  %v1027 = vand.u32 %v576, 2139095040
  %v1028 = vshrl.u32 %v1027, 23
  %v1029 = vsub.s32 %v1028, 127
  %v1030 = vand.u32 2147483647, %v576
  %v1031 = vand.u32 %v1030, 8388607
  %v1032 = vor.u32 %v1031, 8388608
  %v1033 = vsub.s32 0, %v1032
  %v1034 = vadd.s32 %v1029, 1
  %vm1035 = vcmp.gt.s32.totalorder %v1034, 0
  %v1036 = vsel %vm1035, %v1034, 0
  %v1037 = vshrl.u32 %v1036, 5
  %v1038 = vand.u32 %v1036, 31
  %v1039 = vsub.s32 32, %v1038
  %v1040 = vshrl.u32 683565275, %v1039
  %v1041 = vshll.u32 683565275, %v1038
  %v1042 = vshrl.u32 2475754826, %v1039
  %v1043 = vor.u32 %v1041, %v1042
  %v1044 = vshll.u32 2475754826, %v1038
  %v1045 = vshrl.u32 2131351028, %v1039
  %v1046 = vor.u32 %v1044, %v1045
  %v1047 = vshll.u32 2131351028, %v1038
  %v1048 = vshrl.u32 2102212464, %v1039
  %v1049 = vor.u32 %v1047, %v1048
  %v1050 = vshll.u32 2102212464, %v1038
  %v1051 = vshrl.u32 920167782, %v1039
  %v1052 = vor.u32 %v1050, %v1051
  %v1053 = vshll.u32 920167782, %v1038
  %v1054 = vshrl.u32 1326507024, %v1039
  %v1055 = vor.u32 %v1053, %v1054
  %vm1056 = vcmp.lt.s32.totalorder %v1037, 1
  %vm1057 = vcmp.lt.s32.totalorder %v1037, 2
  %vm1058 = vcmp.lt.s32.totalorder %v1037, 3
  %vm1059 = vcmp.lt.s32.totalorder %v1037, 4
  %v1060 = vsel %vm1056, %v1040, %v1043
  %v1061 = vsel %vm1059, %v1049, 2102212464
  %v1062 = vsel %vm1058, %v1046, %v1061
  %v1063 = vsel %vm1057, %v1060, %v1062
  %v1064 = vsel %vm1056, %v1043, %v1046
  %v1065 = vsel %vm1059, %v1052, 920167782
  %v1066 = vsel %vm1058, %v1049, %v1065
  %v1067 = vsel %vm1057, %v1064, %v1066
  %v1068 = vsel %vm1056, %v1046, %v1049
  %v1069 = vsel %vm1059, %v1055, 1326507024
  %v1070 = vsel %vm1058, %v1052, %v1069
  %v1071 = vsel %vm1057, %v1068, %v1070
  %v1072 = vshll.u32 %v1032, 8
  %v1073 = vmul.u32.u64.compose %v1072, %v1071
  %v1074 = vextract.low.u32 %v1073
  %v1075 = vextract.high.u32 %v1073
  %v1076 = vmul.u32.u64.compose %v1072, %v1067
  %v1077 = vextract.low.u32 %v1076
  %v1078 = vextract.high.u32 %v1076
  %v1079 = vmul.u32 %v1072, %v1063
  %v1080 = vadd.s32 %v1075, %v1077
  %vm1081 = vc.u32 %v1075, %v1077
  %v1082 = vadd.s32 %v1078, 1
  %v1083 = vsel %vm1081, %v1082, %v1078
  %v1084 = vadd.s32 %v1079, %v1083
  %v1085 = vadd.s32 %v1084, 536870912
  %v1086 = vshrl.u32 %v1085, 30
  %v1087 = vshll.u32 %v1086, 30
  %v1088 = vsub.s32 %v1084, %v1087
  %vm1089 = vcmp.lt.s32.totalorder %v1088, 0
  %v1090 = vsub.s32 0, %v1088
  %v1091 = vsel %vm1089, %v1090, %v1088
  %v1092 = vclz %v1091
  %v1093 = vsub.s32 %v1092, 2
  %vm1094 = vcmp.gt.s32.totalorder 0, %v1093
  %v1095 = vsel %vm1094, 0, %v1093
  %v1096 = vsub.s32 32, %v1095
  %v1097 = vshll.u32 %v1088, %v1095
  %v1098 = vshrl.u32 %v1080, %v1096
  %v1099 = vor.u32 %v1097, %v1098
  %v1100 = vsub.s32 4294967266, %v1095
  %v1101 = vadd.s32 %v1100, 127
  %v1102 = vshll.u32 %v1101, 23
  %v1103 = vor.u32 4788187, %v1102
  %v1104 = vand.u32 2147483647, %v1103
  %v1106 = vcvt.s32.f32 %v1099
  %v1107 = vmul.f32 %v1106, %v1104
  %v1108 = vxor.u32 %v1107, 2147483648
  %v1109 = vsel %vm1026, %v1108, %v1107
  %v1110 = vsub.s32 4, %v1086
  %v1111 = vsel %vm1026, %v1110, %v1086
  %v1112 = vsel %vm1025, %v576, %v1109
  %v1113 = vsel %vm1025, 0, %v1111
  %v1114 = vcosq.f32.pop %v1112
  %v1115 = vsinq.f32.pop %v1112
  %vm1116 = vweird.f32 %v576
  %v1117 = vadd.s32 %v1113, 3
  %v1118 = vand.u32 %v1117, 3
  %vm1119 = vcmp.lt.s32.totalorder %v1118, 2
  %vm1120 = vcmp.eq.s32.totalorder %v1118, 0
  %v1121 = vxor.u32 %v1115, 2147483648
  %v1122 = vsel %vm1120, %v1114, %v1121
  %vm1123 = vcmp.eq.s32.totalorder %v1118, 2
  %v1124 = vxor.u32 %v1114, 2147483648
  %v1125 = vsel %vm1123, %v1124, %v1115
  %v1126 = vsel %vm1119, %v1122, %v1125
  %v1127 = vsel %vm1116, nan, %v1126
  %v1128 = vand.u32 2147483647, %v577
  %vm1129 = vcmp.le.f32.partialorder %v1128, 0.7853982
  %vm1130 = vcmp.lt.s32.totalorder %v577, 0
  %v1131 = vand.u32 %v577, 2139095040
  %v1132 = vshrl.u32 %v1131, 23
  %v1133 = vsub.s32 %v1132, 127
  %v1134 = vand.u32 2147483647, %v577
  %v1135 = vand.u32 %v1134, 8388607
  %v1136 = vor.u32 %v1135, 8388608
  %v1137 = vsub.s32 0, %v1136
  %v1138 = vadd.s32 %v1133, 1
  %vm1139 = vcmp.gt.s32.totalorder %v1138, 0
  %v1140 = vsel %vm1139, %v1138, 0
  %v1141 = vshrl.u32 %v1140, 5
  %v1142 = vand.u32 %v1140, 31
  %v1143 = vsub.s32 32, %v1142
  %v1144 = vshrl.u32 683565275, %v1143
  %v1145 = vshll.u32 683565275, %v1142
  %v1146 = vshrl.u32 2475754826, %v1143
  %v1147 = vor.u32 %v1145, %v1146
  %v1148 = vshll.u32 2475754826, %v1142
  %v1149 = vshrl.u32 2131351028, %v1143
  %v1150 = vor.u32 %v1148, %v1149
  %v1151 = vshll.u32 2131351028, %v1142
  %v1152 = vshrl.u32 2102212464, %v1143
  %v1153 = vor.u32 %v1151, %v1152
  %v1154 = vshll.u32 2102212464, %v1142
  %v1155 = vshrl.u32 920167782, %v1143
  %v1156 = vor.u32 %v1154, %v1155
  %v1157 = vshll.u32 920167782, %v1142
  %v1158 = vshrl.u32 1326507024, %v1143
  %v1159 = vor.u32 %v1157, %v1158
  %vm1160 = vcmp.lt.s32.totalorder %v1141, 1
  %vm1161 = vcmp.lt.s32.totalorder %v1141, 2
  %vm1162 = vcmp.lt.s32.totalorder %v1141, 3
  %vm1163 = vcmp.lt.s32.totalorder %v1141, 4
  %v1164 = vsel %vm1160, %v1144, %v1147
  %v1165 = vsel %vm1163, %v1153, 2102212464
  %v1166 = vsel %vm1162, %v1150, %v1165
  %v1167 = vsel %vm1161, %v1164, %v1166
  %v1168 = vsel %vm1160, %v1147, %v1150
  %v1169 = vsel %vm1163, %v1156, 920167782
  %v1170 = vsel %vm1162, %v1153, %v1169
  %v1171 = vsel %vm1161, %v1168, %v1170
  %v1172 = vsel %vm1160, %v1150, %v1153
  %v1173 = vsel %vm1163, %v1159, 1326507024
  %v1174 = vsel %vm1162, %v1156, %v1173
  %v1175 = vsel %vm1161, %v1172, %v1174
  %v1176 = vshll.u32 %v1136, 8
  %v1177 = vmul.u32.u64.compose %v1176, %v1175
  %v1178 = vextract.low.u32 %v1177
  %v1179 = vextract.high.u32 %v1177
  %v1180 = vmul.u32.u64.compose %v1176, %v1171
  %v1181 = vextract.low.u32 %v1180
  %v1182 = vextract.high.u32 %v1180
  %v1183 = vmul.u32 %v1176, %v1167
  %v1184 = vadd.s32 %v1179, %v1181
  %vm1185 = vc.u32 %v1179, %v1181
  %v1186 = vadd.s32 %v1182, 1
  %v1187 = vsel %vm1185, %v1186, %v1182
  %v1188 = vadd.s32 %v1183, %v1187
  %v1189 = vadd.s32 %v1188, 536870912
  %v1190 = vshrl.u32 %v1189, 30
  %v1191 = vshll.u32 %v1190, 30
  %v1192 = vsub.s32 %v1188, %v1191
  %vm1193 = vcmp.lt.s32.totalorder %v1192, 0
  %v1194 = vsub.s32 0, %v1192
  %v1195 = vsel %vm1193, %v1194, %v1192
  %v1196 = vclz %v1195
  %v1197 = vsub.s32 %v1196, 2
  %vm1198 = vcmp.gt.s32.totalorder 0, %v1197
  %v1199 = vsel %vm1198, 0, %v1197
  %v1200 = vsub.s32 32, %v1199
  %v1201 = vshll.u32 %v1192, %v1199
  %v1202 = vshrl.u32 %v1184, %v1200
  %v1203 = vor.u32 %v1201, %v1202
  %v1204 = vsub.s32 4294967266, %v1199
  %v1205 = vadd.s32 %v1204, 127
  %v1206 = vshll.u32 %v1205, 23
  %v1207 = vor.u32 4788187, %v1206
  %v1208 = vand.u32 2147483647, %v1207
  %v1210 = vcvt.s32.f32 %v1203
  %v1211 = vmul.f32 %v1210, %v1208
  %v1212 = vxor.u32 %v1211, 2147483648
  %v1213 = vsel %vm1130, %v1212, %v1211
  %v1214 = vsub.s32 4, %v1190
  %v1215 = vsel %vm1130, %v1214, %v1190
  %v1216 = vsel %vm1129, %v577, %v1213
  %v1217 = vsel %vm1129, 0, %v1215
  %v1218 = vcosq.f32.pop %v1216
  %v1219 = vsinq.f32.pop %v1216
  %vm1220 = vweird.f32 %v577
  %v1221 = vadd.s32 %v1217, 3
  %v1222 = vand.u32 %v1221, 3
  %vm1223 = vcmp.lt.s32.totalorder %v1222, 2
  %vm1224 = vcmp.eq.s32.totalorder %v1222, 0
  %v1225 = vxor.u32 %v1219, 2147483648
  %v1226 = vsel %vm1224, %v1218, %v1225
  %vm1227 = vcmp.eq.s32.totalorder %v1222, 2
  %v1228 = vxor.u32 %v1218, 2147483648
  %v1229 = vsel %vm1227, %v1228, %v1219
  %v1230 = vsel %vm1223, %v1226, %v1229
  %v1231 = vsel %vm1220, nan, %v1230
  %v1232 = vand.u32 2147483647, %v578
  %vm1233 = vcmp.le.f32.partialorder %v1232, 0.7853982
  %vm1234 = vcmp.lt.s32.totalorder %v578, 0
  %v1235 = vand.u32 %v578, 2139095040
  %v1236 = vshrl.u32 %v1235, 23
  %v1237 = vsub.s32 %v1236, 127
  %v1238 = vand.u32 2147483647, %v578
  %v1239 = vand.u32 %v1238, 8388607
  %v1240 = vor.u32 %v1239, 8388608
  %v1241 = vsub.s32 0, %v1240
  %v1242 = vadd.s32 %v1237, 1
  %vm1243 = vcmp.gt.s32.totalorder %v1242, 0
  %v1244 = vsel %vm1243, %v1242, 0
  %v1245 = vshrl.u32 %v1244, 5
  %v1246 = vand.u32 %v1244, 31
  %v1247 = vsub.s32 32, %v1246
  %v1248 = vshrl.u32 683565275, %v1247
  %v1249 = vshll.u32 683565275, %v1246
  %v1250 = vshrl.u32 2475754826, %v1247
  %v1251 = vor.u32 %v1249, %v1250
  %v1252 = vshll.u32 2475754826, %v1246
  %v1253 = vshrl.u32 2131351028, %v1247
  %v1254 = vor.u32 %v1252, %v1253
  %v1255 = vshll.u32 2131351028, %v1246
  %v1256 = vshrl.u32 2102212464, %v1247
  %v1257 = vor.u32 %v1255, %v1256
  %v1258 = vshll.u32 2102212464, %v1246
  %v1259 = vshrl.u32 920167782, %v1247
  %v1260 = vor.u32 %v1258, %v1259
  %v1261 = vshll.u32 920167782, %v1246
  %v1262 = vshrl.u32 1326507024, %v1247
  %v1263 = vor.u32 %v1261, %v1262
  %vm1264 = vcmp.lt.s32.totalorder %v1245, 1
  %vm1265 = vcmp.lt.s32.totalorder %v1245, 2
  %vm1266 = vcmp.lt.s32.totalorder %v1245, 3
  %vm1267 = vcmp.lt.s32.totalorder %v1245, 4
  %v1268 = vsel %vm1264, %v1248, %v1251
  %v1269 = vsel %vm1267, %v1257, 2102212464
  %v1270 = vsel %vm1266, %v1254, %v1269
  %v1271 = vsel %vm1265, %v1268, %v1270
  %v1272 = vsel %vm1264, %v1251, %v1254
  %v1273 = vsel %vm1267, %v1260, 920167782
  %v1274 = vsel %vm1266, %v1257, %v1273
  %v1275 = vsel %vm1265, %v1272, %v1274
  %v1276 = vsel %vm1264, %v1254, %v1257
  %v1277 = vsel %vm1267, %v1263, 1326507024
  %v1278 = vsel %vm1266, %v1260, %v1277
  %v1279 = vsel %vm1265, %v1276, %v1278
  %v1280 = vshll.u32 %v1240, 8
  %v1281 = vmul.u32.u64.compose %v1280, %v1279
  %v1282 = vextract.low.u32 %v1281
  %v1283 = vextract.high.u32 %v1281
  %v1284 = vmul.u32.u64.compose %v1280, %v1275
  %v1285 = vextract.low.u32 %v1284
  %v1286 = vextract.high.u32 %v1284
  %v1287 = vmul.u32 %v1280, %v1271
  %v1288 = vadd.s32 %v1283, %v1285
  %vm1289 = vc.u32 %v1283, %v1285
  %v1290 = vadd.s32 %v1286, 1
  %v1291 = vsel %vm1289, %v1290, %v1286
  %v1292 = vadd.s32 %v1287, %v1291
  %v1293 = vadd.s32 %v1292, 536870912
  %v1294 = vshrl.u32 %v1293, 30
  %v1295 = vshll.u32 %v1294, 30
  %v1296 = vsub.s32 %v1292, %v1295
  %vm1297 = vcmp.lt.s32.totalorder %v1296, 0
  %v1298 = vsub.s32 0, %v1296
  %v1299 = vsel %vm1297, %v1298, %v1296
  %v1300 = vclz %v1299
  %v1301 = vsub.s32 %v1300, 2
  %vm1302 = vcmp.gt.s32.totalorder 0, %v1301
  %v1303 = vsel %vm1302, 0, %v1301
  %v1304 = vsub.s32 32, %v1303
  %v1305 = vshll.u32 %v1296, %v1303
  %v1306 = vshrl.u32 %v1288, %v1304
  %v1307 = vor.u32 %v1305, %v1306
  %v1308 = vsub.s32 4294967266, %v1303
  %v1309 = vadd.s32 %v1308, 127
  %v1310 = vshll.u32 %v1309, 23
  %v1311 = vor.u32 4788187, %v1310
  %v1312 = vand.u32 2147483647, %v1311
  %v1314 = vcvt.s32.f32 %v1307
  %v1315 = vmul.f32 %v1314, %v1312
  %v1316 = vxor.u32 %v1315, 2147483648
  %v1317 = vsel %vm1234, %v1316, %v1315
  %v1318 = vsub.s32 4, %v1294
  %v1319 = vsel %vm1234, %v1318, %v1294
  %v1320 = vsel %vm1233, %v578, %v1317
  %v1321 = vsel %vm1233, 0, %v1319
  %v1322 = vcosq.f32.pop %v1320
  %v1323 = vsinq.f32.pop %v1320
  %vm1324 = vweird.f32 %v578
  %v1325 = vadd.s32 %v1321, 3
  %v1326 = vand.u32 %v1325, 3
  %vm1327 = vcmp.lt.s32.totalorder %v1326, 2
  %vm1328 = vcmp.eq.s32.totalorder %v1326, 0
  %v1329 = vxor.u32 %v1323, 2147483648
  %v1330 = vsel %vm1328, %v1322, %v1329
  %vm1331 = vcmp.eq.s32.totalorder %v1326, 2
  %v1332 = vxor.u32 %v1322, 2147483648
  %v1333 = vsel %vm1331, %v1332, %v1323
  %v1334 = vsel %vm1327, %v1330, %v1333
  %v1335 = vsel %vm1324, nan, %v1334
  %v1336 = vand.u32 2147483647, %v579
  %vm1337 = vcmp.le.f32.partialorder %v1336, 0.7853982
  %vm1338 = vcmp.lt.s32.totalorder %v579, 0
  %v1339 = vand.u32 %v579, 2139095040
  %v1340 = vshrl.u32 %v1339, 23
  %v1341 = vsub.s32 %v1340, 127
  %v1342 = vand.u32 2147483647, %v579
  %v1343 = vand.u32 %v1342, 8388607
  %v1344 = vor.u32 %v1343, 8388608
  %v1345 = vsub.s32 0, %v1344
  %v1346 = vadd.s32 %v1341, 1
  %vm1347 = vcmp.gt.s32.totalorder %v1346, 0
  %v1348 = vsel %vm1347, %v1346, 0
  %v1349 = vshrl.u32 %v1348, 5
  %v1350 = vand.u32 %v1348, 31
  %v1351 = vsub.s32 32, %v1350
  %v1352 = vshrl.u32 683565275, %v1351
  %v1353 = vshll.u32 683565275, %v1350
  %v1354 = vshrl.u32 2475754826, %v1351
  %v1355 = vor.u32 %v1353, %v1354
  %v1356 = vshll.u32 2475754826, %v1350
  %v1357 = vshrl.u32 2131351028, %v1351
  %v1358 = vor.u32 %v1356, %v1357
  %v1359 = vshll.u32 2131351028, %v1350
  %v1360 = vshrl.u32 2102212464, %v1351
  %v1361 = vor.u32 %v1359, %v1360
  %v1362 = vshll.u32 2102212464, %v1350
  %v1363 = vshrl.u32 920167782, %v1351
  %v1364 = vor.u32 %v1362, %v1363
  %v1365 = vshll.u32 920167782, %v1350
  %v1366 = vshrl.u32 1326507024, %v1351
  %v1367 = vor.u32 %v1365, %v1366
  %vm1368 = vcmp.lt.s32.totalorder %v1349, 1
  %vm1369 = vcmp.lt.s32.totalorder %v1349, 2
  %vm1370 = vcmp.lt.s32.totalorder %v1349, 3
  %vm1371 = vcmp.lt.s32.totalorder %v1349, 4
  %v1372 = vsel %vm1368, %v1352, %v1355
  %v1373 = vsel %vm1371, %v1361, 2102212464
  %v1374 = vsel %vm1370, %v1358, %v1373
  %v1375 = vsel %vm1369, %v1372, %v1374
  %v1376 = vsel %vm1368, %v1355, %v1358
  %v1377 = vsel %vm1371, %v1364, 920167782
  %v1378 = vsel %vm1370, %v1361, %v1377
  %v1379 = vsel %vm1369, %v1376, %v1378
  %v1380 = vsel %vm1368, %v1358, %v1361
  %v1381 = vsel %vm1371, %v1367, 1326507024
  %v1382 = vsel %vm1370, %v1364, %v1381
  %v1383 = vsel %vm1369, %v1380, %v1382
  %v1384 = vshll.u32 %v1344, 8
  %v1385 = vmul.u32.u64.compose %v1384, %v1383
  %v1386 = vextract.low.u32 %v1385
  %v1387 = vextract.high.u32 %v1385
  %v1388 = vmul.u32.u64.compose %v1384, %v1379
  %v1389 = vextract.low.u32 %v1388
  %v1390 = vextract.high.u32 %v1388
  %v1391 = vmul.u32 %v1384, %v1375
  %v1392 = vadd.s32 %v1387, %v1389
  %vm1393 = vc.u32 %v1387, %v1389
  %v1394 = vadd.s32 %v1390, 1
  %v1395 = vsel %vm1393, %v1394, %v1390
  %v1396 = vadd.s32 %v1391, %v1395
  %v1397 = vadd.s32 %v1396, 536870912
  %v1398 = vshrl.u32 %v1397, 30
  %v1399 = vshll.u32 %v1398, 30
  %v1400 = vsub.s32 %v1396, %v1399
  %vm1401 = vcmp.lt.s32.totalorder %v1400, 0
  %v1402 = vsub.s32 0, %v1400
  %v1403 = vsel %vm1401, %v1402, %v1400
  %v1404 = vclz %v1403
  %v1405 = vsub.s32 %v1404, 2
  %vm1406 = vcmp.gt.s32.totalorder 0, %v1405
  %v1407 = vsel %vm1406, 0, %v1405
  %v1408 = vsub.s32 32, %v1407
  %v1409 = vshll.u32 %v1400, %v1407
  %v1410 = vshrl.u32 %v1392, %v1408
  %v1411 = vor.u32 %v1409, %v1410
  %v1412 = vsub.s32 4294967266, %v1407
  %v1413 = vadd.s32 %v1412, 127
  %v1414 = vshll.u32 %v1413, 23
  %v1415 = vor.u32 4788187, %v1414
  %v1416 = vand.u32 2147483647, %v1415
  %v1418 = vcvt.s32.f32 %v1411
  %v1419 = vmul.f32 %v1418, %v1416
  %v1420 = vxor.u32 %v1419, 2147483648
  %v1421 = vsel %vm1338, %v1420, %v1419
  %v1422 = vsub.s32 4, %v1398
  %v1423 = vsel %vm1338, %v1422, %v1398
  %v1424 = vsel %vm1337, %v579, %v1421
  %v1425 = vsel %vm1337, 0, %v1423
  %v1426 = vcosq.f32.pop %v1424
  %v1427 = vsinq.f32.pop %v1424
  %vm1428 = vweird.f32 %v579
  %v1429 = vadd.s32 %v1425, 3
  %v1430 = vand.u32 %v1429, 3
  %vm1431 = vcmp.lt.s32.totalorder %v1430, 2
  %vm1432 = vcmp.eq.s32.totalorder %v1430, 0
  %v1433 = vxor.u32 %v1427, 2147483648
  %v1434 = vsel %vm1432, %v1426, %v1433
  %vm1435 = vcmp.eq.s32.totalorder %v1430, 2
  %v1436 = vxor.u32 %v1426, 2147483648
  %v1437 = vsel %vm1435, %v1436, %v1427
  %v1438 = vsel %vm1431, %v1434, %v1437
  %v1439 = vsel %vm1428, nan, %v1438
  %v1440 = vmul.f32 %v714, %v552
  %v1441 = vmul.f32 %v817, %v553
  %v1442 = vmul.f32 %v920, %v554
  %v1443 = vmul.f32 %v1023, %v555
  %v1444 = vmul.f32 %v1127, %v556
  %v1445 = vmul.f32 %v1231, %v557
  %v1446 = vmul.f32 %v1335, %v558
  %v1447 = vmul.f32 %v1439, %v559
  %v1448 = vadd.f32 %v1440, %v1444
  %v1449 = vadd.f32 %v1441, %v1445
  %v1450 = vadd.f32 %v1442, %v1446
  %v1451 = vadd.f32 %v1443, %v1447
  %v1452 = vsub.f32 0.0, %v1127
  %v1453 = vsub.f32 0.0, %v1231
  %v1454 = vsub.f32 0.0, %v1335
  %v1455 = vsub.f32 0.0, %v1439
  %v1456 = vmul.f32 %v1452, %v552
  %v1457 = vmul.f32 %v1453, %v553
  %v1458 = vmul.f32 %v1454, %v554
  %v1459 = vmul.f32 %v1455, %v555
  %v1460 = vmul.f32 %v714, %v556
  %v1461 = vmul.f32 %v817, %v557
  %v1462 = vmul.f32 %v920, %v558
  %v1463 = vmul.f32 %v1023, %v559
  %v1464 = vadd.f32 %v1456, %v1460
  %v1465 = vadd.f32 %v1457, %v1461
  %v1466 = vadd.f32 %v1458, %v1462
  %v1467 = vadd.f32 %v1459, %v1463
  %v1468 = vmul.f32 %v714, %v560
  %v1469 = vmul.f32 %v817, %v561
  %v1470 = vmul.f32 %v920, %v562
  %v1471 = vmul.f32 %v1023, %v563
  %v1472 = vmul.f32 %v1127, %v564
  %v1473 = vmul.f32 %v1231, %v565
  %v1474 = vmul.f32 %v1335, %v566
  %v1475 = vmul.f32 %v1439, %v567
  %v1476 = vadd.f32 %v1468, %v1472
  %v1477 = vadd.f32 %v1469, %v1473
  %v1478 = vadd.f32 %v1470, %v1474
  %v1479 = vadd.f32 %v1471, %v1475
  %v1480 = vmul.f32 %v1452, %v560
  %v1481 = vmul.f32 %v1453, %v561
  %v1482 = vmul.f32 %v1454, %v562
  %v1483 = vmul.f32 %v1455, %v563
  %v1484 = vmul.f32 %v714, %v564
  %v1485 = vmul.f32 %v817, %v565
  %v1486 = vmul.f32 %v920, %v566
  %v1487 = vmul.f32 %v1023, %v567
  %v1488 = vadd.f32 %v1480, %v1484
  %v1489 = vadd.f32 %v1481, %v1485
  %v1490 = vadd.f32 %v1482, %v1486
  %v1491 = vadd.f32 %v1483, %v1487
  %v1492 = vmul.f32 %v714, %v580
  %v1493 = vmul.f32 %v817, %v581
  %v1494 = vmul.f32 %v920, %v582
  %v1495 = vmul.f32 %v1023, %v583
  %v1496 = vmul.f32 %v1127, %v584
  %v1497 = vmul.f32 %v1231, %v585
  %v1498 = vmul.f32 %v1335, %v586
  %v1499 = vmul.f32 %v1439, %v587
  %v1500 = vadd.f32 %v1492, %v1496
  %v1501 = vadd.f32 %v1493, %v1497
  %v1502 = vadd.f32 %v1494, %v1498
  %v1503 = vadd.f32 %v1495, %v1499
  %v1504 = vmul.f32 %v1452, %v580
  %v1505 = vmul.f32 %v1453, %v581
  %v1506 = vmul.f32 %v1454, %v582
  %v1507 = vmul.f32 %v1455, %v583
  %v1508 = vmul.f32 %v714, %v584
  %v1509 = vmul.f32 %v817, %v585
  %v1510 = vmul.f32 %v920, %v586
  %v1511 = vmul.f32 %v1023, %v587
  %v1512 = vadd.f32 %v1504, %v1508
  %v1513 = vadd.f32 %v1505, %v1509
  %v1514 = vadd.f32 %v1506, %v1510
  %v1515 = vadd.f32 %v1507, %v1511
  %v1516 = vmul.f32 %v568, 2.0
  %v1517 = vmul.f32 %v569, 2.0
  %v1518 = vmul.f32 %v570, 2.0
  %v1519 = vmul.f32 %v571, 2.0
  %v1520 = vand.u32 2147483647, %v1516
  %vm1521 = vcmp.le.f32.partialorder %v1520, 0.7853982
  %vm1522 = vcmp.lt.s32.totalorder %v1516, 0
  %v1523 = vand.u32 %v1516, 2139095040
  %v1524 = vshrl.u32 %v1523, 23
  %v1525 = vsub.s32 %v1524, 127
  %v1526 = vand.u32 2147483647, %v1516
  %v1527 = vand.u32 %v1526, 8388607
  %v1528 = vor.u32 %v1527, 8388608
  %v1529 = vsub.s32 0, %v1528
  %v1530 = vadd.s32 %v1525, 1
  %vm1531 = vcmp.gt.s32.totalorder %v1530, 0
  %v1532 = vsel %vm1531, %v1530, 0
  %v1533 = vshrl.u32 %v1532, 5
  %v1534 = vand.u32 %v1532, 31
  %v1535 = vsub.s32 32, %v1534
  %v1536 = vshrl.u32 683565275, %v1535
  %v1537 = vshll.u32 683565275, %v1534
  %v1538 = vshrl.u32 2475754826, %v1535
  %v1539 = vor.u32 %v1537, %v1538
  %v1540 = vshll.u32 2475754826, %v1534
  %v1541 = vshrl.u32 2131351028, %v1535
  %v1542 = vor.u32 %v1540, %v1541
  %v1543 = vshll.u32 2131351028, %v1534
  %v1544 = vshrl.u32 2102212464, %v1535
  %v1545 = vor.u32 %v1543, %v1544
  %v1546 = vshll.u32 2102212464, %v1534
  %v1547 = vshrl.u32 920167782, %v1535
  %v1548 = vor.u32 %v1546, %v1547
  %v1549 = vshll.u32 920167782, %v1534
  %v1550 = vshrl.u32 1326507024, %v1535
  %v1551 = vor.u32 %v1549, %v1550
  %vm1552 = vcmp.lt.s32.totalorder %v1533, 1
  %vm1553 = vcmp.lt.s32.totalorder %v1533, 2
  %vm1554 = vcmp.lt.s32.totalorder %v1533, 3
  %vm1555 = vcmp.lt.s32.totalorder %v1533, 4
  %v1556 = vsel %vm1552, %v1536, %v1539
  %v1557 = vsel %vm1555, %v1545, 2102212464
  %v1558 = vsel %vm1554, %v1542, %v1557
  %v1559 = vsel %vm1553, %v1556, %v1558
  %v1560 = vsel %vm1552, %v1539, %v1542
  %v1561 = vsel %vm1555, %v1548, 920167782
  %v1562 = vsel %vm1554, %v1545, %v1561
  %v1563 = vsel %vm1553, %v1560, %v1562
  %v1564 = vsel %vm1552, %v1542, %v1545
  %v1565 = vsel %vm1555, %v1551, 1326507024
  %v1566 = vsel %vm1554, %v1548, %v1565
  %v1567 = vsel %vm1553, %v1564, %v1566
  %v1568 = vshll.u32 %v1528, 8
  %v1569 = vmul.u32.u64.compose %v1568, %v1567
  %v1570 = vextract.low.u32 %v1569
  %v1571 = vextract.high.u32 %v1569
  %v1572 = vmul.u32.u64.compose %v1568, %v1563
  %v1573 = vextract.low.u32 %v1572
  %v1574 = vextract.high.u32 %v1572
  %v1575 = vmul.u32 %v1568, %v1559
  %v1576 = vadd.s32 %v1571, %v1573
  %vm1577 = vc.u32 %v1571, %v1573
  %v1578 = vadd.s32 %v1574, 1
  %v1579 = vsel %vm1577, %v1578, %v1574
  %v1580 = vadd.s32 %v1575, %v1579
  %v1581 = vadd.s32 %v1580, 536870912
  %v1582 = vshrl.u32 %v1581, 30
  %v1583 = vshll.u32 %v1582, 30
  %v1584 = vsub.s32 %v1580, %v1583
  %vm1585 = vcmp.lt.s32.totalorder %v1584, 0
  %v1586 = vsub.s32 0, %v1584
  %v1587 = vsel %vm1585, %v1586, %v1584
  %v1588 = vclz %v1587
  %v1589 = vsub.s32 %v1588, 2
  %vm1590 = vcmp.gt.s32.totalorder 0, %v1589
  %v1591 = vsel %vm1590, 0, %v1589
  %v1592 = vsub.s32 32, %v1591
  %v1593 = vshll.u32 %v1584, %v1591
  %v1594 = vshrl.u32 %v1576, %v1592
  %v1595 = vor.u32 %v1593, %v1594
  %v1596 = vsub.s32 4294967266, %v1591
  %v1597 = vadd.s32 %v1596, 127
  %v1598 = vshll.u32 %v1597, 23
  %v1599 = vor.u32 4788187, %v1598
  %v1600 = vand.u32 2147483647, %v1599
  %v1602 = vcvt.s32.f32 %v1595
  %v1603 = vmul.f32 %v1602, %v1600
  %v1604 = vxor.u32 %v1603, 2147483648
  %v1605 = vsel %vm1522, %v1604, %v1603
  %v1606 = vsub.s32 4, %v1582
  %v1607 = vsel %vm1522, %v1606, %v1582
  %v1608 = vsel %vm1521, %v1516, %v1605
  %v1609 = vsel %vm1521, 0, %v1607
  %v1610 = vcosq.f32.pop %v1608
  %v1611 = vsinq.f32.pop %v1608
  %vm1612 = vweird.f32 %v1516
  %v1613 = vadd.s32 %v1609, 3
  %v1614 = vand.u32 %v1613, 3
  %vm1615 = vcmp.lt.s32.totalorder %v1614, 2
  %vm1616 = vcmp.eq.s32.totalorder %v1614, 0
  %v1617 = vxor.u32 %v1611, 2147483648
  %v1618 = vsel %vm1616, %v1610, %v1617
  %vm1619 = vcmp.eq.s32.totalorder %v1614, 2
  %v1620 = vxor.u32 %v1610, 2147483648
  %v1621 = vsel %vm1619, %v1620, %v1611
  %v1622 = vsel %vm1615, %v1618, %v1621
  %v1623 = vsel %vm1612, nan, %v1622
  %v1624 = vand.u32 2147483647, %v1517
  %vm1625 = vcmp.le.f32.partialorder %v1624, 0.7853982
  %vm1626 = vcmp.lt.s32.totalorder %v1517, 0
  %v1627 = vand.u32 %v1517, 2139095040
  %v1628 = vshrl.u32 %v1627, 23
  %v1629 = vsub.s32 %v1628, 127
  %v1630 = vand.u32 2147483647, %v1517
  %v1631 = vand.u32 %v1630, 8388607
  %v1632 = vor.u32 %v1631, 8388608
  %v1633 = vsub.s32 0, %v1632
  %v1634 = vadd.s32 %v1629, 1
  %vm1635 = vcmp.gt.s32.totalorder %v1634, 0
  %v1636 = vsel %vm1635, %v1634, 0
  %v1637 = vshrl.u32 %v1636, 5
  %v1638 = vand.u32 %v1636, 31
  %v1639 = vsub.s32 32, %v1638
  %v1640 = vshrl.u32 683565275, %v1639
  %v1641 = vshll.u32 683565275, %v1638
  %v1642 = vshrl.u32 2475754826, %v1639
  %v1643 = vor.u32 %v1641, %v1642
  %v1644 = vshll.u32 2475754826, %v1638
  %v1645 = vshrl.u32 2131351028, %v1639
  %v1646 = vor.u32 %v1644, %v1645
  %v1647 = vshll.u32 2131351028, %v1638
  %v1648 = vshrl.u32 2102212464, %v1639
  %v1649 = vor.u32 %v1647, %v1648
  %v1650 = vshll.u32 2102212464, %v1638
  %v1651 = vshrl.u32 920167782, %v1639
  %v1652 = vor.u32 %v1650, %v1651
  %v1653 = vshll.u32 920167782, %v1638
  %v1654 = vshrl.u32 1326507024, %v1639
  %v1655 = vor.u32 %v1653, %v1654
  %vm1656 = vcmp.lt.s32.totalorder %v1637, 1
  %vm1657 = vcmp.lt.s32.totalorder %v1637, 2
  %vm1658 = vcmp.lt.s32.totalorder %v1637, 3
  %vm1659 = vcmp.lt.s32.totalorder %v1637, 4
  %v1660 = vsel %vm1656, %v1640, %v1643
  %v1661 = vsel %vm1659, %v1649, 2102212464
  %v1662 = vsel %vm1658, %v1646, %v1661
  %v1663 = vsel %vm1657, %v1660, %v1662
  %v1664 = vsel %vm1656, %v1643, %v1646
  %v1665 = vsel %vm1659, %v1652, 920167782
  %v1666 = vsel %vm1658, %v1649, %v1665
  %v1667 = vsel %vm1657, %v1664, %v1666
  %v1668 = vsel %vm1656, %v1646, %v1649
  %v1669 = vsel %vm1659, %v1655, 1326507024
  %v1670 = vsel %vm1658, %v1652, %v1669
  %v1671 = vsel %vm1657, %v1668, %v1670
  %v1672 = vshll.u32 %v1632, 8
  %v1673 = vmul.u32.u64.compose %v1672, %v1671
  %v1674 = vextract.low.u32 %v1673
  %v1675 = vextract.high.u32 %v1673
  %v1676 = vmul.u32.u64.compose %v1672, %v1667
  %v1677 = vextract.low.u32 %v1676
  %v1678 = vextract.high.u32 %v1676
  %v1679 = vmul.u32 %v1672, %v1663
  %v1680 = vadd.s32 %v1675, %v1677
  %vm1681 = vc.u32 %v1675, %v1677
  %v1682 = vadd.s32 %v1678, 1
  %v1683 = vsel %vm1681, %v1682, %v1678
  %v1684 = vadd.s32 %v1679, %v1683
  %v1685 = vadd.s32 %v1684, 536870912
  %v1686 = vshrl.u32 %v1685, 30
  %v1687 = vshll.u32 %v1686, 30
  %v1688 = vsub.s32 %v1684, %v1687
  %vm1689 = vcmp.lt.s32.totalorder %v1688, 0
  %v1690 = vsub.s32 0, %v1688
  %v1691 = vsel %vm1689, %v1690, %v1688
  %v1692 = vclz %v1691
  %v1693 = vsub.s32 %v1692, 2
  %vm1694 = vcmp.gt.s32.totalorder 0, %v1693
  %v1695 = vsel %vm1694, 0, %v1693
  %v1696 = vsub.s32 32, %v1695
  %v1697 = vshll.u32 %v1688, %v1695
  %v1698 = vshrl.u32 %v1680, %v1696
  %v1699 = vor.u32 %v1697, %v1698
  %v1700 = vsub.s32 4294967266, %v1695
  %v1701 = vadd.s32 %v1700, 127
  %v1702 = vshll.u32 %v1701, 23
  %v1703 = vor.u32 4788187, %v1702
  %v1704 = vand.u32 2147483647, %v1703
  %v1706 = vcvt.s32.f32 %v1699
  %v1707 = vmul.f32 %v1706, %v1704
  %v1708 = vxor.u32 %v1707, 2147483648
  %v1709 = vsel %vm1626, %v1708, %v1707
  %v1710 = vsub.s32 4, %v1686
  %v1711 = vsel %vm1626, %v1710, %v1686
  %v1712 = vsel %vm1625, %v1517, %v1709
  %v1713 = vsel %vm1625, 0, %v1711
  %v1714 = vcosq.f32.pop %v1712
  %v1715 = vsinq.f32.pop %v1712
  %vm1716 = vweird.f32 %v1517
  %v1717 = vadd.s32 %v1713, 3
  %v1718 = vand.u32 %v1717, 3
  %vm1719 = vcmp.lt.s32.totalorder %v1718, 2
  %vm1720 = vcmp.eq.s32.totalorder %v1718, 0
  %v1721 = vxor.u32 %v1715, 2147483648
  %v1722 = vsel %vm1720, %v1714, %v1721
  %vm1723 = vcmp.eq.s32.totalorder %v1718, 2
  %v1724 = vxor.u32 %v1714, 2147483648
  %v1725 = vsel %vm1723, %v1724, %v1715
  %v1726 = vsel %vm1719, %v1722, %v1725
  %v1727 = vsel %vm1716, nan, %v1726
  %v1728 = vand.u32 2147483647, %v1518
  %vm1729 = vcmp.le.f32.partialorder %v1728, 0.7853982
  %vm1730 = vcmp.lt.s32.totalorder %v1518, 0
  %v1731 = vand.u32 %v1518, 2139095040
  %v1732 = vshrl.u32 %v1731, 23
  %v1733 = vsub.s32 %v1732, 127
  %v1734 = vand.u32 2147483647, %v1518
  %v1735 = vand.u32 %v1734, 8388607
  %v1736 = vor.u32 %v1735, 8388608
  %v1737 = vsub.s32 0, %v1736
  %v1738 = vadd.s32 %v1733, 1
  %vm1739 = vcmp.gt.s32.totalorder %v1738, 0
  %v1740 = vsel %vm1739, %v1738, 0
  %v1741 = vshrl.u32 %v1740, 5
  %v1742 = vand.u32 %v1740, 31
  %v1743 = vsub.s32 32, %v1742
  %v1744 = vshrl.u32 683565275, %v1743
  %v1745 = vshll.u32 683565275, %v1742
  %v1746 = vshrl.u32 2475754826, %v1743
  %v1747 = vor.u32 %v1745, %v1746
  %v1748 = vshll.u32 2475754826, %v1742
  %v1749 = vshrl.u32 2131351028, %v1743
  %v1750 = vor.u32 %v1748, %v1749
  %v1751 = vshll.u32 2131351028, %v1742
  %v1752 = vshrl.u32 2102212464, %v1743
  %v1753 = vor.u32 %v1751, %v1752
  %v1754 = vshll.u32 2102212464, %v1742
  %v1755 = vshrl.u32 920167782, %v1743
  %v1756 = vor.u32 %v1754, %v1755
  %v1757 = vshll.u32 920167782, %v1742
  %v1758 = vshrl.u32 1326507024, %v1743
  %v1759 = vor.u32 %v1757, %v1758
  %vm1760 = vcmp.lt.s32.totalorder %v1741, 1
  %vm1761 = vcmp.lt.s32.totalorder %v1741, 2
  %vm1762 = vcmp.lt.s32.totalorder %v1741, 3
  %vm1763 = vcmp.lt.s32.totalorder %v1741, 4
  %v1764 = vsel %vm1760, %v1744, %v1747
  %v1765 = vsel %vm1763, %v1753, 2102212464
  %v1766 = vsel %vm1762, %v1750, %v1765
  %v1767 = vsel %vm1761, %v1764, %v1766
  %v1768 = vsel %vm1760, %v1747, %v1750
  %v1769 = vsel %vm1763, %v1756, 920167782
  %v1770 = vsel %vm1762, %v1753, %v1769
  %v1771 = vsel %vm1761, %v1768, %v1770
  %v1772 = vsel %vm1760, %v1750, %v1753
  %v1773 = vsel %vm1763, %v1759, 1326507024
  %v1774 = vsel %vm1762, %v1756, %v1773
  %v1775 = vsel %vm1761, %v1772, %v1774
  %v1776 = vshll.u32 %v1736, 8
  %v1777 = vmul.u32.u64.compose %v1776, %v1775
  %v1778 = vextract.low.u32 %v1777
  %v1779 = vextract.high.u32 %v1777
  %v1780 = vmul.u32.u64.compose %v1776, %v1771
  %v1781 = vextract.low.u32 %v1780
  %v1782 = vextract.high.u32 %v1780
  %v1783 = vmul.u32 %v1776, %v1767
  %v1784 = vadd.s32 %v1779, %v1781
  %vm1785 = vc.u32 %v1779, %v1781
  %v1786 = vadd.s32 %v1782, 1
  %v1787 = vsel %vm1785, %v1786, %v1782
  %v1788 = vadd.s32 %v1783, %v1787
  %v1789 = vadd.s32 %v1788, 536870912
  %v1790 = vshrl.u32 %v1789, 30
  %v1791 = vshll.u32 %v1790, 30
  %v1792 = vsub.s32 %v1788, %v1791
  %vm1793 = vcmp.lt.s32.totalorder %v1792, 0
  %v1794 = vsub.s32 0, %v1792
  %v1795 = vsel %vm1793, %v1794, %v1792
  %v1796 = vclz %v1795
  %v1797 = vsub.s32 %v1796, 2
  %vm1798 = vcmp.gt.s32.totalorder 0, %v1797
  %v1799 = vsel %vm1798, 0, %v1797
  %v1800 = vsub.s32 32, %v1799
  %v1801 = vshll.u32 %v1792, %v1799
  %v1802 = vshrl.u32 %v1784, %v1800
  %v1803 = vor.u32 %v1801, %v1802
  %v1804 = vsub.s32 4294967266, %v1799
  %v1805 = vadd.s32 %v1804, 127
  %v1806 = vshll.u32 %v1805, 23
  %v1807 = vor.u32 4788187, %v1806
  %v1808 = vand.u32 2147483647, %v1807
  %v1810 = vcvt.s32.f32 %v1803
  %v1811 = vmul.f32 %v1810, %v1808
  %v1812 = vxor.u32 %v1811, 2147483648
  %v1813 = vsel %vm1730, %v1812, %v1811
  %v1814 = vsub.s32 4, %v1790
  %v1815 = vsel %vm1730, %v1814, %v1790
  %v1816 = vsel %vm1729, %v1518, %v1813
  %v1817 = vsel %vm1729, 0, %v1815
  %v1818 = vcosq.f32.pop %v1816
  %v1819 = vsinq.f32.pop %v1816
  %vm1820 = vweird.f32 %v1518
  %v1821 = vadd.s32 %v1817, 3
  %v1822 = vand.u32 %v1821, 3
  %vm1823 = vcmp.lt.s32.totalorder %v1822, 2
  %vm1824 = vcmp.eq.s32.totalorder %v1822, 0
  %v1825 = vxor.u32 %v1819, 2147483648
  %v1826 = vsel %vm1824, %v1818, %v1825
  %vm1827 = vcmp.eq.s32.totalorder %v1822, 2
  %v1828 = vxor.u32 %v1818, 2147483648
  %v1829 = vsel %vm1827, %v1828, %v1819
  %v1830 = vsel %vm1823, %v1826, %v1829
  %v1831 = vsel %vm1820, nan, %v1830
  %v1832 = vand.u32 2147483647, %v1519
  %vm1833 = vcmp.le.f32.partialorder %v1832, 0.7853982
  %vm1834 = vcmp.lt.s32.totalorder %v1519, 0
  %v1835 = vand.u32 %v1519, 2139095040
  %v1836 = vshrl.u32 %v1835, 23
  %v1837 = vsub.s32 %v1836, 127
  %v1838 = vand.u32 2147483647, %v1519
  %v1839 = vand.u32 %v1838, 8388607
  %v1840 = vor.u32 %v1839, 8388608
  %v1841 = vsub.s32 0, %v1840
  %v1842 = vadd.s32 %v1837, 1
  %vm1843 = vcmp.gt.s32.totalorder %v1842, 0
  %v1844 = vsel %vm1843, %v1842, 0
  %v1845 = vshrl.u32 %v1844, 5
  %v1846 = vand.u32 %v1844, 31
  %v1847 = vsub.s32 32, %v1846
  %v1848 = vshrl.u32 683565275, %v1847
  %v1849 = vshll.u32 683565275, %v1846
  %v1850 = vshrl.u32 2475754826, %v1847
  %v1851 = vor.u32 %v1849, %v1850
  %v1852 = vshll.u32 2475754826, %v1846
  %v1853 = vshrl.u32 2131351028, %v1847
  %v1854 = vor.u32 %v1852, %v1853
  %v1855 = vshll.u32 2131351028, %v1846
  %v1856 = vshrl.u32 2102212464, %v1847
  %v1857 = vor.u32 %v1855, %v1856
  %v1858 = vshll.u32 2102212464, %v1846
  %v1859 = vshrl.u32 920167782, %v1847
  %v1860 = vor.u32 %v1858, %v1859
  %v1861 = vshll.u32 920167782, %v1846
  %v1862 = vshrl.u32 1326507024, %v1847
  %v1863 = vor.u32 %v1861, %v1862
  %vm1864 = vcmp.lt.s32.totalorder %v1845, 1
  %vm1865 = vcmp.lt.s32.totalorder %v1845, 2
  %vm1866 = vcmp.lt.s32.totalorder %v1845, 3
  %vm1867 = vcmp.lt.s32.totalorder %v1845, 4
  %v1868 = vsel %vm1864, %v1848, %v1851
  %v1869 = vsel %vm1867, %v1857, 2102212464
  %v1870 = vsel %vm1866, %v1854, %v1869
  %v1871 = vsel %vm1865, %v1868, %v1870
  %v1872 = vsel %vm1864, %v1851, %v1854
  %v1873 = vsel %vm1867, %v1860, 920167782
  %v1874 = vsel %vm1866, %v1857, %v1873
  %v1875 = vsel %vm1865, %v1872, %v1874
  %v1876 = vsel %vm1864, %v1854, %v1857
  %v1877 = vsel %vm1867, %v1863, 1326507024
  %v1878 = vsel %vm1866, %v1860, %v1877
  %v1879 = vsel %vm1865, %v1876, %v1878
  %v1880 = vshll.u32 %v1840, 8
  %v1881 = vmul.u32.u64.compose %v1880, %v1879
  %v1882 = vextract.low.u32 %v1881
  %v1883 = vextract.high.u32 %v1881
  %v1884 = vmul.u32.u64.compose %v1880, %v1875
  %v1885 = vextract.low.u32 %v1884
  %v1886 = vextract.high.u32 %v1884
  %v1887 = vmul.u32 %v1880, %v1871
  %v1888 = vadd.s32 %v1883, %v1885
  %vm1889 = vc.u32 %v1883, %v1885
  %v1890 = vadd.s32 %v1886, 1
  %v1891 = vsel %vm1889, %v1890, %v1886
  %v1892 = vadd.s32 %v1887, %v1891
  %v1893 = vadd.s32 %v1892, 536870912
  %v1894 = vshrl.u32 %v1893, 30
  %v1895 = vshll.u32 %v1894, 30
  %v1896 = vsub.s32 %v1892, %v1895
  %vm1897 = vcmp.lt.s32.totalorder %v1896, 0
  %v1898 = vsub.s32 0, %v1896
  %v1899 = vsel %vm1897, %v1898, %v1896
  %v1900 = vclz %v1899
  %v1901 = vsub.s32 %v1900, 2
  %vm1902 = vcmp.gt.s32.totalorder 0, %v1901
  %v1903 = vsel %vm1902, 0, %v1901
  %v1904 = vsub.s32 32, %v1903
  %v1905 = vshll.u32 %v1896, %v1903
  %v1906 = vshrl.u32 %v1888, %v1904
  %v1907 = vor.u32 %v1905, %v1906
  %v1908 = vsub.s32 4294967266, %v1903
  %v1909 = vadd.s32 %v1908, 127
  %v1910 = vshll.u32 %v1909, 23
  %v1911 = vor.u32 4788187, %v1910
  %v1912 = vand.u32 2147483647, %v1911
  %v1914 = vcvt.s32.f32 %v1907
  %v1915 = vmul.f32 %v1914, %v1912
  %v1916 = vxor.u32 %v1915, 2147483648
  %v1917 = vsel %vm1834, %v1916, %v1915
  %v1918 = vsub.s32 4, %v1894
  %v1919 = vsel %vm1834, %v1918, %v1894
  %v1920 = vsel %vm1833, %v1519, %v1917
  %v1921 = vsel %vm1833, 0, %v1919
  %v1922 = vcosq.f32.pop %v1920
  %v1923 = vsinq.f32.pop %v1920
  %vm1924 = vweird.f32 %v1519
  %v1925 = vadd.s32 %v1921, 3
  %v1926 = vand.u32 %v1925, 3
  %vm1927 = vcmp.lt.s32.totalorder %v1926, 2
  %vm1928 = vcmp.eq.s32.totalorder %v1926, 0
  %v1929 = vxor.u32 %v1923, 2147483648
  %v1930 = vsel %vm1928, %v1922, %v1929
  %vm1931 = vcmp.eq.s32.totalorder %v1926, 2
  %v1932 = vxor.u32 %v1922, 2147483648
  %v1933 = vsel %vm1931, %v1932, %v1923
  %v1934 = vsel %vm1927, %v1930, %v1933
  %v1935 = vsel %vm1924, nan, %v1934
  %v1936 = vand.u32 2147483647, %v1516
  %vm1937 = vcmp.le.f32.partialorder %v1936, 0.7853982
  %vm1938 = vcmp.lt.s32.totalorder %v1516, 0
  %v1939 = vand.u32 %v1516, 2139095040
  %v1940 = vshrl.u32 %v1939, 23
  %v1941 = vsub.s32 %v1940, 127
  %v1942 = vand.u32 2147483647, %v1516
  %v1943 = vand.u32 %v1942, 8388607
  %v1944 = vor.u32 %v1943, 8388608
  %v1945 = vsub.s32 0, %v1944
  %v1946 = vadd.s32 %v1941, 1
  %vm1947 = vcmp.gt.s32.totalorder %v1946, 0
  %v1948 = vsel %vm1947, %v1946, 0
  %v1949 = vshrl.u32 %v1948, 5
  %v1950 = vand.u32 %v1948, 31
  %v1951 = vsub.s32 32, %v1950
  %v1952 = vshrl.u32 683565275, %v1951
  %v1953 = vshll.u32 683565275, %v1950
  %v1954 = vshrl.u32 2475754826, %v1951
  %v1955 = vor.u32 %v1953, %v1954
  %v1956 = vshll.u32 2475754826, %v1950
  %v1957 = vshrl.u32 2131351028, %v1951
  %v1958 = vor.u32 %v1956, %v1957
  %v1959 = vshll.u32 2131351028, %v1950
  %v1960 = vshrl.u32 2102212464, %v1951
  %v1961 = vor.u32 %v1959, %v1960
  %v1962 = vshll.u32 2102212464, %v1950
  %v1963 = vshrl.u32 920167782, %v1951
  %v1964 = vor.u32 %v1962, %v1963
  %v1965 = vshll.u32 920167782, %v1950
  %v1966 = vshrl.u32 1326507024, %v1951
  %v1967 = vor.u32 %v1965, %v1966
  %vm1968 = vcmp.lt.s32.totalorder %v1949, 1
  %vm1969 = vcmp.lt.s32.totalorder %v1949, 2
  %vm1970 = vcmp.lt.s32.totalorder %v1949, 3
  %vm1971 = vcmp.lt.s32.totalorder %v1949, 4
  %v1972 = vsel %vm1968, %v1952, %v1955
  %v1973 = vsel %vm1971, %v1961, 2102212464
  %v1974 = vsel %vm1970, %v1958, %v1973
  %v1975 = vsel %vm1969, %v1972, %v1974
  %v1976 = vsel %vm1968, %v1955, %v1958
  %v1977 = vsel %vm1971, %v1964, 920167782
  %v1978 = vsel %vm1970, %v1961, %v1977
  %v1979 = vsel %vm1969, %v1976, %v1978
  %v1980 = vsel %vm1968, %v1958, %v1961
  %v1981 = vsel %vm1971, %v1967, 1326507024
  %v1982 = vsel %vm1970, %v1964, %v1981
  %v1983 = vsel %vm1969, %v1980, %v1982
  %v1984 = vshll.u32 %v1944, 8
  %v1985 = vmul.u32.u64.compose %v1984, %v1983
  %v1986 = vextract.low.u32 %v1985
  %v1987 = vextract.high.u32 %v1985
  %v1988 = vmul.u32.u64.compose %v1984, %v1979
  %v1989 = vextract.low.u32 %v1988
  %v1990 = vextract.high.u32 %v1988
  %v1991 = vmul.u32 %v1984, %v1975
  %v1992 = vadd.s32 %v1987, %v1989
  %vm1993 = vc.u32 %v1987, %v1989
  %v1994 = vadd.s32 %v1990, 1
  %v1995 = vsel %vm1993, %v1994, %v1990
  %v1996 = vadd.s32 %v1991, %v1995
  %v1997 = vadd.s32 %v1996, 536870912
  %v1998 = vshrl.u32 %v1997, 30
  %v1999 = vshll.u32 %v1998, 30
  %v2000 = vsub.s32 %v1996, %v1999
  %vm2001 = vcmp.lt.s32.totalorder %v2000, 0
  %v2002 = vsub.s32 0, %v2000
  %v2003 = vsel %vm2001, %v2002, %v2000
  %v2004 = vclz %v2003
  %v2005 = vsub.s32 %v2004, 2
  %vm2006 = vcmp.gt.s32.totalorder 0, %v2005
  %v2007 = vsel %vm2006, 0, %v2005
  %v2008 = vsub.s32 32, %v2007
  %v2009 = vshll.u32 %v2000, %v2007
  %v2010 = vshrl.u32 %v1992, %v2008
  %v2011 = vor.u32 %v2009, %v2010
  %v2012 = vsub.s32 4294967266, %v2007
  %v2013 = vadd.s32 %v2012, 127
  %v2014 = vshll.u32 %v2013, 23
  %v2015 = vor.u32 4788187, %v2014
  %v2016 = vand.u32 2147483647, %v2015
  %v2018 = vcvt.s32.f32 %v2011
  %v2019 = vmul.f32 %v2018, %v2016
  %v2020 = vxor.u32 %v2019, 2147483648
  %v2021 = vsel %vm1938, %v2020, %v2019
  %v2022 = vsub.s32 4, %v1998
  %v2023 = vsel %vm1938, %v2022, %v1998
  %v2024 = vsel %vm1937, %v1516, %v2021
  %v2025 = vsel %vm1937, 0, %v2023
  %v2026 = vcosq.f32.pop %v2024
  %v2027 = vsinq.f32.pop %v2024
  %vm2028 = vweird.f32 %v1516
  %v2029 = vand.u32 %v2025, 3
  %vm2030 = vcmp.lt.s32.totalorder %v2029, 2
  %vm2031 = vcmp.eq.s32.totalorder %v2029, 0
  %v2032 = vxor.u32 %v2027, 2147483648
  %v2033 = vsel %vm2031, %v2026, %v2032
  %vm2034 = vcmp.eq.s32.totalorder %v2029, 2
  %v2035 = vxor.u32 %v2026, 2147483648
  %v2036 = vsel %vm2034, %v2035, %v2027
  %v2037 = vsel %vm2030, %v2033, %v2036
  %v2038 = vsel %vm2028, nan, %v2037
  %v2039 = vand.u32 2147483647, %v1517
  %vm2040 = vcmp.le.f32.partialorder %v2039, 0.7853982
  %vm2041 = vcmp.lt.s32.totalorder %v1517, 0
  %v2042 = vand.u32 %v1517, 2139095040
  %v2043 = vshrl.u32 %v2042, 23
  %v2044 = vsub.s32 %v2043, 127
  %v2045 = vand.u32 2147483647, %v1517
  %v2046 = vand.u32 %v2045, 8388607
  %v2047 = vor.u32 %v2046, 8388608
  %v2048 = vsub.s32 0, %v2047
  %v2049 = vadd.s32 %v2044, 1
  %vm2050 = vcmp.gt.s32.totalorder %v2049, 0
  %v2051 = vsel %vm2050, %v2049, 0
  %v2052 = vshrl.u32 %v2051, 5
  %v2053 = vand.u32 %v2051, 31
  %v2054 = vsub.s32 32, %v2053
  %v2055 = vshrl.u32 683565275, %v2054
  %v2056 = vshll.u32 683565275, %v2053
  %v2057 = vshrl.u32 2475754826, %v2054
  %v2058 = vor.u32 %v2056, %v2057
  %v2059 = vshll.u32 2475754826, %v2053
  %v2060 = vshrl.u32 2131351028, %v2054
  %v2061 = vor.u32 %v2059, %v2060
  %v2062 = vshll.u32 2131351028, %v2053
  %v2063 = vshrl.u32 2102212464, %v2054
  %v2064 = vor.u32 %v2062, %v2063
  %v2065 = vshll.u32 2102212464, %v2053
  %v2066 = vshrl.u32 920167782, %v2054
  %v2067 = vor.u32 %v2065, %v2066
  %v2068 = vshll.u32 920167782, %v2053
  %v2069 = vshrl.u32 1326507024, %v2054
  %v2070 = vor.u32 %v2068, %v2069
  %vm2071 = vcmp.lt.s32.totalorder %v2052, 1
  %vm2072 = vcmp.lt.s32.totalorder %v2052, 2
  %vm2073 = vcmp.lt.s32.totalorder %v2052, 3
  %vm2074 = vcmp.lt.s32.totalorder %v2052, 4
  %v2075 = vsel %vm2071, %v2055, %v2058
  %v2076 = vsel %vm2074, %v2064, 2102212464
  %v2077 = vsel %vm2073, %v2061, %v2076
  %v2078 = vsel %vm2072, %v2075, %v2077
  %v2079 = vsel %vm2071, %v2058, %v2061
  %v2080 = vsel %vm2074, %v2067, 920167782
  %v2081 = vsel %vm2073, %v2064, %v2080
  %v2082 = vsel %vm2072, %v2079, %v2081
  %v2083 = vsel %vm2071, %v2061, %v2064
  %v2084 = vsel %vm2074, %v2070, 1326507024
  %v2085 = vsel %vm2073, %v2067, %v2084
  %v2086 = vsel %vm2072, %v2083, %v2085
  %v2087 = vshll.u32 %v2047, 8
  %v2088 = vmul.u32.u64.compose %v2087, %v2086
  %v2089 = vextract.low.u32 %v2088
  %v2090 = vextract.high.u32 %v2088
  %v2091 = vmul.u32.u64.compose %v2087, %v2082
  %v2092 = vextract.low.u32 %v2091
  %v2093 = vextract.high.u32 %v2091
  %v2094 = vmul.u32 %v2087, %v2078
  %v2095 = vadd.s32 %v2090, %v2092
  %vm2096 = vc.u32 %v2090, %v2092
  %v2097 = vadd.s32 %v2093, 1
  %v2098 = vsel %vm2096, %v2097, %v2093
  %v2099 = vadd.s32 %v2094, %v2098
  %v2100 = vadd.s32 %v2099, 536870912
  %v2101 = vshrl.u32 %v2100, 30
  %v2102 = vshll.u32 %v2101, 30
  %v2103 = vsub.s32 %v2099, %v2102
  %vm2104 = vcmp.lt.s32.totalorder %v2103, 0
  %v2105 = vsub.s32 0, %v2103
  %v2106 = vsel %vm2104, %v2105, %v2103
  %v2107 = vclz %v2106
  %v2108 = vsub.s32 %v2107, 2
  %vm2109 = vcmp.gt.s32.totalorder 0, %v2108
  %v2110 = vsel %vm2109, 0, %v2108
  %v2111 = vsub.s32 32, %v2110
  %v2112 = vshll.u32 %v2103, %v2110
  %v2113 = vshrl.u32 %v2095, %v2111
  %v2114 = vor.u32 %v2112, %v2113
  %v2115 = vsub.s32 4294967266, %v2110
  %v2116 = vadd.s32 %v2115, 127
  %v2117 = vshll.u32 %v2116, 23
  %v2118 = vor.u32 4788187, %v2117
  %v2119 = vand.u32 2147483647, %v2118
  %v2121 = vcvt.s32.f32 %v2114
  %v2122 = vmul.f32 %v2121, %v2119
  %v2123 = vxor.u32 %v2122, 2147483648
  %v2124 = vsel %vm2041, %v2123, %v2122
  %v2125 = vsub.s32 4, %v2101
  %v2126 = vsel %vm2041, %v2125, %v2101
  %v2127 = vsel %vm2040, %v1517, %v2124
  %v2128 = vsel %vm2040, 0, %v2126
  %v2129 = vcosq.f32.pop %v2127
  %v2130 = vsinq.f32.pop %v2127
  %vm2131 = vweird.f32 %v1517
  %v2132 = vand.u32 %v2128, 3
  %vm2133 = vcmp.lt.s32.totalorder %v2132, 2
  %vm2134 = vcmp.eq.s32.totalorder %v2132, 0
  %v2135 = vxor.u32 %v2130, 2147483648
  %v2136 = vsel %vm2134, %v2129, %v2135
  %vm2137 = vcmp.eq.s32.totalorder %v2132, 2
  %v2138 = vxor.u32 %v2129, 2147483648
  %v2139 = vsel %vm2137, %v2138, %v2130
  %v2140 = vsel %vm2133, %v2136, %v2139
  %v2141 = vsel %vm2131, nan, %v2140
  %v2142 = vand.u32 2147483647, %v1518
  %vm2143 = vcmp.le.f32.partialorder %v2142, 0.7853982
  %vm2144 = vcmp.lt.s32.totalorder %v1518, 0
  %v2145 = vand.u32 %v1518, 2139095040
  %v2146 = vshrl.u32 %v2145, 23
  %v2147 = vsub.s32 %v2146, 127
  %v2148 = vand.u32 2147483647, %v1518
  %v2149 = vand.u32 %v2148, 8388607
  %v2150 = vor.u32 %v2149, 8388608
  %v2151 = vsub.s32 0, %v2150
  %v2152 = vadd.s32 %v2147, 1
  %vm2153 = vcmp.gt.s32.totalorder %v2152, 0
  %v2154 = vsel %vm2153, %v2152, 0
  %v2155 = vshrl.u32 %v2154, 5
  %v2156 = vand.u32 %v2154, 31
  %v2157 = vsub.s32 32, %v2156
  %v2158 = vshrl.u32 683565275, %v2157
  %v2159 = vshll.u32 683565275, %v2156
  %v2160 = vshrl.u32 2475754826, %v2157
  %v2161 = vor.u32 %v2159, %v2160
  %v2162 = vshll.u32 2475754826, %v2156
  %v2163 = vshrl.u32 2131351028, %v2157
  %v2164 = vor.u32 %v2162, %v2163
  %v2165 = vshll.u32 2131351028, %v2156
  %v2166 = vshrl.u32 2102212464, %v2157
  %v2167 = vor.u32 %v2165, %v2166
  %v2168 = vshll.u32 2102212464, %v2156
  %v2169 = vshrl.u32 920167782, %v2157
  %v2170 = vor.u32 %v2168, %v2169
  %v2171 = vshll.u32 920167782, %v2156
  %v2172 = vshrl.u32 1326507024, %v2157
  %v2173 = vor.u32 %v2171, %v2172
  %vm2174 = vcmp.lt.s32.totalorder %v2155, 1
  %vm2175 = vcmp.lt.s32.totalorder %v2155, 2
  %vm2176 = vcmp.lt.s32.totalorder %v2155, 3
  %vm2177 = vcmp.lt.s32.totalorder %v2155, 4
  %v2178 = vsel %vm2174, %v2158, %v2161
  %v2179 = vsel %vm2177, %v2167, 2102212464
  %v2180 = vsel %vm2176, %v2164, %v2179
  %v2181 = vsel %vm2175, %v2178, %v2180
  %v2182 = vsel %vm2174, %v2161, %v2164
  %v2183 = vsel %vm2177, %v2170, 920167782
  %v2184 = vsel %vm2176, %v2167, %v2183
  %v2185 = vsel %vm2175, %v2182, %v2184
  %v2186 = vsel %vm2174, %v2164, %v2167
  %v2187 = vsel %vm2177, %v2173, 1326507024
  %v2188 = vsel %vm2176, %v2170, %v2187
  %v2189 = vsel %vm2175, %v2186, %v2188
  %v2190 = vshll.u32 %v2150, 8
  %v2191 = vmul.u32.u64.compose %v2190, %v2189
  %v2192 = vextract.low.u32 %v2191
  %v2193 = vextract.high.u32 %v2191
  %v2194 = vmul.u32.u64.compose %v2190, %v2185
  %v2195 = vextract.low.u32 %v2194
  %v2196 = vextract.high.u32 %v2194
  %v2197 = vmul.u32 %v2190, %v2181
  %v2198 = vadd.s32 %v2193, %v2195
  %vm2199 = vc.u32 %v2193, %v2195
  %v2200 = vadd.s32 %v2196, 1
  %v2201 = vsel %vm2199, %v2200, %v2196
  %v2202 = vadd.s32 %v2197, %v2201
  %v2203 = vadd.s32 %v2202, 536870912
  %v2204 = vshrl.u32 %v2203, 30
  %v2205 = vshll.u32 %v2204, 30
  %v2206 = vsub.s32 %v2202, %v2205
  %vm2207 = vcmp.lt.s32.totalorder %v2206, 0
  %v2208 = vsub.s32 0, %v2206
  %v2209 = vsel %vm2207, %v2208, %v2206
  %v2210 = vclz %v2209
  %v2211 = vsub.s32 %v2210, 2
  %vm2212 = vcmp.gt.s32.totalorder 0, %v2211
  %v2213 = vsel %vm2212, 0, %v2211
  %v2214 = vsub.s32 32, %v2213
  %v2215 = vshll.u32 %v2206, %v2213
  %v2216 = vshrl.u32 %v2198, %v2214
  %v2217 = vor.u32 %v2215, %v2216
  %v2218 = vsub.s32 4294967266, %v2213
  %v2219 = vadd.s32 %v2218, 127
  %v2220 = vshll.u32 %v2219, 23
  %v2221 = vor.u32 4788187, %v2220
  %v2222 = vand.u32 2147483647, %v2221
  %v2224 = vcvt.s32.f32 %v2217
  %v2225 = vmul.f32 %v2224, %v2222
  %v2226 = vxor.u32 %v2225, 2147483648
  %v2227 = vsel %vm2144, %v2226, %v2225
  %v2228 = vsub.s32 4, %v2204
  %v2229 = vsel %vm2144, %v2228, %v2204
  %v2230 = vsel %vm2143, %v1518, %v2227
  %v2231 = vsel %vm2143, 0, %v2229
  %v2232 = vcosq.f32.pop %v2230
  %v2233 = vsinq.f32.pop %v2230
  %vm2234 = vweird.f32 %v1518
  %v2235 = vand.u32 %v2231, 3
  %vm2236 = vcmp.lt.s32.totalorder %v2235, 2
  %vm2237 = vcmp.eq.s32.totalorder %v2235, 0
  %v2238 = vxor.u32 %v2233, 2147483648
  %v2239 = vsel %vm2237, %v2232, %v2238
  %vm2240 = vcmp.eq.s32.totalorder %v2235, 2
  %v2241 = vxor.u32 %v2232, 2147483648
  %v2242 = vsel %vm2240, %v2241, %v2233
  %v2243 = vsel %vm2236, %v2239, %v2242
  %v2244 = vsel %vm2234, nan, %v2243
  %v2245 = vand.u32 2147483647, %v1519
  %vm2246 = vcmp.le.f32.partialorder %v2245, 0.7853982
  %vm2247 = vcmp.lt.s32.totalorder %v1519, 0
  %v2248 = vand.u32 %v1519, 2139095040
  %v2249 = vshrl.u32 %v2248, 23
  %v2250 = vsub.s32 %v2249, 127
  %v2251 = vand.u32 2147483647, %v1519
  %v2252 = vand.u32 %v2251, 8388607
  %v2253 = vor.u32 %v2252, 8388608
  %v2254 = vsub.s32 0, %v2253
  %v2255 = vadd.s32 %v2250, 1
  %vm2256 = vcmp.gt.s32.totalorder %v2255, 0
  %v2257 = vsel %vm2256, %v2255, 0
  %v2258 = vshrl.u32 %v2257, 5
  %v2259 = vand.u32 %v2257, 31
  %v2260 = vsub.s32 32, %v2259
  %v2261 = vshrl.u32 683565275, %v2260
  %v2262 = vshll.u32 683565275, %v2259
  %v2263 = vshrl.u32 2475754826, %v2260
  %v2264 = vor.u32 %v2262, %v2263
  %v2265 = vshll.u32 2475754826, %v2259
  %v2266 = vshrl.u32 2131351028, %v2260
  %v2267 = vor.u32 %v2265, %v2266
  %v2268 = vshll.u32 2131351028, %v2259
  %v2269 = vshrl.u32 2102212464, %v2260
  %v2270 = vor.u32 %v2268, %v2269
  %v2271 = vshll.u32 2102212464, %v2259
  %v2272 = vshrl.u32 920167782, %v2260
  %v2273 = vor.u32 %v2271, %v2272
  %v2274 = vshll.u32 920167782, %v2259
  %v2275 = vshrl.u32 1326507024, %v2260
  %v2276 = vor.u32 %v2274, %v2275
  %vm2277 = vcmp.lt.s32.totalorder %v2258, 1
  %vm2278 = vcmp.lt.s32.totalorder %v2258, 2
  %vm2279 = vcmp.lt.s32.totalorder %v2258, 3
  %vm2280 = vcmp.lt.s32.totalorder %v2258, 4
  %v2281 = vsel %vm2277, %v2261, %v2264
  %v2282 = vsel %vm2280, %v2270, 2102212464
  %v2283 = vsel %vm2279, %v2267, %v2282
  %v2284 = vsel %vm2278, %v2281, %v2283
  %v2285 = vsel %vm2277, %v2264, %v2267
  %v2286 = vsel %vm2280, %v2273, 920167782
  %v2287 = vsel %vm2279, %v2270, %v2286
  %v2288 = vsel %vm2278, %v2285, %v2287
  %v2289 = vsel %vm2277, %v2267, %v2270
  %v2290 = vsel %vm2280, %v2276, 1326507024
  %v2291 = vsel %vm2279, %v2273, %v2290
  %v2292 = vsel %vm2278, %v2289, %v2291
  %v2293 = vshll.u32 %v2253, 8
  %v2294 = vmul.u32.u64.compose %v2293, %v2292
  %v2295 = vextract.low.u32 %v2294
  %v2296 = vextract.high.u32 %v2294
  %v2297 = vmul.u32.u64.compose %v2293, %v2288
  %v2298 = vextract.low.u32 %v2297
  %v2299 = vextract.high.u32 %v2297
  %v2300 = vmul.u32 %v2293, %v2284
  %v2301 = vadd.s32 %v2296, %v2298
  %vm2302 = vc.u32 %v2296, %v2298
  %v2303 = vadd.s32 %v2299, 1
  %v2304 = vsel %vm2302, %v2303, %v2299
  %v2305 = vadd.s32 %v2300, %v2304
  %v2306 = vadd.s32 %v2305, 536870912
  %v2307 = vshrl.u32 %v2306, 30
  %v2308 = vshll.u32 %v2307, 30
  %v2309 = vsub.s32 %v2305, %v2308
  %vm2310 = vcmp.lt.s32.totalorder %v2309, 0
  %v2311 = vsub.s32 0, %v2309
  %v2312 = vsel %vm2310, %v2311, %v2309
  %v2313 = vclz %v2312
  %v2314 = vsub.s32 %v2313, 2
  %vm2315 = vcmp.gt.s32.totalorder 0, %v2314
  %v2316 = vsel %vm2315, 0, %v2314
  %v2317 = vsub.s32 32, %v2316
  %v2318 = vshll.u32 %v2309, %v2316
  %v2319 = vshrl.u32 %v2301, %v2317
  %v2320 = vor.u32 %v2318, %v2319
  %v2321 = vsub.s32 4294967266, %v2316
  %v2322 = vadd.s32 %v2321, 127
  %v2323 = vshll.u32 %v2322, 23
  %v2324 = vor.u32 4788187, %v2323
  %v2325 = vand.u32 2147483647, %v2324
  %v2327 = vcvt.s32.f32 %v2320
  %v2328 = vmul.f32 %v2327, %v2325
  %v2329 = vxor.u32 %v2328, 2147483648
  %v2330 = vsel %vm2247, %v2329, %v2328
  %v2331 = vsub.s32 4, %v2307
  %v2332 = vsel %vm2247, %v2331, %v2307
  %v2333 = vsel %vm2246, %v1519, %v2330
  %v2334 = vsel %vm2246, 0, %v2332
  %v2335 = vcosq.f32.pop %v2333
  %v2336 = vsinq.f32.pop %v2333
  %vm2337 = vweird.f32 %v1519
  %v2338 = vand.u32 %v2334, 3
  %vm2339 = vcmp.lt.s32.totalorder %v2338, 2
  %vm2340 = vcmp.eq.s32.totalorder %v2338, 0
  %v2341 = vxor.u32 %v2336, 2147483648
  %v2342 = vsel %vm2340, %v2335, %v2341
  %vm2343 = vcmp.eq.s32.totalorder %v2338, 2
  %v2344 = vxor.u32 %v2335, 2147483648
  %v2345 = vsel %vm2343, %v2344, %v2336
  %v2346 = vsel %vm2339, %v2342, %v2345
  %v2347 = vsel %vm2337, nan, %v2346
  %v2348 = vld [vmem:[%s8] sm:$0xff]
  %v2349 = vld [vmem:[%s8 + $0x8] sm:$0xff]
  %v2350 = vld [vmem:[%s8 + $0x10] sm:$0xff]
  %v2351 = vld [vmem:[%s8 + $0x18] sm:$0xff]
  %v2352 = vld [vmem:[%s8 + $0x20] sm:$0xff]
  %v2353 = vld [vmem:[%s8 + $0x28] sm:$0xff]
  %v2354 = vld [vmem:[%s8 + $0x30] sm:$0xff]
  %v2355 = vld [vmem:[%s8 + $0x38] sm:$0xff]
  %v2356 = vld [vmem:[%s8 + $0x40] sm:$0xff]
  %v2357 = vld [vmem:[%s8 + $0x48] sm:$0xff]
  %v2358 = vld [vmem:[%s8 + $0x50] sm:$0xff]
  %v2359 = vld [vmem:[%s8 + $0x58] sm:$0xff]
  %v2360 = vld [vmem:[%s8 + $0x60] sm:$0xff]
  %v2361 = vld [vmem:[%s8 + $0x68] sm:$0xff]
  %v2362 = vld [vmem:[%s8 + $0x70] sm:$0xff]
  %v2363 = vld [vmem:[%s8 + $0x78] sm:$0xff]
  %v2364 = vld [vmem:[%s8 + $0x80] sm:$0xff]
  %v2365 = vld [vmem:[%s8 + $0x88] sm:$0xff]
  %v2366 = vld [vmem:[%s8 + $0x90] sm:$0xff]
  %v2367 = vld [vmem:[%s8 + $0x98] sm:$0xff]
  %v2368 = vld [vmem:[%s8 + $0xa0] sm:$0xff]
  %v2369 = vld [vmem:[%s8 + $0xa8] sm:$0xff]
  %v2370 = vld [vmem:[%s8 + $0xb0] sm:$0xff]
  %v2371 = vld [vmem:[%s8 + $0xb8] sm:$0xff]
  %v2372 = vld [vmem:[%s8 + $0xc0] sm:$0xff]
  %v2373 = vld [vmem:[%s8 + $0xc8] sm:$0xff]
  %v2374 = vld [vmem:[%s8 + $0xd0] sm:$0xff]
  %v2375 = vld [vmem:[%s8 + $0xd8] sm:$0xff]
  %v2376 = vld [vmem:[%s8 + $0xe0] sm:$0xff]
  %v2377 = vld [vmem:[%s8 + $0xe8] sm:$0xff]
  %v2378 = vld [vmem:[%s8 + $0xf0] sm:$0xff]
  %v2379 = vld [vmem:[%s8 + $0xf8] sm:$0xff]
  %v2380 = vld [vmem:[%s8 + $0x100] sm:$0xff]
  %v2381 = vld [vmem:[%s8 + $0x108] sm:$0xff]
  %v2382 = vld [vmem:[%s8 + $0x110] sm:$0xff]
  %v2383 = vld [vmem:[%s8 + $0x118] sm:$0xff]
  %v2384 = vld [vmem:[%s8 + $0x120] sm:$0xff]
  %v2385 = vld [vmem:[%s8 + $0x128] sm:$0xff]
  %v2386 = vld [vmem:[%s8 + $0x130] sm:$0xff]
  %v2387 = vld [vmem:[%s8 + $0x138] sm:$0xff]
  %v2388 = vld [vmem:[%s8 + $0x140] sm:$0xff]
  %v2389 = vld [vmem:[%s8 + $0x148] sm:$0xff]
  %v2390 = vld [vmem:[%s8 + $0x150] sm:$0xff]
  %v2391 = vld [vmem:[%s8 + $0x158] sm:$0xff]
  %v2392 = vld [vmem:[%s8 + $0x160] sm:$0xff]
  %v2393 = vld [vmem:[%s8 + $0x168] sm:$0xff]
  %v2394 = vld [vmem:[%s8 + $0x170] sm:$0xff]
  %v2395 = vld [vmem:[%s8 + $0x178] sm:$0xff]
  %v2396 = vld [vmem:[%s8 + $0x180] sm:$0xff]
  %v2397 = vld [vmem:[%s8 + $0x188] sm:$0xff]
  %v2398 = vld [vmem:[%s8 + $0x190] sm:$0xff]
  %v2399 = vld [vmem:[%s8 + $0x198] sm:$0xff]
  %v2400 = vld [vmem:[%s8 + $0x1a0] sm:$0xff]
  %v2401 = vld [vmem:[%s8 + $0x1a8] sm:$0xff]
  %v2402 = vld [vmem:[%s8 + $0x1b0] sm:$0xff]
  %v2403 = vld [vmem:[%s8 + $0x1b8] sm:$0xff]
  %v2404 = vld [vmem:[%s8 + $0x1c0] sm:$0xff]
  %v2405 = vld [vmem:[%s8 + $0x1c8] sm:$0xff]
  %v2406 = vld [vmem:[%s8 + $0x1d0] sm:$0xff]
  %v2407 = vld [vmem:[%s8 + $0x1d8] sm:$0xff]
  %v2408 = vld [vmem:[%s8 + $0x1e0] sm:$0xff]
  %v2409 = vld [vmem:[%s8 + $0x1e8] sm:$0xff]
  %v2410 = vld [vmem:[%s8 + $0x1f0] sm:$0xff]
  %v2411 = vld [vmem:[%s8 + $0x1f8] sm:$0xff]
  %v2412 = vld [vmem:[%s8 + $0x200] sm:$0xff]
  %v2413 = vld [vmem:[%s8 + $0x208] sm:$0xff]
  %v2414 = vld [vmem:[%s8 + $0x210] sm:$0xff]
  %v2415 = vld [vmem:[%s8 + $0x218] sm:$0xff]
  %v2416 = vld [vmem:[%s8 + $0x220] sm:$0xff]
  %v2417 = vld [vmem:[%s8 + $0x228] sm:$0xff]
  %v2418 = vld [vmem:[%s8 + $0x230] sm:$0xff]
  %v2419 = vld [vmem:[%s8 + $0x238] sm:$0xff]
  %v2420 = vld [vmem:[%s8 + $0x240] sm:$0xff]
  %v2421 = vld [vmem:[%s8 + $0x248] sm:$0xff]
  %v2422 = vld [vmem:[%s8 + $0x250] sm:$0xff]
  %v2423 = vld [vmem:[%s8 + $0x258] sm:$0xff]
  %v2424 = vld [vmem:[%s8 + $0x260] sm:$0xff]
  %v2425 = vld [vmem:[%s8 + $0x268] sm:$0xff]
  %v2426 = vld [vmem:[%s8 + $0x270] sm:$0xff]
  %v2427 = vld [vmem:[%s8 + $0x278] sm:$0xff]
  %v2428 = vld [vmem:[%s8 + $0x280] sm:$0xff]
  %v2429 = vld [vmem:[%s8 + $0x288] sm:$0xff]
  %v2430 = vld [vmem:[%s8 + $0x290] sm:$0xff]
  %v2431 = vld [vmem:[%s8 + $0x298] sm:$0xff]
  %v2432 = vld [vmem:[%s8 + $0x2a0] sm:$0xff]
  %v2433 = vld [vmem:[%s8 + $0x2a8] sm:$0xff]
  %v2434 = vld [vmem:[%s8 + $0x2b0] sm:$0xff]
  %v2435 = vld [vmem:[%s8 + $0x2b8] sm:$0xff]
  %v2436 = vld [vmem:[%s8 + $0x2c0] sm:$0xff]
  %v2437 = vld [vmem:[%s8 + $0x2c8] sm:$0xff]
  %v2438 = vld [vmem:[%s8 + $0x2d0] sm:$0xff]
  %v2439 = vld [vmem:[%s8 + $0x2d8] sm:$0xff]
  %v2440 = vld [vmem:[%s8 + $0x2e0] sm:$0xff]
  %v2441 = vld [vmem:[%s8 + $0x2e8] sm:$0xff]
  %v2442 = vld [vmem:[%s8 + $0x2f0] sm:$0xff]
  %v2443 = vld [vmem:[%s8 + $0x2f8] sm:$0xff]
  %v2444 = vld [vmem:[%s8 + $0x300] sm:$0xff]
  %v2445 = vld [vmem:[%s8 + $0x308] sm:$0xff]
  %v2446 = vld [vmem:[%s8 + $0x310] sm:$0xff]
  %v2447 = vld [vmem:[%s8 + $0x318] sm:$0xff]
  %v2448 = vld [vmem:[%s8 + $0x320] sm:$0xff]
  %v2449 = vld [vmem:[%s8 + $0x328] sm:$0xff]
  %v2450 = vld [vmem:[%s8 + $0x330] sm:$0xff]
  %v2451 = vld [vmem:[%s8 + $0x338] sm:$0xff]
  %v2452 = vld [vmem:[%s8 + $0x340] sm:$0xff]
  %v2453 = vld [vmem:[%s8 + $0x348] sm:$0xff]
  %v2454 = vld [vmem:[%s8 + $0x350] sm:$0xff]
  %v2455 = vld [vmem:[%s8 + $0x358] sm:$0xff]
  %v2456 = vld [vmem:[%s8 + $0x360] sm:$0xff]
  %v2457 = vld [vmem:[%s8 + $0x368] sm:$0xff]
  %v2458 = vld [vmem:[%s8 + $0x370] sm:$0xff]
  %v2459 = vld [vmem:[%s8 + $0x378] sm:$0xff]
  %v2460 = vld [vmem:[%s8 + $0x380] sm:$0xff]
  %v2461 = vld [vmem:[%s8 + $0x388] sm:$0xff]
  %v2462 = vld [vmem:[%s8 + $0x390] sm:$0xff]
  %v2463 = vld [vmem:[%s8 + $0x398] sm:$0xff]
  %v2464 = vld [vmem:[%s8 + $0x3a0] sm:$0xff]
  %v2465 = vld [vmem:[%s8 + $0x3a8] sm:$0xff]
  %v2466 = vld [vmem:[%s8 + $0x3b0] sm:$0xff]
  %v2467 = vld [vmem:[%s8 + $0x3b8] sm:$0xff]
  %v2468 = vld [vmem:[%s8 + $0x3c0] sm:$0xff]
  %v2469 = vld [vmem:[%s8 + $0x3c8] sm:$0xff]
  %v2470 = vld [vmem:[%s8 + $0x3d0] sm:$0xff]
  %v2471 = vld [vmem:[%s8 + $0x3d8] sm:$0xff]
  %v2472 = vld [vmem:[%s8 + $0x3e0] sm:$0xff]
  %v2473 = vld [vmem:[%s8 + $0x3e8] sm:$0xff]
  %v2474 = vld [vmem:[%s8 + $0x3f0] sm:$0xff]
  %v2475 = vld [vmem:[%s8 + $0x3f8] sm:$0xff]
  %v2476 = vld [vmem:[%s9] sm:$0xff]
  %v2477 = vld [vmem:[%s9 + $0x8] sm:$0xff]
  %v2478 = vld [vmem:[%s9 + $0x10] sm:$0xff]
  %v2479 = vld [vmem:[%s9 + $0x18] sm:$0xff]
  %v2480 = vld [vmem:[%s9 + $0x20] sm:$0xff]
  %v2481 = vld [vmem:[%s9 + $0x28] sm:$0xff]
  %v2482 = vld [vmem:[%s9 + $0x30] sm:$0xff]
  %v2483 = vld [vmem:[%s9 + $0x38] sm:$0xff]
  %v2484 = vld [vmem:[%s9 + $0x40] sm:$0xff]
  %v2485 = vld [vmem:[%s9 + $0x48] sm:$0xff]
  %v2486 = vld [vmem:[%s9 + $0x50] sm:$0xff]
  %v2487 = vld [vmem:[%s9 + $0x58] sm:$0xff]
  %v2488 = vld [vmem:[%s9 + $0x60] sm:$0xff]
  %v2489 = vld [vmem:[%s9 + $0x68] sm:$0xff]
  %v2490 = vld [vmem:[%s9 + $0x70] sm:$0xff]
  %v2491 = vld [vmem:[%s9 + $0x78] sm:$0xff]
  %v2492 = vld [vmem:[%s9 + $0x80] sm:$0xff]
  %v2493 = vld [vmem:[%s9 + $0x88] sm:$0xff]
  %v2494 = vld [vmem:[%s9 + $0x90] sm:$0xff]
  %v2495 = vld [vmem:[%s9 + $0x98] sm:$0xff]
  %v2496 = vld [vmem:[%s9 + $0xa0] sm:$0xff]
  %v2497 = vld [vmem:[%s9 + $0xa8] sm:$0xff]
  %v2498 = vld [vmem:[%s9 + $0xb0] sm:$0xff]
  %v2499 = vld [vmem:[%s9 + $0xb8] sm:$0xff]
  %v2500 = vld [vmem:[%s9 + $0xc0] sm:$0xff]
  %v2501 = vld [vmem:[%s9 + $0xc8] sm:$0xff]
  %v2502 = vld [vmem:[%s9 + $0xd0] sm:$0xff]
  %v2503 = vld [vmem:[%s9 + $0xd8] sm:$0xff]
  %v2504 = vld [vmem:[%s9 + $0xe0] sm:$0xff]
  %v2505 = vld [vmem:[%s9 + $0xe8] sm:$0xff]
  %v2506 = vld [vmem:[%s9 + $0xf0] sm:$0xff]
  %v2507 = vld [vmem:[%s9 + $0xf8] sm:$0xff]
  %v2508 = vld [vmem:[%s9 + $0x100] sm:$0xff]
  %v2509 = vld [vmem:[%s9 + $0x108] sm:$0xff]
  %v2510 = vld [vmem:[%s9 + $0x110] sm:$0xff]
  %v2511 = vld [vmem:[%s9 + $0x118] sm:$0xff]
  %v2512 = vld [vmem:[%s9 + $0x120] sm:$0xff]
  %v2513 = vld [vmem:[%s9 + $0x128] sm:$0xff]
  %v2514 = vld [vmem:[%s9 + $0x130] sm:$0xff]
  %v2515 = vld [vmem:[%s9 + $0x138] sm:$0xff]
  %v2516 = vld [vmem:[%s9 + $0x140] sm:$0xff]
  %v2517 = vld [vmem:[%s9 + $0x148] sm:$0xff]
  %v2518 = vld [vmem:[%s9 + $0x150] sm:$0xff]
  %v2519 = vld [vmem:[%s9 + $0x158] sm:$0xff]
  %v2520 = vld [vmem:[%s9 + $0x160] sm:$0xff]
  %v2521 = vld [vmem:[%s9 + $0x168] sm:$0xff]
  %v2522 = vld [vmem:[%s9 + $0x170] sm:$0xff]
  %v2523 = vld [vmem:[%s9 + $0x178] sm:$0xff]
  %v2524 = vld [vmem:[%s9 + $0x180] sm:$0xff]
  %v2525 = vld [vmem:[%s9 + $0x188] sm:$0xff]
  %v2526 = vld [vmem:[%s9 + $0x190] sm:$0xff]
  %v2527 = vld [vmem:[%s9 + $0x198] sm:$0xff]
  %v2528 = vld [vmem:[%s9 + $0x1a0] sm:$0xff]
  %v2529 = vld [vmem:[%s9 + $0x1a8] sm:$0xff]
  %v2530 = vld [vmem:[%s9 + $0x1b0] sm:$0xff]
  %v2531 = vld [vmem:[%s9 + $0x1b8] sm:$0xff]
  %v2532 = vld [vmem:[%s9 + $0x1c0] sm:$0xff]
  %v2533 = vld [vmem:[%s9 + $0x1c8] sm:$0xff]
  %v2534 = vld [vmem:[%s9 + $0x1d0] sm:$0xff]
  %v2535 = vld [vmem:[%s9 + $0x1d8] sm:$0xff]
  %v2536 = vld [vmem:[%s9 + $0x1e0] sm:$0xff]
  %v2537 = vld [vmem:[%s9 + $0x1e8] sm:$0xff]
  %v2538 = vld [vmem:[%s9 + $0x1f0] sm:$0xff]
  %v2539 = vld [vmem:[%s9 + $0x1f8] sm:$0xff]
  %2541 = vset.pattern.permute.xlu0 0
  %2542 = vperm.xlu0 %2541, %v2476
  %v2543 = vpop.permute.xlu0 %2542
  %2546 = vset.pattern.permute.xlu0 0
  %2547 = vperm.xlu0 %2546, %v2477
  %v2548 = vpop.permute.xlu0 %2547
  %2551 = vset.pattern.permute.xlu0 0
  %2552 = vperm.xlu0 %2551, %v2478
  %v2553 = vpop.permute.xlu0 %2552
  %2556 = vset.pattern.permute.xlu0 0
  %2557 = vperm.xlu0 %2556, %v2479
  %v2558 = vpop.permute.xlu0 %2557
  %2561 = vset.pattern.permute.xlu0 0
  %2562 = vperm.xlu0 %2561, %v2480
  %v2563 = vpop.permute.xlu0 %2562
  %2566 = vset.pattern.permute.xlu0 0
  %2567 = vperm.xlu0 %2566, %v2481
  %v2568 = vpop.permute.xlu0 %2567
  %2571 = vset.pattern.permute.xlu0 0
  %2572 = vperm.xlu0 %2571, %v2482
  %v2573 = vpop.permute.xlu0 %2572
  %2576 = vset.pattern.permute.xlu0 0
  %2577 = vperm.xlu0 %2576, %v2483
  %v2578 = vpop.permute.xlu0 %2577
  %2581 = vset.pattern.permute.xlu0 0
  %2582 = vperm.xlu0 %2581, %v2484
  %v2583 = vpop.permute.xlu0 %2582
  %2586 = vset.pattern.permute.xlu0 0
  %2587 = vperm.xlu0 %2586, %v2485
  %v2588 = vpop.permute.xlu0 %2587
  %2591 = vset.pattern.permute.xlu0 0
  %2592 = vperm.xlu0 %2591, %v2486
  %v2593 = vpop.permute.xlu0 %2592
  %2596 = vset.pattern.permute.xlu0 0
  %2597 = vperm.xlu0 %2596, %v2487
  %v2598 = vpop.permute.xlu0 %2597
  %2601 = vset.pattern.permute.xlu0 0
  %2602 = vperm.xlu0 %2601, %v2488
  %v2603 = vpop.permute.xlu0 %2602
  %2606 = vset.pattern.permute.xlu0 0
  %2607 = vperm.xlu0 %2606, %v2489
  %v2608 = vpop.permute.xlu0 %2607
  %2611 = vset.pattern.permute.xlu0 0
  %2612 = vperm.xlu0 %2611, %v2490
  %v2613 = vpop.permute.xlu0 %2612
  %2616 = vset.pattern.permute.xlu0 0
  %2617 = vperm.xlu0 %2616, %v2491
  %v2618 = vpop.permute.xlu0 %2617
  %2621 = vset.pattern.permute.xlu0 0
  %2622 = vperm.xlu0 %2621, %v2492
  %v2623 = vpop.permute.xlu0 %2622
  %2626 = vset.pattern.permute.xlu0 0
  %2627 = vperm.xlu0 %2626, %v2493
  %v2628 = vpop.permute.xlu0 %2627
  %2631 = vset.pattern.permute.xlu0 0
  %2632 = vperm.xlu0 %2631, %v2494
  %v2633 = vpop.permute.xlu0 %2632
  %2636 = vset.pattern.permute.xlu0 0
  %2637 = vperm.xlu0 %2636, %v2495
  %v2638 = vpop.permute.xlu0 %2637
  %2641 = vset.pattern.permute.xlu0 0
  %2642 = vperm.xlu0 %2641, %v2496
  %v2643 = vpop.permute.xlu0 %2642
  %2646 = vset.pattern.permute.xlu0 0
  %2647 = vperm.xlu0 %2646, %v2497
  %v2648 = vpop.permute.xlu0 %2647
  %2651 = vset.pattern.permute.xlu0 0
  %2652 = vperm.xlu0 %2651, %v2498
  %v2653 = vpop.permute.xlu0 %2652
  %2656 = vset.pattern.permute.xlu0 0
  %2657 = vperm.xlu0 %2656, %v2499
  %v2658 = vpop.permute.xlu0 %2657
  %2661 = vset.pattern.permute.xlu0 0
  %2662 = vperm.xlu0 %2661, %v2500
  %v2663 = vpop.permute.xlu0 %2662
  %2666 = vset.pattern.permute.xlu0 0
  %2667 = vperm.xlu0 %2666, %v2501
  %v2668 = vpop.permute.xlu0 %2667
  %2671 = vset.pattern.permute.xlu0 0
  %2672 = vperm.xlu0 %2671, %v2502
  %v2673 = vpop.permute.xlu0 %2672
  %2676 = vset.pattern.permute.xlu0 0
  %2677 = vperm.xlu0 %2676, %v2503
  %v2678 = vpop.permute.xlu0 %2677
  %2681 = vset.pattern.permute.xlu0 0
  %2682 = vperm.xlu0 %2681, %v2504
  %v2683 = vpop.permute.xlu0 %2682
  %2686 = vset.pattern.permute.xlu0 0
  %2687 = vperm.xlu0 %2686, %v2505
  %v2688 = vpop.permute.xlu0 %2687
  %2691 = vset.pattern.permute.xlu0 0
  %2692 = vperm.xlu0 %2691, %v2506
  %v2693 = vpop.permute.xlu0 %2692
  %2696 = vset.pattern.permute.xlu0 0
  %2697 = vperm.xlu0 %2696, %v2507
  %v2698 = vpop.permute.xlu0 %2697
  %2701 = vset.pattern.permute.xlu0 0
  %2702 = vperm.xlu0 %2701, %v2508
  %v2703 = vpop.permute.xlu0 %2702
  %2706 = vset.pattern.permute.xlu0 0
  %2707 = vperm.xlu0 %2706, %v2509
  %v2708 = vpop.permute.xlu0 %2707
  %2711 = vset.pattern.permute.xlu0 0
  %2712 = vperm.xlu0 %2711, %v2510
  %v2713 = vpop.permute.xlu0 %2712
  %2716 = vset.pattern.permute.xlu0 0
  %2717 = vperm.xlu0 %2716, %v2511
  %v2718 = vpop.permute.xlu0 %2717
  %2721 = vset.pattern.permute.xlu0 0
  %2722 = vperm.xlu0 %2721, %v2512
  %v2723 = vpop.permute.xlu0 %2722
  %2726 = vset.pattern.permute.xlu0 0
  %2727 = vperm.xlu0 %2726, %v2513
  %v2728 = vpop.permute.xlu0 %2727
  %2731 = vset.pattern.permute.xlu0 0
  %2732 = vperm.xlu0 %2731, %v2514
  %v2733 = vpop.permute.xlu0 %2732
  %2736 = vset.pattern.permute.xlu0 0
  %2737 = vperm.xlu0 %2736, %v2515
  %v2738 = vpop.permute.xlu0 %2737
  %2741 = vset.pattern.permute.xlu0 0
  %2742 = vperm.xlu0 %2741, %v2516
  %v2743 = vpop.permute.xlu0 %2742
  %2746 = vset.pattern.permute.xlu0 0
  %2747 = vperm.xlu0 %2746, %v2517
  %v2748 = vpop.permute.xlu0 %2747
  %2751 = vset.pattern.permute.xlu0 0
  %2752 = vperm.xlu0 %2751, %v2518
  %v2753 = vpop.permute.xlu0 %2752
  %2756 = vset.pattern.permute.xlu0 0
  %2757 = vperm.xlu0 %2756, %v2519
  %v2758 = vpop.permute.xlu0 %2757
  %2761 = vset.pattern.permute.xlu0 0
  %2762 = vperm.xlu0 %2761, %v2520
  %v2763 = vpop.permute.xlu0 %2762
  %2766 = vset.pattern.permute.xlu0 0
  %2767 = vperm.xlu0 %2766, %v2521
  %v2768 = vpop.permute.xlu0 %2767
  %2771 = vset.pattern.permute.xlu0 0
  %2772 = vperm.xlu0 %2771, %v2522
  %v2773 = vpop.permute.xlu0 %2772
  %2776 = vset.pattern.permute.xlu0 0
  %2777 = vperm.xlu0 %2776, %v2523
  %v2778 = vpop.permute.xlu0 %2777
  %2781 = vset.pattern.permute.xlu0 0
  %2782 = vperm.xlu0 %2781, %v2524
  %v2783 = vpop.permute.xlu0 %2782
  %2786 = vset.pattern.permute.xlu0 0
  %2787 = vperm.xlu0 %2786, %v2525
  %v2788 = vpop.permute.xlu0 %2787
  %2791 = vset.pattern.permute.xlu0 0
  %2792 = vperm.xlu0 %2791, %v2526
  %v2793 = vpop.permute.xlu0 %2792
  %2796 = vset.pattern.permute.xlu0 0
  %2797 = vperm.xlu0 %2796, %v2527
  %v2798 = vpop.permute.xlu0 %2797
  %2801 = vset.pattern.permute.xlu0 0
  %2802 = vperm.xlu0 %2801, %v2528
  %v2803 = vpop.permute.xlu0 %2802
  %2806 = vset.pattern.permute.xlu0 0
  %2807 = vperm.xlu0 %2806, %v2529
  %v2808 = vpop.permute.xlu0 %2807
  %2811 = vset.pattern.permute.xlu0 0
  %2812 = vperm.xlu0 %2811, %v2530
  %v2813 = vpop.permute.xlu0 %2812
  %2816 = vset.pattern.permute.xlu0 0
  %2817 = vperm.xlu0 %2816, %v2531
  %v2818 = vpop.permute.xlu0 %2817
  %2821 = vset.pattern.permute.xlu0 0
  %2822 = vperm.xlu0 %2821, %v2532
  %v2823 = vpop.permute.xlu0 %2822
  %2826 = vset.pattern.permute.xlu0 0
  %2827 = vperm.xlu0 %2826, %v2533
  %v2828 = vpop.permute.xlu0 %2827
  %2831 = vset.pattern.permute.xlu0 0
  %2832 = vperm.xlu0 %2831, %v2534
  %v2833 = vpop.permute.xlu0 %2832
  %2836 = vset.pattern.permute.xlu0 0
  %2837 = vperm.xlu0 %2836, %v2535
  %v2838 = vpop.permute.xlu0 %2837
  %2841 = vset.pattern.permute.xlu0 0
  %2842 = vperm.xlu0 %2841, %v2536
  %v2843 = vpop.permute.xlu0 %2842
  %2846 = vset.pattern.permute.xlu0 0
  %2847 = vperm.xlu0 %2846, %v2537
  %v2848 = vpop.permute.xlu0 %2847
  %2851 = vset.pattern.permute.xlu0 0
  %2852 = vperm.xlu0 %2851, %v2538
  %v2853 = vpop.permute.xlu0 %2852
  %2856 = vset.pattern.permute.xlu0 0
  %2857 = vperm.xlu0 %2856, %v2539
  %v2858 = vpop.permute.xlu0 %2857
  %2860 = vmatprep.subr.mxu0 %v74
  %2861 = vmatpush1.msra.mxu0 %v73
  %2862 = vmatprep.subr.mxu0 %v76
  %2863 = vmatpush1.msra.mxu0 %v75
  %2864 = vmatprep.subr.mxu0 %v1449
  %2865 = vmatpush1.msra.mxu0 %v1448
  %2866 = vmatprep.subr.mxu0 %v1451
  %2867 = vmatpush1.msra.mxu0 %v1450
  %2868 = vmatprep.subr.mxu0 %v1465
  %2869 = vmatpush1.msra.mxu0 %v1464
  %2870 = vmatprep.subr.mxu0 %v1467
  %2871 = vmatpush1.msra.mxu0 %v1466
  %2872 = vmatprep.subr.mxu0 %v1477
  %2873 = vmatpush1.msra.mxu0 %v1476
  %2874 = vmatprep.subr.mxu0 %v1479
  %2875 = vmatpush1.msra.mxu0 %v1478
  %2876 = vmatprep.subr.mxu0 %v1489
  %2877 = vmatpush1.msra.mxu0 %v1488
  %2878 = vmatprep.subr.mxu0 %v1491
  %2879 = vmatpush1.msra.mxu0 %v1490
  %2880 = vmatprep.subr.mxu0 %v1501
  %2881 = vmatpush1.msra.mxu0 %v1500
  %2882 = vmatprep.subr.mxu0 %v1503
  %2883 = vmatpush1.msra.mxu0 %v1502
  %2884 = vmatprep.subr.mxu0 %v1513
  %2885 = vmatpush1.msra.mxu0 %v1512
  %2886 = vmatprep.subr.mxu0 %v1515
  %2887 = vmatpush1.msra.mxu0 %v1514
  %2888 = vmatprep.subr.mxu0 %v1727
  %2889 = vmatpush1.msra.mxu0 %v1623
  %2890 = vmatprep.subr.mxu0 %v1935
  %2891 = vmatpush1.msra.mxu0 %v1831
  %2892 = vmatprep.subr.mxu0 %v2141
  %2893 = vmatpush1.msra.mxu0 %v2038
  %2894 = vmatprep.subr.mxu0 %v2347
  %2895 = vmatpush1.msra.mxu0 %v2244
  %2896 = vmatprep.subr.mxu0 %v573
  %2897 = vmatpush1.msra.mxu0 %v572
  %2898 = vmatprep.subr.mxu0 %v575
  %2899 = vmatpush1.msra.mxu0 %v574
  %2900 = vmatprep.subr.mxu0 %v589
  %2901 = vmatpush1.msra.mxu0 %v588
  %2902 = vmatprep.subr.mxu0 %v591
  %2903 = vmatpush1.msra.mxu0 %v590
  %2904 = vmatprep.subr.mxu0 %v593
  %2905 = vmatpush1.msra.mxu0 %v592
  %2906 = vmatprep.subr.mxu0 %v595
  %2907 = vmatpush1.msra.mxu0 %v594
  %2908 = vmatprep.subr.mxu0 %v597
  %2909 = vmatpush1.msra.mxu0 %v596
  %2910 = vmatprep.subr.mxu0 %v599
  %2911 = vmatpush1.msra.mxu0 %v598
  %2912 = vmatprep.subr.mxu0 %v601
  %2913 = vmatpush1.msra.mxu0 %v600
  %2914 = vmatprep.subr.mxu0 %v603
  %2915 = vmatpush1.msra.mxu0 %v602
  %2916 = vmatprep.subr.mxu0 %v605
  %2917 = vmatpush1.msra.mxu0 %v604
  %2918 = vmatprep.subr.mxu0 %v607
  %2919 = vmatpush1.msra.mxu0 %v606
  %2920 = vmatprep.subr.mxu0 %v609
  %2921 = vmatpush1.msra.mxu0 %v608
  %2922 = vmatprep.subr.mxu0 %v611
  %2923 = vmatpush1.msra.mxu0 %v610
  %2924 = vmatprep.mubr.f32.mxu0 %v2349
  %2925 = vmatmul.mubr.f32.gmra.mrb[0].mxu0 %v2348
  %v2926 = vpop.f32.mrb[0].mxu0
  %v2927 = vadd.f32 %v2543, %v2926
  %v2928 = vpop.f32.mrb[0].mxu0
  %v2929 = vadd.f32 %v2543, %v2928
  %2930 = vmatprep.mubr.f32.mxu0 %v2351
  %2931 = vmatmul.mubr.f32.gmra.mrb[0].mxu0 %v2350
  %v2932 = vpop.f32.mrb[0].mxu0
  %v2933 = vadd.f32 %v2548, %v2932
  %v2934 = vpop.f32.mrb[0].mxu0
  %v2935 = vadd.f32 %v2548, %v2934
  %2936 = vmatprep.mubr.f32.mxu0 %v2353
  %2937 = vmatmul.mubr.f32.gmra.mrb[0].mxu0 %v2352
  %v2938 = vpop.f32.mrb[0].mxu0
  %v2939 = vadd.f32 %v2553, %v2938
  %v2940 = vpop.f32.mrb[0].mxu0
  %v2941 = vadd.f32 %v2553, %v2940
  %2942 = vmatprep.mubr.f32.mxu0 %v2355
  %2943 = vmatmul.mubr.f32.gmra.mrb[0].mxu0 %v2354
  %v2944 = vpop.f32.mrb[0].mxu0
  %v2945 = vadd.f32 %v2558, %v2944
  %v2946 = vpop.f32.mrb[0].mxu0
  %v2947 = vadd.f32 %v2558, %v2946
  %2948 = vmatprep.mubr.f32.mxu0 %v2357
  %2949 = vmatmul.mubr.f32.gmra.mrb[0].mxu0 %v2356
  %v2950 = vpop.f32.mrb[0].mxu0
  %v2951 = vadd.f32 %v2563, %v2950
  %v2952 = vpop.f32.mrb[0].mxu0
  %v2953 = vadd.f32 %v2563, %v2952
  %2954 = vmatprep.mubr.f32.mxu0 %v2359
  %2955 = vmatmul.mubr.f32.gmra.mrb[0].mxu0 %v2358
  %v2956 = vpop.f32.mrb[0].mxu0
  %v2957 = vadd.f32 %v2568, %v2956
  %v2958 = vpop.f32.mrb[0].mxu0
  %v2959 = vadd.f32 %v2568, %v2958
  %2960 = vmatprep.mubr.f32.mxu0 %v2361
  %2961 = vmatmul.mubr.f32.gmra.mrb[0].mxu0 %v2360
  %v2962 = vpop.f32.mrb[0].mxu0
  %v2963 = vadd.f32 %v2573, %v2962
  %v2964 = vpop.f32.mrb[0].mxu0
  %v2965 = vadd.f32 %v2573, %v2964
  %2966 = vmatprep.mubr.f32.mxu0 %v2363
  %2967 = vmatmul.mubr.f32.gmra.mrb[0].mxu0 %v2362
  %v2968 = vpop.f32.mrb[0].mxu0
  %v2969 = vadd.f32 %v2578, %v2968
  %v2970 = vpop.f32.mrb[0].mxu0
  %v2971 = vadd.f32 %v2578, %v2970
  %2972 = vmatprep.mubr.f32.mxu0 %v2365
  %2973 = vmatmul.mubr.f32.gmra.mrb[0].mxu0 %v2364
  %v2974 = vpop.f32.mrb[0].mxu0
  %v2975 = vadd.f32 %v2583, %v2974
  %v2976 = vpop.f32.mrb[0].mxu0
  %v2977 = vadd.f32 %v2583, %v2976
  %2978 = vmatprep.mubr.f32.mxu0 %v2367
  %2979 = vmatmul.mubr.f32.gmra.mrb[0].mxu0 %v2366
  %v2980 = vpop.f32.mrb[0].mxu0
  %v2981 = vadd.f32 %v2588, %v2980
  %v2982 = vpop.f32.mrb[0].mxu0
  %v2983 = vadd.f32 %v2588, %v2982
  %2984 = vmatprep.mubr.f32.mxu0 %v2369
  %2985 = vmatmul.mubr.f32.gmra.mrb[0].mxu0 %v2368
  %v2986 = vpop.f32.mrb[0].mxu0
  %v2987 = vadd.f32 %v2593, %v2986
  %v2988 = vpop.f32.mrb[0].mxu0
  %v2989 = vadd.f32 %v2593, %v2988
  %2990 = vmatprep.mubr.f32.mxu0 %v2371
  %2991 = vmatmul.mubr.f32.gmra.mrb[0].mxu0 %v2370
  %v2992 = vpop.f32.mrb[0].mxu0
  %v2993 = vadd.f32 %v2598, %v2992
  %v2994 = vpop.f32.mrb[0].mxu0
  %v2995 = vadd.f32 %v2598, %v2994
  %2996 = vmatprep.mubr.f32.mxu0 %v2373
  %2997 = vmatmul.mubr.f32.gmra.mrb[0].mxu0 %v2372
  %v2998 = vpop.f32.mrb[0].mxu0
  %v2999 = vadd.f32 %v2603, %v2998
  %v3000 = vpop.f32.mrb[0].mxu0
  %v3001 = vadd.f32 %v2603, %v3000
  %3002 = vmatprep.mubr.f32.mxu0 %v2375
  %3003 = vmatmul.mubr.f32.gmra.mrb[0].mxu0 %v2374
  %v3004 = vpop.f32.mrb[0].mxu0
  %v3005 = vadd.f32 %v2608, %v3004
  %v3006 = vpop.f32.mrb[0].mxu0
  %v3007 = vadd.f32 %v2608, %v3006
  %3008 = vmatprep.mubr.f32.mxu0 %v2377
  %3009 = vmatmul.mubr.f32.gmra.mrb[0].mxu0 %v2376
  %v3010 = vpop.f32.mrb[0].mxu0
  %v3011 = vadd.f32 %v2613, %v3010
  %v3012 = vpop.f32.mrb[0].mxu0
  %v3013 = vadd.f32 %v2613, %v3012
  %3014 = vmatprep.mubr.f32.mxu0 %v2379
  %3015 = vmatmul.mubr.f32.gmra.mrb[0].mxu0 %v2378
  %v3016 = vpop.f32.mrb[0].mxu0
  %v3017 = vadd.f32 %v2618, %v3016
  %v3018 = vpop.f32.mrb[0].mxu0
  %v3019 = vadd.f32 %v2618, %v3018
  %3020 = vmatprep.mubr.f32.mxu0 %v2381
  %3021 = vmatmul.mubr.f32.gmra.mrb[0].mxu0 %v2380
  %v3022 = vpop.f32.mrb[0].mxu0
  %v3023 = vadd.f32 %v2623, %v3022
  %v3024 = vpop.f32.mrb[0].mxu0
  %v3025 = vadd.f32 %v2623, %v3024
  %3026 = vmatprep.mubr.f32.mxu0 %v2383
  %3027 = vmatmul.mubr.f32.gmra.mrb[0].mxu0 %v2382
  %v3028 = vpop.f32.mrb[0].mxu0
  %v3029 = vadd.f32 %v2628, %v3028
  %v3030 = vpop.f32.mrb[0].mxu0
  %v3031 = vadd.f32 %v2628, %v3030
  %3032 = vmatprep.mubr.f32.mxu0 %v2385
  %3033 = vmatmul.mubr.f32.gmra.mrb[0].mxu0 %v2384
  %v3034 = vpop.f32.mrb[0].mxu0
  %v3035 = vadd.f32 %v2633, %v3034
  %v3036 = vpop.f32.mrb[0].mxu0
  %v3037 = vadd.f32 %v2633, %v3036
  %3038 = vmatprep.mubr.f32.mxu0 %v2387
  %3039 = vmatmul.mubr.f32.gmra.mrb[0].mxu0 %v2386
  %v3040 = vpop.f32.mrb[0].mxu0
  %v3041 = vadd.f32 %v2638, %v3040
  %v3042 = vpop.f32.mrb[0].mxu0
  %v3043 = vadd.f32 %v2638, %v3042
  %3044 = vmatprep.mubr.f32.mxu0 %v2389
  %3045 = vmatmul.mubr.f32.gmra.mrb[0].mxu0 %v2388
  %v3046 = vpop.f32.mrb[0].mxu0
  %v3047 = vadd.f32 %v2643, %v3046
  %v3048 = vpop.f32.mrb[0].mxu0
  %v3049 = vadd.f32 %v2643, %v3048
  %3050 = vmatprep.mubr.f32.mxu0 %v2391
  %3051 = vmatmul.mubr.f32.gmra.mrb[0].mxu0 %v2390
  %v3052 = vpop.f32.mrb[0].mxu0
  %v3053 = vadd.f32 %v2648, %v3052
  %v3054 = vpop.f32.mrb[0].mxu0
  %v3055 = vadd.f32 %v2648, %v3054
  %3056 = vmatprep.mubr.f32.mxu0 %v2393
  %3057 = vmatmul.mubr.f32.gmra.mrb[0].mxu0 %v2392
  %v3058 = vpop.f32.mrb[0].mxu0
  %v3059 = vadd.f32 %v2653, %v3058
  %v3060 = vpop.f32.mrb[0].mxu0
  %v3061 = vadd.f32 %v2653, %v3060
  %3062 = vmatprep.mubr.f32.mxu0 %v2395
  %3063 = vmatmul.mubr.f32.gmra.mrb[0].mxu0 %v2394
  %v3064 = vpop.f32.mrb[0].mxu0
  %v3065 = vadd.f32 %v2658, %v3064
  %v3066 = vpop.f32.mrb[0].mxu0
  %v3067 = vadd.f32 %v2658, %v3066
  %3068 = vmatprep.mubr.f32.mxu0 %v2397
  %3069 = vmatmul.mubr.f32.gmra.mrb[0].mxu0 %v2396
  %v3070 = vpop.f32.mrb[0].mxu0
  %v3071 = vadd.f32 %v2663, %v3070
  %v3072 = vpop.f32.mrb[0].mxu0
  %v3073 = vadd.f32 %v2663, %v3072
  %3074 = vmatprep.mubr.f32.mxu0 %v2399
  %3075 = vmatmul.mubr.f32.gmra.mrb[0].mxu0 %v2398
  %v3076 = vpop.f32.mrb[0].mxu0
  %v3077 = vadd.f32 %v2668, %v3076
  %v3078 = vpop.f32.mrb[0].mxu0
  %v3079 = vadd.f32 %v2668, %v3078
  %3080 = vmatprep.mubr.f32.mxu0 %v2401
  %3081 = vmatmul.mubr.f32.gmra.mrb[0].mxu0 %v2400
  %v3082 = vpop.f32.mrb[0].mxu0
  %v3083 = vadd.f32 %v2673, %v3082
  %v3084 = vpop.f32.mrb[0].mxu0
  %v3085 = vadd.f32 %v2673, %v3084
  %3086 = vmatprep.mubr.f32.mxu0 %v2403
  %3087 = vmatmul.mubr.f32.gmra.mrb[0].mxu0 %v2402
  %v3088 = vpop.f32.mrb[0].mxu0
  %v3089 = vadd.f32 %v2678, %v3088
  %v3090 = vpop.f32.mrb[0].mxu0
  %v3091 = vadd.f32 %v2678, %v3090
  %3092 = vmatprep.mubr.f32.mxu0 %v2405
  %3093 = vmatmul.mubr.f32.gmra.mrb[0].mxu0 %v2404
  %v3094 = vpop.f32.mrb[0].mxu0
  %v3095 = vadd.f32 %v2683, %v3094
  %v3096 = vpop.f32.mrb[0].mxu0
  %v3097 = vadd.f32 %v2683, %v3096
  %3098 = vmatprep.mubr.f32.mxu0 %v2407
  %3099 = vmatmul.mubr.f32.gmra.mrb[0].mxu0 %v2406
  %v3100 = vpop.f32.mrb[0].mxu0
  %v3101 = vadd.f32 %v2688, %v3100
  %v3102 = vpop.f32.mrb[0].mxu0
  %v3103 = vadd.f32 %v2688, %v3102
  %3104 = vmatprep.mubr.f32.mxu0 %v2409
  %3105 = vmatmul.mubr.f32.gmra.mrb[0].mxu0 %v2408
  %v3106 = vpop.f32.mrb[0].mxu0
  %v3107 = vadd.f32 %v2693, %v3106
  %v3108 = vpop.f32.mrb[0].mxu0
  %v3109 = vadd.f32 %v2693, %v3108
  %3110 = vmatprep.mubr.f32.mxu0 %v2411
  %3111 = vmatmul.mubr.f32.gmra.mrb[0].mxu0 %v2410
  %v3112 = vpop.f32.mrb[0].mxu0
  %v3113 = vadd.f32 %v2698, %v3112
  %v3114 = vpop.f32.mrb[0].mxu0
  %v3115 = vadd.f32 %v2698, %v3114
  %3116 = vmatprep.mubr.f32.mxu0 %v2413
  %3117 = vmatmul.mubr.f32.gmra.mrb[0].mxu0 %v2412
  %v3118 = vpop.f32.mrb[0].mxu0
  %v3119 = vadd.f32 %v2703, %v3118
  %v3120 = vpop.f32.mrb[0].mxu0
  %v3121 = vadd.f32 %v2703, %v3120
  %3122 = vmatprep.mubr.f32.mxu0 %v2415
  %3123 = vmatmul.mubr.f32.gmra.mrb[0].mxu0 %v2414
  %v3124 = vpop.f32.mrb[0].mxu0
  %v3125 = vadd.f32 %v2708, %v3124
  %v3126 = vpop.f32.mrb[0].mxu0
  %v3127 = vadd.f32 %v2708, %v3126
  %3128 = vmatprep.mubr.f32.mxu0 %v2417
  %3129 = vmatmul.mubr.f32.gmra.mrb[0].mxu0 %v2416
  %v3130 = vpop.f32.mrb[0].mxu0
  %v3131 = vadd.f32 %v2713, %v3130
  %v3132 = vpop.f32.mrb[0].mxu0
  %v3133 = vadd.f32 %v2713, %v3132
  %3134 = vmatprep.mubr.f32.mxu0 %v2419
  %3135 = vmatmul.mubr.f32.gmra.mrb[0].mxu0 %v2418
  %v3136 = vpop.f32.mrb[0].mxu0
  %v3137 = vadd.f32 %v2718, %v3136
  %v3138 = vpop.f32.mrb[0].mxu0
  %v3139 = vadd.f32 %v2718, %v3138
  %3140 = vmatprep.mubr.f32.mxu0 %v2421
  %3141 = vmatmul.mubr.f32.gmra.mrb[0].mxu0 %v2420
  %v3142 = vpop.f32.mrb[0].mxu0
  %v3143 = vadd.f32 %v2723, %v3142
  %v3144 = vpop.f32.mrb[0].mxu0
  %v3145 = vadd.f32 %v2723, %v3144
  %3146 = vmatprep.mubr.f32.mxu0 %v2423
  %3147 = vmatmul.mubr.f32.gmra.mrb[0].mxu0 %v2422
  %v3148 = vpop.f32.mrb[0].mxu0
  %v3149 = vadd.f32 %v2728, %v3148
  %v3150 = vpop.f32.mrb[0].mxu0
  %v3151 = vadd.f32 %v2728, %v3150
  %3152 = vmatprep.mubr.f32.mxu0 %v2425
  %3153 = vmatmul.mubr.f32.gmra.mrb[0].mxu0 %v2424
  %v3154 = vpop.f32.mrb[0].mxu0
  %v3155 = vadd.f32 %v2733, %v3154
  %v3156 = vpop.f32.mrb[0].mxu0
  %v3157 = vadd.f32 %v2733, %v3156
  %3158 = vmatprep.mubr.f32.mxu0 %v2427
  %3159 = vmatmul.mubr.f32.gmra.mrb[0].mxu0 %v2426
  %v3160 = vpop.f32.mrb[0].mxu0
  %v3161 = vadd.f32 %v2738, %v3160
  %v3162 = vpop.f32.mrb[0].mxu0
  %v3163 = vadd.f32 %v2738, %v3162
  %3164 = vmatprep.mubr.f32.mxu0 %v2429
  %3165 = vmatmul.mubr.f32.gmra.mrb[0].mxu0 %v2428
  %v3166 = vpop.f32.mrb[0].mxu0
  %v3167 = vadd.f32 %v2743, %v3166
  %v3168 = vpop.f32.mrb[0].mxu0
  %v3169 = vadd.f32 %v2743, %v3168
  %3170 = vmatprep.mubr.f32.mxu0 %v2431
  %3171 = vmatmul.mubr.f32.gmra.mrb[0].mxu0 %v2430
  %v3172 = vpop.f32.mrb[0].mxu0
  %v3173 = vadd.f32 %v2748, %v3172
  %v3174 = vpop.f32.mrb[0].mxu0
  %v3175 = vadd.f32 %v2748, %v3174
  %3176 = vmatprep.mubr.f32.mxu0 %v2433
  %3177 = vmatmul.mubr.f32.gmra.mrb[0].mxu0 %v2432
  %v3178 = vpop.f32.mrb[0].mxu0
  %v3179 = vadd.f32 %v2753, %v3178
  %v3180 = vpop.f32.mrb[0].mxu0
  %v3181 = vadd.f32 %v2753, %v3180
  %3182 = vmatprep.mubr.f32.mxu0 %v2435
  %3183 = vmatmul.mubr.f32.gmra.mrb[0].mxu0 %v2434
  %v3184 = vpop.f32.mrb[0].mxu0
  %v3185 = vadd.f32 %v2758, %v3184
  %v3186 = vpop.f32.mrb[0].mxu0
  %v3187 = vadd.f32 %v2758, %v3186
  %3188 = vmatprep.mubr.f32.mxu0 %v2437
  %3189 = vmatmul.mubr.f32.gmra.mrb[0].mxu0 %v2436
  %v3190 = vpop.f32.mrb[0].mxu0
  %v3191 = vadd.f32 %v2763, %v3190
  %v3192 = vpop.f32.mrb[0].mxu0
  %v3193 = vadd.f32 %v2763, %v3192
  %3194 = vmatprep.mubr.f32.mxu0 %v2439
  %3195 = vmatmul.mubr.f32.gmra.mrb[0].mxu0 %v2438
  %v3196 = vpop.f32.mrb[0].mxu0
  %v3197 = vadd.f32 %v2768, %v3196
  %v3198 = vpop.f32.mrb[0].mxu0
  %v3199 = vadd.f32 %v2768, %v3198
  %3200 = vmatprep.mubr.f32.mxu0 %v2441
  %3201 = vmatmul.mubr.f32.gmra.mrb[0].mxu0 %v2440
  %v3202 = vpop.f32.mrb[0].mxu0
  %v3203 = vadd.f32 %v2773, %v3202
  %v3204 = vpop.f32.mrb[0].mxu0
  %v3205 = vadd.f32 %v2773, %v3204
  %3206 = vmatprep.mubr.f32.mxu0 %v2443
  %3207 = vmatmul.mubr.f32.gmra.mrb[0].mxu0 %v2442
  %v3208 = vpop.f32.mrb[0].mxu0
  %v3209 = vadd.f32 %v2778, %v3208
  %v3210 = vpop.f32.mrb[0].mxu0
  %v3211 = vadd.f32 %v2778, %v3210
  %3212 = vmatprep.mubr.f32.mxu0 %v2445
  %3213 = vmatmul.mubr.f32.gmra.mrb[0].mxu0 %v2444
  %v3214 = vpop.f32.mrb[0].mxu0
  %v3215 = vadd.f32 %v2783, %v3214
  %v3216 = vpop.f32.mrb[0].mxu0
  %v3217 = vadd.f32 %v2783, %v3216
  %3218 = vmatprep.mubr.f32.mxu0 %v2447
  %3219 = vmatmul.mubr.f32.gmra.mrb[0].mxu0 %v2446
  %v3220 = vpop.f32.mrb[0].mxu0
  %v3221 = vadd.f32 %v2788, %v3220
  %v3222 = vpop.f32.mrb[0].mxu0
  %v3223 = vadd.f32 %v2788, %v3222
  %3224 = vmatprep.mubr.f32.mxu0 %v2449
  %3225 = vmatmul.mubr.f32.gmra.mrb[0].mxu0 %v2448
  %v3226 = vpop.f32.mrb[0].mxu0
  %v3227 = vadd.f32 %v2793, %v3226
  %v3228 = vpop.f32.mrb[0].mxu0
  %v3229 = vadd.f32 %v2793, %v3228
  %3230 = vmatprep.mubr.f32.mxu0 %v2451
  %3231 = vmatmul.mubr.f32.gmra.mrb[0].mxu0 %v2450
  %v3232 = vpop.f32.mrb[0].mxu0
  %v3233 = vadd.f32 %v2798, %v3232
  %v3234 = vpop.f32.mrb[0].mxu0
  %v3235 = vadd.f32 %v2798, %v3234
  %3236 = vmatprep.mubr.f32.mxu0 %v2453
  %3237 = vmatmul.mubr.f32.gmra.mrb[0].mxu0 %v2452
  %v3238 = vpop.f32.mrb[0].mxu0
  %v3239 = vadd.f32 %v2803, %v3238
  %v3240 = vpop.f32.mrb[0].mxu0
  %v3241 = vadd.f32 %v2803, %v3240
  %3242 = vmatprep.mubr.f32.mxu0 %v2455
  %3243 = vmatmul.mubr.f32.gmra.mrb[0].mxu0 %v2454
  %v3244 = vpop.f32.mrb[0].mxu0
  %v3245 = vadd.f32 %v2808, %v3244
  %v3246 = vpop.f32.mrb[0].mxu0
  %v3247 = vadd.f32 %v2808, %v3246
  %3248 = vmatprep.mubr.f32.mxu0 %v2457
  %3249 = vmatmul.mubr.f32.gmra.mrb[0].mxu0 %v2456
  %v3250 = vpop.f32.mrb[0].mxu0
  %v3251 = vadd.f32 %v2813, %v3250
  %v3252 = vpop.f32.mrb[0].mxu0
  %v3253 = vadd.f32 %v2813, %v3252
  %3254 = vmatprep.mubr.f32.mxu0 %v2459
  %3255 = vmatmul.mubr.f32.gmra.mrb[0].mxu0 %v2458
  %v3256 = vpop.f32.mrb[0].mxu0
  %v3257 = vadd.f32 %v2818, %v3256
  %v3258 = vpop.f32.mrb[0].mxu0
  %v3259 = vadd.f32 %v2818, %v3258
  %3260 = vmatprep.mubr.f32.mxu0 %v2461
  %3261 = vmatmul.mubr.f32.gmra.mrb[0].mxu0 %v2460
  %v3262 = vpop.f32.mrb[0].mxu0
  %v3263 = vadd.f32 %v2823, %v3262
  %v3264 = vpop.f32.mrb[0].mxu0
  %v3265 = vadd.f32 %v2823, %v3264
  %3266 = vmatprep.mubr.f32.mxu0 %v2463
  %3267 = vmatmul.mubr.f32.gmra.mrb[0].mxu0 %v2462
  %v3268 = vpop.f32.mrb[0].mxu0
  %v3269 = vadd.f32 %v2828, %v3268
  %v3270 = vpop.f32.mrb[0].mxu0
  %v3271 = vadd.f32 %v2828, %v3270
  %3272 = vmatprep.mubr.f32.mxu0 %v2465
  %3273 = vmatmul.mubr.f32.gmra.mrb[0].mxu0 %v2464
  %v3274 = vpop.f32.mrb[0].mxu0
  %v3275 = vadd.f32 %v2833, %v3274
  %v3276 = vpop.f32.mrb[0].mxu0
  %v3277 = vadd.f32 %v2833, %v3276
  %3278 = vmatprep.mubr.f32.mxu0 %v2467
  %3279 = vmatmul.mubr.f32.gmra.mrb[0].mxu0 %v2466
  %v3280 = vpop.f32.mrb[0].mxu0
  %v3281 = vadd.f32 %v2838, %v3280
  %v3282 = vpop.f32.mrb[0].mxu0
  %v3283 = vadd.f32 %v2838, %v3282
  %3284 = vmatprep.mubr.f32.mxu0 %v2469
  %3285 = vmatmul.mubr.f32.gmra.mrb[0].mxu0 %v2468
  %v3286 = vpop.f32.mrb[0].mxu0
  %v3287 = vadd.f32 %v2843, %v3286
  %v3288 = vpop.f32.mrb[0].mxu0
  %v3289 = vadd.f32 %v2843, %v3288
  %3290 = vmatprep.mubr.f32.mxu0 %v2471
  %3291 = vmatmul.mubr.f32.gmra.mrb[0].mxu0 %v2470
  %v3292 = vpop.f32.mrb[0].mxu0
  %v3293 = vadd.f32 %v2848, %v3292
  %v3294 = vpop.f32.mrb[0].mxu0
  %v3295 = vadd.f32 %v2848, %v3294
  %3296 = vmatprep.mubr.f32.mxu0 %v2473
  %3297 = vmatmul.mubr.f32.gmra.mrb[0].mxu0 %v2472
  %v3298 = vpop.f32.mrb[0].mxu0
  %v3299 = vadd.f32 %v2853, %v3298
  %v3300 = vpop.f32.mrb[0].mxu0
  %v3301 = vadd.f32 %v2853, %v3300
  %3302 = vmatprep.mubr.f32.mxu0 %v2475
  %3303 = vmatmul.mubr.f32.gmra.mrb[0].mxu0 %v2474
  %v3304 = vpop.f32.mrb[0].mxu0
  %v3305 = vadd.f32 %v2858, %v3304
  %v3306 = vpop.f32.mrb[0].mxu0
  %v3307 = vadd.f32 %v2858, %v3306
  %3308 = vdwg.mxu0
  %v3309 = vmax.f32 %v2927, 0.0
  %v3310 = vmax.f32 %v2929, 0.0
  %v3311 = vmax.f32 %v2933, 0.0
  %v3312 = vmax.f32 %v2935, 0.0
  %v3313 = vmax.f32 %v2939, 0.0
  %v3314 = vmax.f32 %v2941, 0.0
  %v3315 = vmax.f32 %v2945, 0.0
  %v3316 = vmax.f32 %v2947, 0.0
  %v3317 = vmax.f32 %v2951, 0.0
  %v3318 = vmax.f32 %v2953, 0.0
  %v3319 = vmax.f32 %v2957, 0.0
  %v3320 = vmax.f32 %v2959, 0.0
  %v3321 = vmax.f32 %v2963, 0.0
  %v3322 = vmax.f32 %v2965, 0.0
  %v3323 = vmax.f32 %v2969, 0.0
  %v3324 = vmax.f32 %v2971, 0.0
  %v3325 = vmax.f32 %v2975, 0.0
  %v3326 = vmax.f32 %v2977, 0.0
  %v3327 = vmax.f32 %v2981, 0.0
  %v3328 = vmax.f32 %v2983, 0.0
  %v3329 = vmax.f32 %v2987, 0.0
  %v3330 = vmax.f32 %v2989, 0.0
  %v3331 = vmax.f32 %v2993, 0.0
  %v3332 = vmax.f32 %v2995, 0.0
  %v3333 = vmax.f32 %v2999, 0.0
  %v3334 = vmax.f32 %v3001, 0.0
  %v3335 = vmax.f32 %v3005, 0.0
  %v3336 = vmax.f32 %v3007, 0.0
  %v3337 = vmax.f32 %v3011, 0.0
  %v3338 = vmax.f32 %v3013, 0.0
  %v3339 = vmax.f32 %v3017, 0.0
  %v3340 = vmax.f32 %v3019, 0.0
  %v3341 = vmax.f32 %v3023, 0.0
  %v3342 = vmax.f32 %v3025, 0.0
  %v3343 = vmax.f32 %v3029, 0.0
  %v3344 = vmax.f32 %v3031, 0.0
  %v3345 = vmax.f32 %v3035, 0.0
  %v3346 = vmax.f32 %v3037, 0.0
  %v3347 = vmax.f32 %v3041, 0.0
  %v3348 = vmax.f32 %v3043, 0.0
  %v3349 = vmax.f32 %v3047, 0.0
  %v3350 = vmax.f32 %v3049, 0.0
  %v3351 = vmax.f32 %v3053, 0.0
  %v3352 = vmax.f32 %v3055, 0.0
  %v3353 = vmax.f32 %v3059, 0.0
  %v3354 = vmax.f32 %v3061, 0.0
  %v3355 = vmax.f32 %v3065, 0.0
  %v3356 = vmax.f32 %v3067, 0.0
  %v3357 = vmax.f32 %v3071, 0.0
  %v3358 = vmax.f32 %v3073, 0.0
  %v3359 = vmax.f32 %v3077, 0.0
  %v3360 = vmax.f32 %v3079, 0.0
  %v3361 = vmax.f32 %v3083, 0.0
  %v3362 = vmax.f32 %v3085, 0.0
  %v3363 = vmax.f32 %v3089, 0.0
  %v3364 = vmax.f32 %v3091, 0.0
  %v3365 = vmax.f32 %v3095, 0.0
  %v3366 = vmax.f32 %v3097, 0.0
  %v3367 = vmax.f32 %v3101, 0.0
  %v3368 = vmax.f32 %v3103, 0.0
  %v3369 = vmax.f32 %v3107, 0.0
  %v3370 = vmax.f32 %v3109, 0.0
  %v3371 = vmax.f32 %v3113, 0.0
  %v3372 = vmax.f32 %v3115, 0.0
  %v3373 = vmax.f32 %v3119, 0.0
  %v3374 = vmax.f32 %v3121, 0.0
  %v3375 = vmax.f32 %v3125, 0.0
  %v3376 = vmax.f32 %v3127, 0.0
  %v3377 = vmax.f32 %v3131, 0.0
  %v3378 = vmax.f32 %v3133, 0.0
  %v3379 = vmax.f32 %v3137, 0.0
  %v3380 = vmax.f32 %v3139, 0.0
  %v3381 = vmax.f32 %v3143, 0.0
  %v3382 = vmax.f32 %v3145, 0.0
  %v3383 = vmax.f32 %v3149, 0.0
  %v3384 = vmax.f32 %v3151, 0.0
  %v3385 = vmax.f32 %v3155, 0.0
  %v3386 = vmax.f32 %v3157, 0.0
  %v3387 = vmax.f32 %v3161, 0.0
  %v3388 = vmax.f32 %v3163, 0.0
  %v3389 = vmax.f32 %v3167, 0.0
  %v3390 = vmax.f32 %v3169, 0.0
  %v3391 = vmax.f32 %v3173, 0.0
  %v3392 = vmax.f32 %v3175, 0.0
  %v3393 = vmax.f32 %v3179, 0.0
  %v3394 = vmax.f32 %v3181, 0.0
  %v3395 = vmax.f32 %v3185, 0.0
  %v3396 = vmax.f32 %v3187, 0.0
  %v3397 = vmax.f32 %v3191, 0.0
  %v3398 = vmax.f32 %v3193, 0.0
  %v3399 = vmax.f32 %v3197, 0.0
  %v3400 = vmax.f32 %v3199, 0.0
  %v3401 = vmax.f32 %v3203, 0.0
  %v3402 = vmax.f32 %v3205, 0.0
  %v3403 = vmax.f32 %v3209, 0.0
  %v3404 = vmax.f32 %v3211, 0.0
  %v3405 = vmax.f32 %v3215, 0.0
  %v3406 = vmax.f32 %v3217, 0.0
  %v3407 = vmax.f32 %v3221, 0.0
  %v3408 = vmax.f32 %v3223, 0.0
  %v3409 = vmax.f32 %v3227, 0.0
  %v3410 = vmax.f32 %v3229, 0.0
  %v3411 = vmax.f32 %v3233, 0.0
  %v3412 = vmax.f32 %v3235, 0.0
  %v3413 = vmax.f32 %v3239, 0.0
  %v3414 = vmax.f32 %v3241, 0.0
  %v3415 = vmax.f32 %v3245, 0.0
  %v3416 = vmax.f32 %v3247, 0.0
  %v3417 = vmax.f32 %v3251, 0.0
  %v3418 = vmax.f32 %v3253, 0.0
  %v3419 = vmax.f32 %v3257, 0.0
  %v3420 = vmax.f32 %v3259, 0.0
  %v3421 = vmax.f32 %v3263, 0.0
  %v3422 = vmax.f32 %v3265, 0.0
  %v3423 = vmax.f32 %v3269, 0.0
  %v3424 = vmax.f32 %v3271, 0.0
  %v3425 = vmax.f32 %v3275, 0.0
  %v3426 = vmax.f32 %v3277, 0.0
  %v3427 = vmax.f32 %v3281, 0.0
  %v3428 = vmax.f32 %v3283, 0.0
  %v3429 = vmax.f32 %v3287, 0.0
  %v3430 = vmax.f32 %v3289, 0.0
  %v3431 = vmax.f32 %v3293, 0.0
  %v3432 = vmax.f32 %v3295, 0.0
  %v3433 = vmax.f32 %v3299, 0.0
  %v3434 = vmax.f32 %v3301, 0.0
  %v3435 = vmax.f32 %v3305, 0.0
  %v3436 = vmax.f32 %v3307, 0.0
  %v3437 = vld [vmem:[%s10] sm:$0xff]
  %v3438 = vld [vmem:[%s10 + $0x8] sm:$0xff]
  %v3439 = vld [vmem:[%s10 + $0x10] sm:$0xff]
  %v3440 = vld [vmem:[%s10 + $0x18] sm:$0xff]
  %v3441 = vld [vmem:[%s10 + $0x20] sm:$0xff]
  %v3442 = vld [vmem:[%s10 + $0x28] sm:$0xff]
  %v3443 = vld [vmem:[%s10 + $0x30] sm:$0xff]
  %v3444 = vld [vmem:[%s10 + $0x38] sm:$0xff]
  %v3445 = vld [vmem:[%s10 + $0x40] sm:$0xff]
  %v3446 = vld [vmem:[%s10 + $0x48] sm:$0xff]
  %v3447 = vld [vmem:[%s10 + $0x50] sm:$0xff]
  %v3448 = vld [vmem:[%s10 + $0x58] sm:$0xff]
  %v3449 = vld [vmem:[%s10 + $0x60] sm:$0xff]
  %v3450 = vld [vmem:[%s10 + $0x68] sm:$0xff]
  %v3451 = vld [vmem:[%s10 + $0x70] sm:$0xff]
  %v3452 = vld [vmem:[%s10 + $0x78] sm:$0xff]
  %v3453 = vld [vmem:[%s10 + $0x80] sm:$0xff]
  %v3454 = vld [vmem:[%s10 + $0x88] sm:$0xff]
  %v3455 = vld [vmem:[%s10 + $0x90] sm:$0xff]
  %v3456 = vld [vmem:[%s10 + $0x98] sm:$0xff]
  %v3457 = vld [vmem:[%s10 + $0xa0] sm:$0xff]
  %v3458 = vld [vmem:[%s10 + $0xa8] sm:$0xff]
  %v3459 = vld [vmem:[%s10 + $0xb0] sm:$0xff]
  %v3460 = vld [vmem:[%s10 + $0xb8] sm:$0xff]
  %v3461 = vld [vmem:[%s10 + $0xc0] sm:$0xff]
  %v3462 = vld [vmem:[%s10 + $0xc8] sm:$0xff]
  %v3463 = vld [vmem:[%s10 + $0xd0] sm:$0xff]
  %v3464 = vld [vmem:[%s10 + $0xd8] sm:$0xff]
  %v3465 = vld [vmem:[%s10 + $0xe0] sm:$0xff]
  %v3466 = vld [vmem:[%s10 + $0xe8] sm:$0xff]
  %v3467 = vld [vmem:[%s10 + $0xf0] sm:$0xff]
  %v3468 = vld [vmem:[%s10 + $0xf8] sm:$0xff]
  %v3469 = vld [vmem:[%s10 + $0x100] sm:$0xff]
  %v3470 = vld [vmem:[%s10 + $0x108] sm:$0xff]
  %v3471 = vld [vmem:[%s10 + $0x110] sm:$0xff]
  %v3472 = vld [vmem:[%s10 + $0x118] sm:$0xff]
  %v3473 = vld [vmem:[%s10 + $0x120] sm:$0xff]
  %v3474 = vld [vmem:[%s10 + $0x128] sm:$0xff]
  %v3475 = vld [vmem:[%s10 + $0x130] sm:$0xff]
  %v3476 = vld [vmem:[%s10 + $0x138] sm:$0xff]
  %v3477 = vld [vmem:[%s10 + $0x140] sm:$0xff]
  %v3478 = vld [vmem:[%s10 + $0x148] sm:$0xff]
  %v3479 = vld [vmem:[%s10 + $0x150] sm:$0xff]
  %v3480 = vld [vmem:[%s10 + $0x158] sm:$0xff]
  %v3481 = vld [vmem:[%s10 + $0x160] sm:$0xff]
  %v3482 = vld [vmem:[%s10 + $0x168] sm:$0xff]
  %v3483 = vld [vmem:[%s10 + $0x170] sm:$0xff]
  %v3484 = vld [vmem:[%s10 + $0x178] sm:$0xff]
  %v3485 = vld [vmem:[%s10 + $0x180] sm:$0xff]
  %v3486 = vld [vmem:[%s10 + $0x188] sm:$0xff]
  %v3487 = vld [vmem:[%s10 + $0x190] sm:$0xff]
  %v3488 = vld [vmem:[%s10 + $0x198] sm:$0xff]
  %v3489 = vld [vmem:[%s10 + $0x1a0] sm:$0xff]
  %v3490 = vld [vmem:[%s10 + $0x1a8] sm:$0xff]
  %v3491 = vld [vmem:[%s10 + $0x1b0] sm:$0xff]
  %v3492 = vld [vmem:[%s10 + $0x1b8] sm:$0xff]
  %v3493 = vld [vmem:[%s10 + $0x1c0] sm:$0xff]
  %v3494 = vld [vmem:[%s10 + $0x1c8] sm:$0xff]
  %v3495 = vld [vmem:[%s10 + $0x1d0] sm:$0xff]
  %v3496 = vld [vmem:[%s10 + $0x1d8] sm:$0xff]
  %v3497 = vld [vmem:[%s10 + $0x1e0] sm:$0xff]
  %v3498 = vld [vmem:[%s10 + $0x1e8] sm:$0xff]
  %v3499 = vld [vmem:[%s10 + $0x1f0] sm:$0xff]
  %v3500 = vld [vmem:[%s10 + $0x1f8] sm:$0xff]
  %v3501 = vld [vmem:[%s10 + $0x200] sm:$0xff]
  %v3502 = vld [vmem:[%s10 + $0x208] sm:$0xff]
  %v3503 = vld [vmem:[%s10 + $0x210] sm:$0xff]
  %v3504 = vld [vmem:[%s10 + $0x218] sm:$0xff]
  %v3505 = vld [vmem:[%s10 + $0x220] sm:$0xff]
  %v3506 = vld [vmem:[%s10 + $0x228] sm:$0xff]
  %v3507 = vld [vmem:[%s10 + $0x230] sm:$0xff]
  %v3508 = vld [vmem:[%s10 + $0x238] sm:$0xff]
  %v3509 = vld [vmem:[%s10 + $0x240] sm:$0xff]
  %v3510 = vld [vmem:[%s10 + $0x248] sm:$0xff]
  %v3511 = vld [vmem:[%s10 + $0x250] sm:$0xff]
  %v3512 = vld [vmem:[%s10 + $0x258] sm:$0xff]
  %v3513 = vld [vmem:[%s10 + $0x260] sm:$0xff]
  %v3514 = vld [vmem:[%s10 + $0x268] sm:$0xff]
  %v3515 = vld [vmem:[%s10 + $0x270] sm:$0xff]
  %v3516 = vld [vmem:[%s10 + $0x278] sm:$0xff]
  %v3517 = vld [vmem:[%s10 + $0x280] sm:$0xff]
  %v3518 = vld [vmem:[%s10 + $0x288] sm:$0xff]
  %v3519 = vld [vmem:[%s10 + $0x290] sm:$0xff]
  %v3520 = vld [vmem:[%s10 + $0x298] sm:$0xff]
  %v3521 = vld [vmem:[%s10 + $0x2a0] sm:$0xff]
  %v3522 = vld [vmem:[%s10 + $0x2a8] sm:$0xff]
  %v3523 = vld [vmem:[%s10 + $0x2b0] sm:$0xff]
  %v3524 = vld [vmem:[%s10 + $0x2b8] sm:$0xff]
  %v3525 = vld [vmem:[%s10 + $0x2c0] sm:$0xff]
  %v3526 = vld [vmem:[%s10 + $0x2c8] sm:$0xff]
  %v3527 = vld [vmem:[%s10 + $0x2d0] sm:$0xff]
  %v3528 = vld [vmem:[%s10 + $0x2d8] sm:$0xff]
  %v3529 = vld [vmem:[%s10 + $0x2e0] sm:$0xff]
  %v3530 = vld [vmem:[%s10 + $0x2e8] sm:$0xff]
  %v3531 = vld [vmem:[%s10 + $0x2f0] sm:$0xff]
  %v3532 = vld [vmem:[%s10 + $0x2f8] sm:$0xff]
  %v3533 = vld [vmem:[%s10 + $0x300] sm:$0xff]
  %v3534 = vld [vmem:[%s10 + $0x308] sm:$0xff]
  %v3535 = vld [vmem:[%s10 + $0x310] sm:$0xff]
  %v3536 = vld [vmem:[%s10 + $0x318] sm:$0xff]
  %v3537 = vld [vmem:[%s10 + $0x320] sm:$0xff]
  %v3538 = vld [vmem:[%s10 + $0x328] sm:$0xff]
  %v3539 = vld [vmem:[%s10 + $0x330] sm:$0xff]
  %v3540 = vld [vmem:[%s10 + $0x338] sm:$0xff]
  %v3541 = vld [vmem:[%s10 + $0x340] sm:$0xff]
  %v3542 = vld [vmem:[%s10 + $0x348] sm:$0xff]
  %v3543 = vld [vmem:[%s10 + $0x350] sm:$0xff]
  %v3544 = vld [vmem:[%s10 + $0x358] sm:$0xff]
  %v3545 = vld [vmem:[%s10 + $0x360] sm:$0xff]
  %v3546 = vld [vmem:[%s10 + $0x368] sm:$0xff]
  %v3547 = vld [vmem:[%s10 + $0x370] sm:$0xff]
  %v3548 = vld [vmem:[%s10 + $0x378] sm:$0xff]
  %v3549 = vld [vmem:[%s10 + $0x380] sm:$0xff]
  %v3550 = vld [vmem:[%s10 + $0x388] sm:$0xff]
  %v3551 = vld [vmem:[%s10 + $0x390] sm:$0xff]
  %v3552 = vld [vmem:[%s10 + $0x398] sm:$0xff]
  %v3553 = vld [vmem:[%s10 + $0x3a0] sm:$0xff]
  %v3554 = vld [vmem:[%s10 + $0x3a8] sm:$0xff]
  %v3555 = vld [vmem:[%s10 + $0x3b0] sm:$0xff]
  %v3556 = vld [vmem:[%s10 + $0x3b8] sm:$0xff]
  %v3557 = vld [vmem:[%s10 + $0x3c0] sm:$0xff]
  %v3558 = vld [vmem:[%s10 + $0x3c8] sm:$0xff]
  %v3559 = vld [vmem:[%s10 + $0x3d0] sm:$0xff]
  %v3560 = vld [vmem:[%s10 + $0x3d8] sm:$0xff]
  %v3561 = vld [vmem:[%s10 + $0x3e0] sm:$0xff]
  %v3562 = vld [vmem:[%s10 + $0x3e8] sm:$0xff]
  %v3563 = vld [vmem:[%s10 + $0x3f0] sm:$0xff]
  %v3564 = vld [vmem:[%s10 + $0x3f8] sm:$0xff]
  %v3565 = vld [vmem:[%s11] sm:$0xff]
  %v3566 = vld [vmem:[%s11 + $0x8] sm:$0xff]
  %v3567 = vld [vmem:[%s11 + $0x10] sm:$0xff]
  %v3568 = vld [vmem:[%s11 + $0x18] sm:$0xff]
  %v3569 = vld [vmem:[%s11 + $0x20] sm:$0xff]
  %v3570 = vld [vmem:[%s11 + $0x28] sm:$0xff]
  %v3571 = vld [vmem:[%s11 + $0x30] sm:$0xff]
  %v3572 = vld [vmem:[%s11 + $0x38] sm:$0xff]
  %v3573 = vld [vmem:[%s11 + $0x40] sm:$0xff]
  %v3574 = vld [vmem:[%s11 + $0x48] sm:$0xff]
  %v3575 = vld [vmem:[%s11 + $0x50] sm:$0xff]
  %v3576 = vld [vmem:[%s11 + $0x58] sm:$0xff]
  %v3577 = vld [vmem:[%s11 + $0x60] sm:$0xff]
  %v3578 = vld [vmem:[%s11 + $0x68] sm:$0xff]
  %v3579 = vld [vmem:[%s11 + $0x70] sm:$0xff]
  %v3580 = vld [vmem:[%s11 + $0x78] sm:$0xff]
  %v3581 = vld [vmem:[%s11 + $0x80] sm:$0xff]
  %v3582 = vld [vmem:[%s11 + $0x88] sm:$0xff]
  %v3583 = vld [vmem:[%s11 + $0x90] sm:$0xff]
  %v3584 = vld [vmem:[%s11 + $0x98] sm:$0xff]
  %v3585 = vld [vmem:[%s11 + $0xa0] sm:$0xff]
  %v3586 = vld [vmem:[%s11 + $0xa8] sm:$0xff]
  %v3587 = vld [vmem:[%s11 + $0xb0] sm:$0xff]
  %v3588 = vld [vmem:[%s11 + $0xb8] sm:$0xff]
  %v3589 = vld [vmem:[%s11 + $0xc0] sm:$0xff]
  %v3590 = vld [vmem:[%s11 + $0xc8] sm:$0xff]
  %v3591 = vld [vmem:[%s11 + $0xd0] sm:$0xff]
  %v3592 = vld [vmem:[%s11 + $0xd8] sm:$0xff]
  %v3593 = vld [vmem:[%s11 + $0xe0] sm:$0xff]
  %v3594 = vld [vmem:[%s11 + $0xe8] sm:$0xff]
  %v3595 = vld [vmem:[%s11 + $0xf0] sm:$0xff]
  %v3596 = vld [vmem:[%s11 + $0xf8] sm:$0xff]
  %3598 = vset.pattern.permute.xlu0 0
  %3599 = vperm.xlu0 %3598, %v3565
  %v3600 = vpop.permute.xlu0 %3599
  %3603 = vset.pattern.permute.xlu0 0
  %3604 = vperm.xlu0 %3603, %v3566
  %v3605 = vpop.permute.xlu0 %3604
  %3608 = vset.pattern.permute.xlu0 0
  %3609 = vperm.xlu0 %3608, %v3567
  %v3610 = vpop.permute.xlu0 %3609
  %3613 = vset.pattern.permute.xlu0 0
  %3614 = vperm.xlu0 %3613, %v3568
  %v3615 = vpop.permute.xlu0 %3614
  %3618 = vset.pattern.permute.xlu0 0
  %3619 = vperm.xlu0 %3618, %v3569
  %v3620 = vpop.permute.xlu0 %3619
  %3623 = vset.pattern.permute.xlu0 0
  %3624 = vperm.xlu0 %3623, %v3570
  %v3625 = vpop.permute.xlu0 %3624
  %3628 = vset.pattern.permute.xlu0 0
  %3629 = vperm.xlu0 %3628, %v3571
  %v3630 = vpop.permute.xlu0 %3629
  %3633 = vset.pattern.permute.xlu0 0
  %3634 = vperm.xlu0 %3633, %v3572
  %v3635 = vpop.permute.xlu0 %3634
  %3638 = vset.pattern.permute.xlu0 0
  %3639 = vperm.xlu0 %3638, %v3573
  %v3640 = vpop.permute.xlu0 %3639
  %3643 = vset.pattern.permute.xlu0 0
  %3644 = vperm.xlu0 %3643, %v3574
  %v3645 = vpop.permute.xlu0 %3644
  %3648 = vset.pattern.permute.xlu0 0
  %3649 = vperm.xlu0 %3648, %v3575
  %v3650 = vpop.permute.xlu0 %3649
  %3653 = vset.pattern.permute.xlu0 0
  %3654 = vperm.xlu0 %3653, %v3576
  %v3655 = vpop.permute.xlu0 %3654
  %3658 = vset.pattern.permute.xlu0 0
  %3659 = vperm.xlu0 %3658, %v3577
  %v3660 = vpop.permute.xlu0 %3659
  %3663 = vset.pattern.permute.xlu0 0
  %3664 = vperm.xlu0 %3663, %v3578
  %v3665 = vpop.permute.xlu0 %3664
  %3668 = vset.pattern.permute.xlu0 0
  %3669 = vperm.xlu0 %3668, %v3579
  %v3670 = vpop.permute.xlu0 %3669
  %3673 = vset.pattern.permute.xlu0 0
  %3674 = vperm.xlu0 %3673, %v3580
  %v3675 = vpop.permute.xlu0 %3674
  %3678 = vset.pattern.permute.xlu0 0
  %3679 = vperm.xlu0 %3678, %v3581
  %v3680 = vpop.permute.xlu0 %3679
  %3683 = vset.pattern.permute.xlu0 0
  %3684 = vperm.xlu0 %3683, %v3582
  %v3685 = vpop.permute.xlu0 %3684
  %3688 = vset.pattern.permute.xlu0 0
  %3689 = vperm.xlu0 %3688, %v3583
  %v3690 = vpop.permute.xlu0 %3689
  %3693 = vset.pattern.permute.xlu0 0
  %3694 = vperm.xlu0 %3693, %v3584
  %v3695 = vpop.permute.xlu0 %3694
  %3698 = vset.pattern.permute.xlu0 0
  %3699 = vperm.xlu0 %3698, %v3585
  %v3700 = vpop.permute.xlu0 %3699
  %3703 = vset.pattern.permute.xlu0 0
  %3704 = vperm.xlu0 %3703, %v3586
  %v3705 = vpop.permute.xlu0 %3704
  %3708 = vset.pattern.permute.xlu0 0
  %3709 = vperm.xlu0 %3708, %v3587
  %v3710 = vpop.permute.xlu0 %3709
  %3713 = vset.pattern.permute.xlu0 0
  %3714 = vperm.xlu0 %3713, %v3588
  %v3715 = vpop.permute.xlu0 %3714
  %3718 = vset.pattern.permute.xlu0 0
  %3719 = vperm.xlu0 %3718, %v3589
  %v3720 = vpop.permute.xlu0 %3719
  %3723 = vset.pattern.permute.xlu0 0
  %3724 = vperm.xlu0 %3723, %v3590
  %v3725 = vpop.permute.xlu0 %3724
  %3728 = vset.pattern.permute.xlu0 0
  %3729 = vperm.xlu0 %3728, %v3591
  %v3730 = vpop.permute.xlu0 %3729
  %3733 = vset.pattern.permute.xlu0 0
  %3734 = vperm.xlu0 %3733, %v3592
  %v3735 = vpop.permute.xlu0 %3734
  %3738 = vset.pattern.permute.xlu0 0
  %3739 = vperm.xlu0 %3738, %v3593
  %v3740 = vpop.permute.xlu0 %3739
  %3743 = vset.pattern.permute.xlu0 0
  %3744 = vperm.xlu0 %3743, %v3594
  %v3745 = vpop.permute.xlu0 %3744
  %3748 = vset.pattern.permute.xlu0 0
  %3749 = vperm.xlu0 %3748, %v3595
  %v3750 = vpop.permute.xlu0 %3749
  %3753 = vset.pattern.permute.xlu0 0
  %3754 = vperm.xlu0 %3753, %v3596
  %v3755 = vpop.permute.xlu0 %3754
  %3757 = vmatprep.subr.mxu0 %v3310
  %3758 = vmatpush1.msra.mxu0 %v3309
  %3759 = vmatprep.subr.mxu0 %v3312
  %3760 = vmatpush1.msra.mxu0 %v3311
  %3761 = vmatprep.subr.mxu0 %v3314
  %3762 = vmatpush1.msra.mxu0 %v3313
  %3763 = vmatprep.subr.mxu0 %v3316
  %3764 = vmatpush1.msra.mxu0 %v3315
  %3765 = vmatprep.subr.mxu0 %v3318
  %3766 = vmatpush1.msra.mxu0 %v3317
  %3767 = vmatprep.subr.mxu0 %v3320
  %3768 = vmatpush1.msra.mxu0 %v3319
  %3769 = vmatprep.subr.mxu0 %v3322
  %3770 = vmatpush1.msra.mxu0 %v3321
  %3771 = vmatprep.subr.mxu0 %v3324
  %3772 = vmatpush1.msra.mxu0 %v3323
  %3773 = vmatprep.subr.mxu0 %v3326
  %3774 = vmatpush1.msra.mxu0 %v3325
  %3775 = vmatprep.subr.mxu0 %v3328
  %3776 = vmatpush1.msra.mxu0 %v3327
  %3777 = vmatprep.subr.mxu0 %v3330
  %3778 = vmatpush1.msra.mxu0 %v3329
  %3779 = vmatprep.subr.mxu0 %v3332
  %3780 = vmatpush1.msra.mxu0 %v3331
  %3781 = vmatprep.subr.mxu0 %v3334
  %3782 = vmatpush1.msra.mxu0 %v3333
  %3783 = vmatprep.subr.mxu0 %v3336
  %3784 = vmatpush1.msra.mxu0 %v3335
  %3785 = vmatprep.subr.mxu0 %v3338
  %3786 = vmatpush1.msra.mxu0 %v3337
  %3787 = vmatprep.subr.mxu0 %v3340
  %3788 = vmatpush1.msra.mxu0 %v3339
  %3789 = vmatprep.subr.mxu0 %v3342
  %3790 = vmatpush1.msra.mxu0 %v3341
  %3791 = vmatprep.subr.mxu0 %v3344
  %3792 = vmatpush1.msra.mxu0 %v3343
  %3793 = vmatprep.subr.mxu0 %v3346
  %3794 = vmatpush1.msra.mxu0 %v3345
  %3795 = vmatprep.subr.mxu0 %v3348
  %3796 = vmatpush1.msra.mxu0 %v3347
  %3797 = vmatprep.subr.mxu0 %v3350
  %3798 = vmatpush1.msra.mxu0 %v3349
  %3799 = vmatprep.subr.mxu0 %v3352
  %3800 = vmatpush1.msra.mxu0 %v3351
  %3801 = vmatprep.subr.mxu0 %v3354
  %3802 = vmatpush1.msra.mxu0 %v3353
  %3803 = vmatprep.subr.mxu0 %v3356
  %3804 = vmatpush1.msra.mxu0 %v3355
  %3805 = vmatprep.subr.mxu0 %v3358
  %3806 = vmatpush1.msra.mxu0 %v3357
  %3807 = vmatprep.subr.mxu0 %v3360
  %3808 = vmatpush1.msra.mxu0 %v3359
  %3809 = vmatprep.subr.mxu0 %v3362
  %3810 = vmatpush1.msra.mxu0 %v3361
  %3811 = vmatprep.subr.mxu0 %v3364
  %3812 = vmatpush1.msra.mxu0 %v3363
  %3813 = vmatprep.subr.mxu0 %v3366
  %3814 = vmatpush1.msra.mxu0 %v3365
  %3815 = vmatprep.subr.mxu0 %v3368
  %3816 = vmatpush1.msra.mxu0 %v3367
  %3817 = vmatprep.subr.mxu0 %v3370
  %3818 = vmatpush1.msra.mxu0 %v3369
  %3819 = vmatprep.subr.mxu0 %v3372
  %3820 = vmatpush1.msra.mxu0 %v3371
  %3821 = vmatprep.mubr.f32.mxu0 %v3438
  %3822 = vmatmul.mubr.f32.gmra.mrb[0].mxu0 %v3437
  %v3823 = vpop.f32.mrb[0].mxu0
  %v3824 = vadd.f32 %v3600, %v3823
  %v3825 = vpop.f32.mrb[0].mxu0
  %v3826 = vadd.f32 %v3600, %v3825
  %3827 = vmatprep.mubr.f32.mxu0 %v3442
  %3828 = vmatmul.mubr.f32.gmra.mrb[0].mxu0 %v3441
  %v3829 = vpop.f32.mrb[0].mxu0
  %v3830 = vadd.f32 %v3605, %v3829
  %v3831 = vpop.f32.mrb[0].mxu0
  %v3832 = vadd.f32 %v3605, %v3831
  %3833 = vmatprep.mubr.f32.mxu0 %v3446
  %3834 = vmatmul.mubr.f32.gmra.mrb[0].mxu0 %v3445
  %v3835 = vpop.f32.mrb[0].mxu0
  %v3836 = vadd.f32 %v3610, %v3835
  %v3837 = vpop.f32.mrb[0].mxu0
  %v3838 = vadd.f32 %v3610, %v3837
  %3839 = vmatprep.mubr.f32.mxu0 %v3450
  %3840 = vmatmul.mubr.f32.gmra.mrb[0].mxu0 %v3449
  %v3841 = vpop.f32.mrb[0].mxu0
  %v3842 = vadd.f32 %v3615, %v3841
  %v3843 = vpop.f32.mrb[0].mxu0
  %v3844 = vadd.f32 %v3615, %v3843
  %3845 = vmatprep.mubr.f32.mxu0 %v3454
  %3846 = vmatmul.mubr.f32.gmra.mrb[0].mxu0 %v3453
  %v3847 = vpop.f32.mrb[0].mxu0
  %v3848 = vadd.f32 %v3620, %v3847
  %v3849 = vpop.f32.mrb[0].mxu0
  %v3850 = vadd.f32 %v3620, %v3849
  %3851 = vmatprep.mubr.f32.mxu0 %v3458
  %3852 = vmatmul.mubr.f32.gmra.mrb[0].mxu0 %v3457
  %v3853 = vpop.f32.mrb[0].mxu0
  %v3854 = vadd.f32 %v3625, %v3853
  %v3855 = vpop.f32.mrb[0].mxu0
  %v3856 = vadd.f32 %v3625, %v3855
  %3857 = vmatprep.mubr.f32.mxu0 %v3462
  %3858 = vmatmul.mubr.f32.gmra.mrb[0].mxu0 %v3461
  %v3859 = vpop.f32.mrb[0].mxu0
  %v3860 = vadd.f32 %v3630, %v3859
  %v3861 = vpop.f32.mrb[0].mxu0
  %v3862 = vadd.f32 %v3630, %v3861
  %3863 = vmatprep.mubr.f32.mxu0 %v3466
  %3864 = vmatmul.mubr.f32.gmra.mrb[0].mxu0 %v3465
  %v3865 = vpop.f32.mrb[0].mxu0
  %v3866 = vadd.f32 %v3635, %v3865
  %v3867 = vpop.f32.mrb[0].mxu0
  %v3868 = vadd.f32 %v3635, %v3867
  %3869 = vmatprep.mubr.f32.mxu0 %v3470
  %3870 = vmatmul.mubr.f32.gmra.mrb[0].mxu0 %v3469
  %v3871 = vpop.f32.mrb[0].mxu0
  %v3872 = vadd.f32 %v3640, %v3871
  %v3873 = vpop.f32.mrb[0].mxu0
  %v3874 = vadd.f32 %v3640, %v3873
  %3875 = vmatprep.mubr.f32.mxu0 %v3474
  %3876 = vmatmul.mubr.f32.gmra.mrb[0].mxu0 %v3473
  %v3877 = vpop.f32.mrb[0].mxu0
  %v3878 = vadd.f32 %v3645, %v3877
  %v3879 = vpop.f32.mrb[0].mxu0
  %v3880 = vadd.f32 %v3645, %v3879
  %3881 = vmatprep.mubr.f32.mxu0 %v3478
  %3882 = vmatmul.mubr.f32.gmra.mrb[0].mxu0 %v3477
  %v3883 = vpop.f32.mrb[0].mxu0
  %v3884 = vadd.f32 %v3650, %v3883
  %v3885 = vpop.f32.mrb[0].mxu0
  %v3886 = vadd.f32 %v3650, %v3885
  %3887 = vmatprep.mubr.f32.mxu0 %v3482
  %3888 = vmatmul.mubr.f32.gmra.mrb[0].mxu0 %v3481
  %v3889 = vpop.f32.mrb[0].mxu0
  %v3890 = vadd.f32 %v3655, %v3889
  %v3891 = vpop.f32.mrb[0].mxu0
  %v3892 = vadd.f32 %v3655, %v3891
  %3893 = vmatprep.mubr.f32.mxu0 %v3486
  %3894 = vmatmul.mubr.f32.gmra.mrb[0].mxu0 %v3485
  %v3895 = vpop.f32.mrb[0].mxu0
  %v3896 = vadd.f32 %v3660, %v3895
  %v3897 = vpop.f32.mrb[0].mxu0
  %v3898 = vadd.f32 %v3660, %v3897
  %3899 = vmatprep.mubr.f32.mxu0 %v3490
  %3900 = vmatmul.mubr.f32.gmra.mrb[0].mxu0 %v3489
  %v3901 = vpop.f32.mrb[0].mxu0
  %v3902 = vadd.f32 %v3665, %v3901
  %v3903 = vpop.f32.mrb[0].mxu0
  %v3904 = vadd.f32 %v3665, %v3903
  %3905 = vmatprep.mubr.f32.mxu0 %v3494
  %3906 = vmatmul.mubr.f32.gmra.mrb[0].mxu0 %v3493
  %v3907 = vpop.f32.mrb[0].mxu0
  %v3908 = vadd.f32 %v3670, %v3907
  %v3909 = vpop.f32.mrb[0].mxu0
  %v3910 = vadd.f32 %v3670, %v3909
  %3911 = vmatprep.mubr.f32.mxu0 %v3498
  %3912 = vmatmul.mubr.f32.gmra.mrb[0].mxu0 %v3497
  %v3913 = vpop.f32.mrb[0].mxu0
  %v3914 = vadd.f32 %v3675, %v3913
  %v3915 = vpop.f32.mrb[0].mxu0
  %v3916 = vadd.f32 %v3675, %v3915
  %3917 = vmatprep.mubr.f32.mxu0 %v3502
  %3918 = vmatmul.mubr.f32.gmra.mrb[0].mxu0 %v3501
  %v3919 = vpop.f32.mrb[0].mxu0
  %v3920 = vadd.f32 %v3680, %v3919
  %v3921 = vpop.f32.mrb[0].mxu0
  %v3922 = vadd.f32 %v3680, %v3921
  %3923 = vmatprep.mubr.f32.mxu0 %v3506
  %3924 = vmatmul.mubr.f32.gmra.mrb[0].mxu0 %v3505
  %v3925 = vpop.f32.mrb[0].mxu0
  %v3926 = vadd.f32 %v3685, %v3925
  %v3927 = vpop.f32.mrb[0].mxu0
  %v3928 = vadd.f32 %v3685, %v3927
  %3929 = vmatprep.mubr.f32.mxu0 %v3510
  %3930 = vmatmul.mubr.f32.gmra.mrb[0].mxu0 %v3509
  %v3931 = vpop.f32.mrb[0].mxu0
  %v3932 = vadd.f32 %v3690, %v3931
  %v3933 = vpop.f32.mrb[0].mxu0
  %v3934 = vadd.f32 %v3690, %v3933
  %3935 = vmatprep.mubr.f32.mxu0 %v3514
  %3936 = vmatmul.mubr.f32.gmra.mrb[0].mxu0 %v3513
  %v3937 = vpop.f32.mrb[0].mxu0
  %v3938 = vadd.f32 %v3695, %v3937
  %v3939 = vpop.f32.mrb[0].mxu0
  %v3940 = vadd.f32 %v3695, %v3939
  %3941 = vmatprep.mubr.f32.mxu0 %v3518
  %3942 = vmatmul.mubr.f32.gmra.mrb[0].mxu0 %v3517
  %v3943 = vpop.f32.mrb[0].mxu0
  %v3944 = vadd.f32 %v3700, %v3943
  %v3945 = vpop.f32.mrb[0].mxu0
  %v3946 = vadd.f32 %v3700, %v3945
  %3947 = vmatprep.mubr.f32.mxu0 %v3522
  %3948 = vmatmul.mubr.f32.gmra.mrb[0].mxu0 %v3521
  %v3949 = vpop.f32.mrb[0].mxu0
  %v3950 = vadd.f32 %v3705, %v3949
  %v3951 = vpop.f32.mrb[0].mxu0
  %v3952 = vadd.f32 %v3705, %v3951
  %3953 = vmatprep.mubr.f32.mxu0 %v3526
  %3954 = vmatmul.mubr.f32.gmra.mrb[0].mxu0 %v3525
  %v3955 = vpop.f32.mrb[0].mxu0
  %v3956 = vadd.f32 %v3710, %v3955
  %v3957 = vpop.f32.mrb[0].mxu0
  %v3958 = vadd.f32 %v3710, %v3957
  %3959 = vmatprep.mubr.f32.mxu0 %v3530
  %3960 = vmatmul.mubr.f32.gmra.mrb[0].mxu0 %v3529
  %v3961 = vpop.f32.mrb[0].mxu0
  %v3962 = vadd.f32 %v3715, %v3961
  %v3963 = vpop.f32.mrb[0].mxu0
  %v3964 = vadd.f32 %v3715, %v3963
  %3965 = vmatprep.mubr.f32.mxu0 %v3534
  %3966 = vmatmul.mubr.f32.gmra.mrb[0].mxu0 %v3533
  %v3967 = vpop.f32.mrb[0].mxu0
  %v3968 = vadd.f32 %v3720, %v3967
  %v3969 = vpop.f32.mrb[0].mxu0
  %v3970 = vadd.f32 %v3720, %v3969
  %3971 = vmatprep.mubr.f32.mxu0 %v3538
  %3972 = vmatmul.mubr.f32.gmra.mrb[0].mxu0 %v3537
  %v3973 = vpop.f32.mrb[0].mxu0
  %v3974 = vadd.f32 %v3725, %v3973
  %v3975 = vpop.f32.mrb[0].mxu0
  %v3976 = vadd.f32 %v3725, %v3975
  %3977 = vmatprep.mubr.f32.mxu0 %v3542
  %3978 = vmatmul.mubr.f32.gmra.mrb[0].mxu0 %v3541
  %v3979 = vpop.f32.mrb[0].mxu0
  %v3980 = vadd.f32 %v3730, %v3979
  %v3981 = vpop.f32.mrb[0].mxu0
  %v3982 = vadd.f32 %v3730, %v3981
  %3983 = vmatprep.mubr.f32.mxu0 %v3546
  %3984 = vmatmul.mubr.f32.gmra.mrb[0].mxu0 %v3545
  %v3985 = vpop.f32.mrb[0].mxu0
  %v3986 = vadd.f32 %v3735, %v3985
  %v3987 = vpop.f32.mrb[0].mxu0
  %v3988 = vadd.f32 %v3735, %v3987
  %3989 = vmatprep.mubr.f32.mxu0 %v3550
  %3990 = vmatmul.mubr.f32.gmra.mrb[0].mxu0 %v3549
  %v3991 = vpop.f32.mrb[0].mxu0
  %v3992 = vadd.f32 %v3740, %v3991
  %v3993 = vpop.f32.mrb[0].mxu0
  %v3994 = vadd.f32 %v3740, %v3993
  %3995 = vmatprep.mubr.f32.mxu0 %v3554
  %3996 = vmatmul.mubr.f32.gmra.mrb[0].mxu0 %v3553
  %v3997 = vpop.f32.mrb[0].mxu0
  %v3998 = vadd.f32 %v3745, %v3997
  %v3999 = vpop.f32.mrb[0].mxu0
  %v4000 = vadd.f32 %v3745, %v3999
  %4001 = vmatprep.mubr.f32.mxu0 %v3558
  %4002 = vmatmul.mubr.f32.gmra.mrb[0].mxu0 %v3557
  %v4003 = vpop.f32.mrb[0].mxu0
  %v4004 = vadd.f32 %v3750, %v4003
  %v4005 = vpop.f32.mrb[0].mxu0
  %v4006 = vadd.f32 %v3750, %v4005
  %4007 = vmatprep.mubr.f32.mxu0 %v3562
  %4008 = vmatmul.mubr.f32.gmra.mrb[0].mxu0 %v3561
  %v4009 = vpop.f32.mrb[0].mxu0
  %v4010 = vadd.f32 %v3755, %v4009
  %v4011 = vpop.f32.mrb[0].mxu0
  %v4012 = vadd.f32 %v3755, %v4011
  %4013 = vdwg.mxu0
  %4014 = vmatprep.subr.mxu0 %v3374
  %4015 = vmatpush1.msra.mxu0 %v3373
  %4016 = vmatprep.subr.mxu0 %v3376
  %4017 = vmatpush1.msra.mxu0 %v3375
  %4018 = vmatprep.subr.mxu0 %v3378
  %4019 = vmatpush1.msra.mxu0 %v3377
  %4020 = vmatprep.subr.mxu0 %v3380
  %4021 = vmatpush1.msra.mxu0 %v3379
  %4022 = vmatprep.subr.mxu0 %v3382
  %4023 = vmatpush1.msra.mxu0 %v3381
  %4024 = vmatprep.subr.mxu0 %v3384
  %4025 = vmatpush1.msra.mxu0 %v3383
  %4026 = vmatprep.subr.mxu0 %v3386
  %4027 = vmatpush1.msra.mxu0 %v3385
  %4028 = vmatprep.subr.mxu0 %v3388
  %4029 = vmatpush1.msra.mxu0 %v3387
  %4030 = vmatprep.subr.mxu0 %v3390
  %4031 = vmatpush1.msra.mxu0 %v3389
  %4032 = vmatprep.subr.mxu0 %v3392
  %4033 = vmatpush1.msra.mxu0 %v3391
  %4034 = vmatprep.subr.mxu0 %v3394
  %4035 = vmatpush1.msra.mxu0 %v3393
  %4036 = vmatprep.subr.mxu0 %v3396
  %4037 = vmatpush1.msra.mxu0 %v3395
  %4038 = vmatprep.subr.mxu0 %v3398
  %4039 = vmatpush1.msra.mxu0 %v3397
  %4040 = vmatprep.subr.mxu0 %v3400
  %4041 = vmatpush1.msra.mxu0 %v3399
  %4042 = vmatprep.subr.mxu0 %v3402
  %4043 = vmatpush1.msra.mxu0 %v3401
  %4044 = vmatprep.subr.mxu0 %v3404
  %4045 = vmatpush1.msra.mxu0 %v3403
  %4046 = vmatprep.subr.mxu0 %v3406
  %4047 = vmatpush1.msra.mxu0 %v3405
  %4048 = vmatprep.subr.mxu0 %v3408
  %4049 = vmatpush1.msra.mxu0 %v3407
  %4050 = vmatprep.subr.mxu0 %v3410
  %4051 = vmatpush1.msra.mxu0 %v3409
  %4052 = vmatprep.subr.mxu0 %v3412
  %4053 = vmatpush1.msra.mxu0 %v3411
  %4054 = vmatprep.subr.mxu0 %v3414
  %4055 = vmatpush1.msra.mxu0 %v3413
  %4056 = vmatprep.subr.mxu0 %v3416
  %4057 = vmatpush1.msra.mxu0 %v3415
  %4058 = vmatprep.subr.mxu0 %v3418
  %4059 = vmatpush1.msra.mxu0 %v3417
  %4060 = vmatprep.subr.mxu0 %v3420
  %4061 = vmatpush1.msra.mxu0 %v3419
  %4062 = vmatprep.subr.mxu0 %v3422
  %4063 = vmatpush1.msra.mxu0 %v3421
  %4064 = vmatprep.subr.mxu0 %v3424
  %4065 = vmatpush1.msra.mxu0 %v3423
  %4066 = vmatprep.subr.mxu0 %v3426
  %4067 = vmatpush1.msra.mxu0 %v3425
  %4068 = vmatprep.subr.mxu0 %v3428
  %4069 = vmatpush1.msra.mxu0 %v3427
  %4070 = vmatprep.subr.mxu0 %v3430
  %4071 = vmatpush1.msra.mxu0 %v3429
  %4072 = vmatprep.subr.mxu0 %v3432
  %4073 = vmatpush1.msra.mxu0 %v3431
  %4074 = vmatprep.subr.mxu0 %v3434
  %4075 = vmatpush1.msra.mxu0 %v3433
  %4076 = vmatprep.subr.mxu0 %v3436
  %4077 = vmatpush1.msra.mxu0 %v3435
  %4078 = vmatprep.mubr.f32.mxu0 %v3440
  %4079 = vmatmul.mubr.f32.gmra.mrb[0].mxu0 %v3439
  %v4080 = vpop.f32.mrb[0].mxu0
  %v4081 = vadd.f32 %v3824, %v4080
  %v4082 = vpop.f32.mrb[0].mxu0
  %v4083 = vadd.f32 %v3826, %v4082
  %4084 = vmatprep.mubr.f32.mxu0 %v3444
  %4085 = vmatmul.mubr.f32.gmra.mrb[0].mxu0 %v3443
  %v4086 = vpop.f32.mrb[0].mxu0
  %v4087 = vadd.f32 %v3830, %v4086
  %v4088 = vpop.f32.mrb[0].mxu0
  %v4089 = vadd.f32 %v3832, %v4088
  %4090 = vmatprep.mubr.f32.mxu0 %v3448
  %4091 = vmatmul.mubr.f32.gmra.mrb[0].mxu0 %v3447
  %v4092 = vpop.f32.mrb[0].mxu0
  %v4093 = vadd.f32 %v3836, %v4092
  %v4094 = vpop.f32.mrb[0].mxu0
  %v4095 = vadd.f32 %v3838, %v4094
  %4096 = vmatprep.mubr.f32.mxu0 %v3452
  %4097 = vmatmul.mubr.f32.gmra.mrb[0].mxu0 %v3451
  %v4098 = vpop.f32.mrb[0].mxu0
  %v4099 = vadd.f32 %v3842, %v4098
  %v4100 = vpop.f32.mrb[0].mxu0
  %v4101 = vadd.f32 %v3844, %v4100
  %4102 = vmatprep.mubr.f32.mxu0 %v3456
  %4103 = vmatmul.mubr.f32.gmra.mrb[0].mxu0 %v3455
  %v4104 = vpop.f32.mrb[0].mxu0
  %v4105 = vadd.f32 %v3848, %v4104
  %v4106 = vpop.f32.mrb[0].mxu0
  %v4107 = vadd.f32 %v3850, %v4106
  %4108 = vmatprep.mubr.f32.mxu0 %v3460
  %4109 = vmatmul.mubr.f32.gmra.mrb[0].mxu0 %v3459
  %v4110 = vpop.f32.mrb[0].mxu0
  %v4111 = vadd.f32 %v3854, %v4110
  %v4112 = vpop.f32.mrb[0].mxu0
  %v4113 = vadd.f32 %v3856, %v4112
  %4114 = vmatprep.mubr.f32.mxu0 %v3464
  %4115 = vmatmul.mubr.f32.gmra.mrb[0].mxu0 %v3463
  %v4116 = vpop.f32.mrb[0].mxu0
  %v4117 = vadd.f32 %v3860, %v4116
  %v4118 = vpop.f32.mrb[0].mxu0
  %v4119 = vadd.f32 %v3862, %v4118
  %4120 = vmatprep.mubr.f32.mxu0 %v3468
  %4121 = vmatmul.mubr.f32.gmra.mrb[0].mxu0 %v3467
  %v4122 = vpop.f32.mrb[0].mxu0
  %v4123 = vadd.f32 %v3866, %v4122
  %v4124 = vpop.f32.mrb[0].mxu0
  %v4125 = vadd.f32 %v3868, %v4124
  %4126 = vmatprep.mubr.f32.mxu0 %v3472
  %4127 = vmatmul.mubr.f32.gmra.mrb[0].mxu0 %v3471
  %v4128 = vpop.f32.mrb[0].mxu0
  %v4129 = vadd.f32 %v3872, %v4128
  %v4130 = vpop.f32.mrb[0].mxu0
  %v4131 = vadd.f32 %v3874, %v4130
  %4132 = vmatprep.mubr.f32.mxu0 %v3476
  %4133 = vmatmul.mubr.f32.gmra.mrb[0].mxu0 %v3475
  %v4134 = vpop.f32.mrb[0].mxu0
  %v4135 = vadd.f32 %v3878, %v4134
  %v4136 = vpop.f32.mrb[0].mxu0
  %v4137 = vadd.f32 %v3880, %v4136
  %4138 = vmatprep.mubr.f32.mxu0 %v3480
  %4139 = vmatmul.mubr.f32.gmra.mrb[0].mxu0 %v3479
  %v4140 = vpop.f32.mrb[0].mxu0
  %v4141 = vadd.f32 %v3884, %v4140
  %v4142 = vpop.f32.mrb[0].mxu0
  %v4143 = vadd.f32 %v3886, %v4142
  %4144 = vmatprep.mubr.f32.mxu0 %v3484
  %4145 = vmatmul.mubr.f32.gmra.mrb[0].mxu0 %v3483
  %v4146 = vpop.f32.mrb[0].mxu0
  %v4147 = vadd.f32 %v3890, %v4146
  %v4148 = vpop.f32.mrb[0].mxu0
  %v4149 = vadd.f32 %v3892, %v4148
  %4150 = vmatprep.mubr.f32.mxu0 %v3488
  %4151 = vmatmul.mubr.f32.gmra.mrb[0].mxu0 %v3487
  %v4152 = vpop.f32.mrb[0].mxu0
  %v4153 = vadd.f32 %v3896, %v4152
  %v4154 = vpop.f32.mrb[0].mxu0
  %v4155 = vadd.f32 %v3898, %v4154
  %4156 = vmatprep.mubr.f32.mxu0 %v3492
  %4157 = vmatmul.mubr.f32.gmra.mrb[0].mxu0 %v3491
  %v4158 = vpop.f32.mrb[0].mxu0
  %v4159 = vadd.f32 %v3902, %v4158
  %v4160 = vpop.f32.mrb[0].mxu0
  %v4161 = vadd.f32 %v3904, %v4160
  %4162 = vmatprep.mubr.f32.mxu0 %v3496
  %4163 = vmatmul.mubr.f32.gmra.mrb[0].mxu0 %v3495
  %v4164 = vpop.f32.mrb[0].mxu0
  %v4165 = vadd.f32 %v3908, %v4164
  %v4166 = vpop.f32.mrb[0].mxu0
  %v4167 = vadd.f32 %v3910, %v4166
  %4168 = vmatprep.mubr.f32.mxu0 %v3500
  %4169 = vmatmul.mubr.f32.gmra.mrb[0].mxu0 %v3499
  %v4170 = vpop.f32.mrb[0].mxu0
  %v4171 = vadd.f32 %v3914, %v4170
  %v4172 = vpop.f32.mrb[0].mxu0
  %v4173 = vadd.f32 %v3916, %v4172
  %4174 = vmatprep.mubr.f32.mxu0 %v3504
  %4175 = vmatmul.mubr.f32.gmra.mrb[0].mxu0 %v3503
  %v4176 = vpop.f32.mrb[0].mxu0
  %v4177 = vadd.f32 %v3920, %v4176
  %v4178 = vpop.f32.mrb[0].mxu0
  %v4179 = vadd.f32 %v3922, %v4178
  %4180 = vmatprep.mubr.f32.mxu0 %v3508
  %4181 = vmatmul.mubr.f32.gmra.mrb[0].mxu0 %v3507
  %v4182 = vpop.f32.mrb[0].mxu0
  %v4183 = vadd.f32 %v3926, %v4182
  %v4184 = vpop.f32.mrb[0].mxu0
  %v4185 = vadd.f32 %v3928, %v4184
  %4186 = vmatprep.mubr.f32.mxu0 %v3512
  %4187 = vmatmul.mubr.f32.gmra.mrb[0].mxu0 %v3511
  %v4188 = vpop.f32.mrb[0].mxu0
  %v4189 = vadd.f32 %v3932, %v4188
  %v4190 = vpop.f32.mrb[0].mxu0
  %v4191 = vadd.f32 %v3934, %v4190
  %4192 = vmatprep.mubr.f32.mxu0 %v3516
  %4193 = vmatmul.mubr.f32.gmra.mrb[0].mxu0 %v3515
  %v4194 = vpop.f32.mrb[0].mxu0
  %v4195 = vadd.f32 %v3938, %v4194
  %v4196 = vpop.f32.mrb[0].mxu0
  %v4197 = vadd.f32 %v3940, %v4196
  %4198 = vmatprep.mubr.f32.mxu0 %v3520
  %4199 = vmatmul.mubr.f32.gmra.mrb[0].mxu0 %v3519
  %v4200 = vpop.f32.mrb[0].mxu0
  %v4201 = vadd.f32 %v3944, %v4200
  %v4202 = vpop.f32.mrb[0].mxu0
  %v4203 = vadd.f32 %v3946, %v4202
  %4204 = vmatprep.mubr.f32.mxu0 %v3524
  %4205 = vmatmul.mubr.f32.gmra.mrb[0].mxu0 %v3523
  %v4206 = vpop.f32.mrb[0].mxu0
  %v4207 = vadd.f32 %v3950, %v4206
  %v4208 = vpop.f32.mrb[0].mxu0
  %v4209 = vadd.f32 %v3952, %v4208
  %4210 = vmatprep.mubr.f32.mxu0 %v3528
  %4211 = vmatmul.mubr.f32.gmra.mrb[0].mxu0 %v3527
  %v4212 = vpop.f32.mrb[0].mxu0
  %v4213 = vadd.f32 %v3956, %v4212
  %v4214 = vpop.f32.mrb[0].mxu0
  %v4215 = vadd.f32 %v3958, %v4214
  %4216 = vmatprep.mubr.f32.mxu0 %v3532
  %4217 = vmatmul.mubr.f32.gmra.mrb[0].mxu0 %v3531
  %v4218 = vpop.f32.mrb[0].mxu0
  %v4219 = vadd.f32 %v3962, %v4218
  %v4220 = vpop.f32.mrb[0].mxu0
  %v4221 = vadd.f32 %v3964, %v4220
  %4222 = vmatprep.mubr.f32.mxu0 %v3536
  %4223 = vmatmul.mubr.f32.gmra.mrb[0].mxu0 %v3535
  %v4224 = vpop.f32.mrb[0].mxu0
  %v4225 = vadd.f32 %v3968, %v4224
  %v4226 = vpop.f32.mrb[0].mxu0
  %v4227 = vadd.f32 %v3970, %v4226
  %4228 = vmatprep.mubr.f32.mxu0 %v3540
  %4229 = vmatmul.mubr.f32.gmra.mrb[0].mxu0 %v3539
  %v4230 = vpop.f32.mrb[0].mxu0
  %v4231 = vadd.f32 %v3974, %v4230
  %v4232 = vpop.f32.mrb[0].mxu0
  %v4233 = vadd.f32 %v3976, %v4232
  %4234 = vmatprep.mubr.f32.mxu0 %v3544
  %4235 = vmatmul.mubr.f32.gmra.mrb[0].mxu0 %v3543
  %v4236 = vpop.f32.mrb[0].mxu0
  %v4237 = vadd.f32 %v3980, %v4236
  %v4238 = vpop.f32.mrb[0].mxu0
  %v4239 = vadd.f32 %v3982, %v4238
  %4240 = vmatprep.mubr.f32.mxu0 %v3548
  %4241 = vmatmul.mubr.f32.gmra.mrb[0].mxu0 %v3547
  %v4242 = vpop.f32.mrb[0].mxu0
  %v4243 = vadd.f32 %v3986, %v4242
  %v4244 = vpop.f32.mrb[0].mxu0
  %v4245 = vadd.f32 %v3988, %v4244
  %4246 = vmatprep.mubr.f32.mxu0 %v3552
  %4247 = vmatmul.mubr.f32.gmra.mrb[0].mxu0 %v3551
  %v4248 = vpop.f32.mrb[0].mxu0
  %v4249 = vadd.f32 %v3992, %v4248
  %v4250 = vpop.f32.mrb[0].mxu0
  %v4251 = vadd.f32 %v3994, %v4250
  %4252 = vmatprep.mubr.f32.mxu0 %v3556
  %4253 = vmatmul.mubr.f32.gmra.mrb[0].mxu0 %v3555
  %v4254 = vpop.f32.mrb[0].mxu0
  %v4255 = vadd.f32 %v3998, %v4254
  %v4256 = vpop.f32.mrb[0].mxu0
  %v4257 = vadd.f32 %v4000, %v4256
  %4258 = vmatprep.mubr.f32.mxu0 %v3560
  %4259 = vmatmul.mubr.f32.gmra.mrb[0].mxu0 %v3559
  %v4260 = vpop.f32.mrb[0].mxu0
  %v4261 = vadd.f32 %v4004, %v4260
  %v4262 = vpop.f32.mrb[0].mxu0
  %v4263 = vadd.f32 %v4006, %v4262
  %4264 = vmatprep.mubr.f32.mxu0 %v3564
  %4265 = vmatmul.mubr.f32.gmra.mrb[0].mxu0 %v3563
  %v4266 = vpop.f32.mrb[0].mxu0
  %v4267 = vadd.f32 %v4010, %v4266
  %v4268 = vpop.f32.mrb[0].mxu0
  %v4269 = vadd.f32 %v4012, %v4268
  %4270 = vdwg.mxu0
  %v4271 = vld [vmem:[%s12] sm:$0xff]
  %v4272 = vld [vmem:[%s12 + $0x8] sm:$0xff]
  %v4273 = vld [vmem:[%s12 + $0x10] sm:$0xff]
  %v4274 = vld [vmem:[%s12 + $0x18] sm:$0xff]
  %v4275 = vld [vmem:[%s12 + $0x20] sm:$0xff]
  %v4276 = vld [vmem:[%s12 + $0x28] sm:$0xff]
  %v4277 = vld [vmem:[%s12 + $0x30] sm:$0xff]
  %v4278 = vld [vmem:[%s12 + $0x38] sm:$0xff]
  %v4279 = vld [vmem:[%s13] sm:$0xff]
  %v4280 = vld [vmem:[%s13 + $0x8] sm:$0xff]
  %v4281 = vld [vmem:[%s13 + $0x10] sm:$0xff]
  %v4282 = vld [vmem:[%s13 + $0x18] sm:$0xff]
  %4284 = vset.pattern.permute.xlu0 0
  %4285 = vperm.xlu0 %4284, %v4279
  %v4286 = vpop.permute.xlu0 %4285
  %4289 = vset.pattern.permute.xlu0 0
  %4290 = vperm.xlu0 %4289, %v4280
  %v4291 = vpop.permute.xlu0 %4290
  %4294 = vset.pattern.permute.xlu0 0
  %4295 = vperm.xlu0 %4294, %v4281
  %v4296 = vpop.permute.xlu0 %4295
  %4299 = vset.pattern.permute.xlu0 0
  %4300 = vperm.xlu0 %4299, %v4282
  %v4301 = vpop.permute.xlu0 %4300
  %4303 = vmatprep.subr.mxu0 %v4083
  %4304 = vmatpush1.msra.mxu0 %v4081
  %4305 = vmatprep.subr.mxu0 %v4089
  %4306 = vmatpush1.msra.mxu0 %v4087
  %4307 = vmatprep.subr.mxu0 %v4095
  %4308 = vmatpush1.msra.mxu0 %v4093
  %4309 = vmatprep.subr.mxu0 %v4101
  %4310 = vmatpush1.msra.mxu0 %v4099
  %4311 = vmatprep.subr.mxu0 %v4107
  %4312 = vmatpush1.msra.mxu0 %v4105
  %4313 = vmatprep.subr.mxu0 %v4113
  %4314 = vmatpush1.msra.mxu0 %v4111
  %4315 = vmatprep.subr.mxu0 %v4119
  %4316 = vmatpush1.msra.mxu0 %v4117
  %4317 = vmatprep.subr.mxu0 %v4125
  %4318 = vmatpush1.msra.mxu0 %v4123
  %4319 = vmatprep.subr.mxu0 %v4131
  %4320 = vmatpush1.msra.mxu0 %v4129
  %4321 = vmatprep.subr.mxu0 %v4137
  %4322 = vmatpush1.msra.mxu0 %v4135
  %4323 = vmatprep.subr.mxu0 %v4143
  %4324 = vmatpush1.msra.mxu0 %v4141
  %4325 = vmatprep.subr.mxu0 %v4149
  %4326 = vmatpush1.msra.mxu0 %v4147
  %4327 = vmatprep.subr.mxu0 %v4155
  %4328 = vmatpush1.msra.mxu0 %v4153
  %4329 = vmatprep.subr.mxu0 %v4161
  %4330 = vmatpush1.msra.mxu0 %v4159
  %4331 = vmatprep.subr.mxu0 %v4167
  %4332 = vmatpush1.msra.mxu0 %v4165
  %4333 = vmatprep.subr.mxu0 %v4173
  %4334 = vmatpush1.msra.mxu0 %v4171
  %4335 = vmatprep.subr.mxu0 %v4179
  %4336 = vmatpush1.msra.mxu0 %v4177
  %4337 = vmatprep.subr.mxu0 %v4185
  %4338 = vmatpush1.msra.mxu0 %v4183
  %4339 = vmatprep.subr.mxu0 %v4191
  %4340 = vmatpush1.msra.mxu0 %v4189
  %4341 = vmatprep.subr.mxu0 %v4197
  %4342 = vmatpush1.msra.mxu0 %v4195
  %4343 = vmatprep.subr.mxu0 %v4203
  %4344 = vmatpush1.msra.mxu0 %v4201
  %4345 = vmatprep.subr.mxu0 %v4209
  %4346 = vmatpush1.msra.mxu0 %v4207
  %4347 = vmatprep.subr.mxu0 %v4215
  %4348 = vmatpush1.msra.mxu0 %v4213
  %4349 = vmatprep.subr.mxu0 %v4221
  %4350 = vmatpush1.msra.mxu0 %v4219
  %4351 = vmatprep.subr.mxu0 %v4227
  %4352 = vmatpush1.msra.mxu0 %v4225
  %4353 = vmatprep.subr.mxu0 %v4233
  %4354 = vmatpush1.msra.mxu0 %v4231
  %4355 = vmatprep.subr.mxu0 %v4239
  %4356 = vmatpush1.msra.mxu0 %v4237
  %4357 = vmatprep.subr.mxu0 %v4245
  %4358 = vmatpush1.msra.mxu0 %v4243
  %4359 = vmatprep.subr.mxu0 %v4251
  %4360 = vmatpush1.msra.mxu0 %v4249
  %4361 = vmatprep.subr.mxu0 %v4257
  %4362 = vmatpush1.msra.mxu0 %v4255
  %4363 = vmatprep.subr.mxu0 %v4263
  %4364 = vmatpush1.msra.mxu0 %v4261
  %4365 = vmatprep.subr.mxu0 %v4269
  %4366 = vmatpush1.msra.mxu0 %v4267
  %4367 = vmatprep.mubr.f32.mxu0 %v4272
  %4368 = vmatmul.mubr.f32.gmra.mrb[0].mxu0 %v4271
  %v4369 = vpop.f32.mrb[0].mxu0
  %v4370 = vadd.f32 %v4286, %v4369
  %v4371 = vpop.f32.mrb[0].mxu0
  %v4372 = vadd.f32 %v4286, %v4371
  %4373 = vmatprep.mubr.f32.mxu0 %v4274
  %4374 = vmatmul.mubr.f32.gmra.mrb[0].mxu0 %v4273
  %v4375 = vpop.f32.mrb[0].mxu0
  %v4376 = vadd.f32 %v4291, %v4375
  %v4377 = vpop.f32.mrb[0].mxu0
  %v4378 = vadd.f32 %v4291, %v4377
  %4379 = vmatprep.mubr.f32.mxu0 %v4276
  %4380 = vmatmul.mubr.f32.gmra.mrb[0].mxu0 %v4275
  %v4381 = vpop.f32.mrb[0].mxu0
  %v4382 = vadd.f32 %v4296, %v4381
  %v4383 = vpop.f32.mrb[0].mxu0
  %v4384 = vadd.f32 %v4296, %v4383
  %4385 = vmatprep.mubr.f32.mxu0 %v4278
  %4386 = vmatmul.mubr.f32.gmra.mrb[0].mxu0 %v4277
  %v4387 = vpop.f32.mrb[0].mxu0
  %v4388 = vadd.f32 %v4301, %v4387
  %v4389 = vpop.f32.mrb[0].mxu0
  %v4390 = vadd.f32 %v4301, %v4389
  %4391 = vdwg.mxu0
  %4392 = vst [vmem:[%s19] sm:$0xff] %v4370
  %4393 = vst [vmem:[%s19 + $0x8] sm:$0xff] %v4372
  %4394 = vst [vmem:[%s19 + $0x10] sm:$0xff] %v4376
  %4395 = vst [vmem:[%s19 + $0x18] sm:$0xff] %v4378
  %4396 = vst [vmem:[%s19 + $0x20] sm:$0xff] %v4382
  %4397 = vst [vmem:[%s19 + $0x28] sm:$0xff] %v4384
  %4398 = vst [vmem:[%s19 + $0x30] sm:$0xff] %v4388
  %4399 = vst [vmem:[%s19 + $0x38] sm:$0xff] %v4390
  %v4400 = vld [vmem:[%s7] sm:$0xff]
  %v4401 = vld [vmem:[%s7 + $0x8] sm:$0xff]
  %v4402 = vld [vmem:[%s7 + $0x10] sm:$0xff]
  %v4403 = vld [vmem:[%s7 + $0x18] sm:$0xff]
  %v4404 = vld [vmem:[%s7 + $0x20] sm:$0xff]
  %v4405 = vld [vmem:[%s7 + $0x28] sm:$0xff]
  %v4406 = vld [vmem:[%s7 + $0x30] sm:$0xff]
  %v4407 = vld [vmem:[%s7 + $0x38] sm:$0xff]
  %v4408 = vld [vmem:[%s7 + $0x40] sm:$0xff]
  %v4409 = vld [vmem:[%s7 + $0x48] sm:$0xff]
  %v4410 = vld [vmem:[%s7 + $0x50] sm:$0xff]
  %v4411 = vld [vmem:[%s7 + $0x58] sm:$0xff]
  %v4412 = vld [vmem:[%s7 + $0x60] sm:$0xff]
  %v4413 = vld [vmem:[%s7 + $0x68] sm:$0xff]
  %v4414 = vld [vmem:[%s7 + $0x70] sm:$0xff]
  %v4415 = vld [vmem:[%s7 + $0x78] sm:$0xff]
  %v4416 = vld [vmem:[%s7 + $0x80] sm:$0xff]
  %v4417 = vld [vmem:[%s7 + $0x88] sm:$0xff]
  %v4418 = vld [vmem:[%s7 + $0x90] sm:$0xff]
  %v4419 = vld [vmem:[%s7 + $0x98] sm:$0xff]
  %v4420 = vld [vmem:[%s7 + $0xa0] sm:$0xff]
  %v4421 = vld [vmem:[%s7 + $0xa8] sm:$0xff]
  %v4422 = vld [vmem:[%s7 + $0xb0] sm:$0xff]
  %v4423 = vld [vmem:[%s7 + $0xb8] sm:$0xff]
  %v4424 = vld [vmem:[%s7 + $0xc0] sm:$0xff]
  %v4425 = vld [vmem:[%s7 + $0xc8] sm:$0xff]
  %v4426 = vld [vmem:[%s7 + $0xd0] sm:$0xff]
  %v4427 = vld [vmem:[%s7 + $0xd8] sm:$0xff]
  %v4428 = vld [vmem:[%s7 + $0xe0] sm:$0xff]
  %v4429 = vld [vmem:[%s7 + $0xe8] sm:$0xff]
  %v4430 = vld [vmem:[%s7 + $0xf0] sm:$0xff]
  %v4431 = vld [vmem:[%s7 + $0xf8] sm:$0xff]
  %v4432 = vmul.f32 %v4081, %v548
  %v4433 = vmul.f32 %v4083, %v549
  %v4434 = vmul.f32 %v4087, %v550
  %v4435 = vmul.f32 %v4089, %v551
  %v4436 = vmul.f32 %v4093, %v548
  %v4437 = vmul.f32 %v4095, %v549
  %v4438 = vmul.f32 %v4099, %v550
  %v4439 = vmul.f32 %v4101, %v551
  %v4440 = vmul.f32 %v4105, %v548
  %v4441 = vmul.f32 %v4107, %v549
  %v4442 = vmul.f32 %v4111, %v550
  %v4443 = vmul.f32 %v4113, %v551
  %v4444 = vmul.f32 %v4117, %v548
  %v4445 = vmul.f32 %v4119, %v549
  %v4446 = vmul.f32 %v4123, %v550
  %v4447 = vmul.f32 %v4125, %v551
  %v4448 = vmul.f32 %v4129, %v548
  %v4449 = vmul.f32 %v4131, %v549
  %v4450 = vmul.f32 %v4135, %v550
  %v4451 = vmul.f32 %v4137, %v551
  %v4452 = vmul.f32 %v4141, %v548
  %v4453 = vmul.f32 %v4143, %v549
  %v4454 = vmul.f32 %v4147, %v550
  %v4455 = vmul.f32 %v4149, %v551
  %v4456 = vmul.f32 %v4153, %v548
  %v4457 = vmul.f32 %v4155, %v549
  %v4458 = vmul.f32 %v4159, %v550
  %v4459 = vmul.f32 %v4161, %v551
  %v4460 = vmul.f32 %v4165, %v548
  %v4461 = vmul.f32 %v4167, %v549
  %v4462 = vmul.f32 %v4171, %v550
  %v4463 = vmul.f32 %v4173, %v551
  %v4464 = vmul.f32 %v4177, %v548
  %v4465 = vmul.f32 %v4179, %v549
  %v4466 = vmul.f32 %v4183, %v550
  %v4467 = vmul.f32 %v4185, %v551
  %v4468 = vmul.f32 %v4189, %v548
  %v4469 = vmul.f32 %v4191, %v549
  %v4470 = vmul.f32 %v4195, %v550
  %v4471 = vmul.f32 %v4197, %v551
  %v4472 = vmul.f32 %v4201, %v548
  %v4473 = vmul.f32 %v4203, %v549
  %v4474 = vmul.f32 %v4207, %v550
  %v4475 = vmul.f32 %v4209, %v551
  %v4476 = vmul.f32 %v4213, %v548
  %v4477 = vmul.f32 %v4215, %v549
  %v4478 = vmul.f32 %v4219, %v550
  %v4479 = vmul.f32 %v4221, %v551
  %v4480 = vmul.f32 %v4225, %v548
  %v4481 = vmul.f32 %v4227, %v549
  %v4482 = vmul.f32 %v4231, %v550
  %v4483 = vmul.f32 %v4233, %v551
  %v4484 = vmul.f32 %v4237, %v548
  %v4485 = vmul.f32 %v4239, %v549
  %v4486 = vmul.f32 %v4243, %v550
  %v4487 = vmul.f32 %v4245, %v551
  %v4488 = vmul.f32 %v4249, %v548
  %v4489 = vmul.f32 %v4251, %v549
  %v4490 = vmul.f32 %v4255, %v550
  %v4491 = vmul.f32 %v4257, %v551
  %v4492 = vmul.f32 %v4261, %v548
  %v4493 = vmul.f32 %v4263, %v549
  %v4494 = vmul.f32 %v4267, %v550
  %v4495 = vmul.f32 %v4269, %v551
  %4496 = vmatprep.subr.mxu0 %v4433
  %4497 = vmatpush1.msra.mxu0 %v4432
  %4498 = vmatprep.subr.mxu0 %v4435
  %4499 = vmatpush1.msra.mxu0 %v4434
  %4500 = vmatprep.subr.mxu0 %v4437
  %4501 = vmatpush1.msra.mxu0 %v4436
  %4502 = vmatprep.subr.mxu0 %v4439
  %4503 = vmatpush1.msra.mxu0 %v4438
  %4504 = vmatprep.subr.mxu0 %v4441
  %4505 = vmatpush1.msra.mxu0 %v4440
  %4506 = vmatprep.subr.mxu0 %v4443
  %4507 = vmatpush1.msra.mxu0 %v4442
  %4508 = vmatprep.subr.mxu0 %v4445
  %4509 = vmatpush1.msra.mxu0 %v4444
  %4510 = vmatprep.subr.mxu0 %v4447
  %4511 = vmatpush1.msra.mxu0 %v4446
  %4512 = vmatprep.subr.mxu0 %v4449
  %4513 = vmatpush1.msra.mxu0 %v4448
  %4514 = vmatprep.subr.mxu0 %v4451
  %4515 = vmatpush1.msra.mxu0 %v4450
  %4516 = vmatprep.subr.mxu0 %v4453
  %4517 = vmatpush1.msra.mxu0 %v4452
  %4518 = vmatprep.subr.mxu0 %v4455
  %4519 = vmatpush1.msra.mxu0 %v4454
  %4520 = vmatprep.subr.mxu0 %v4457
  %4521 = vmatpush1.msra.mxu0 %v4456
  %4522 = vmatprep.subr.mxu0 %v4459
  %4523 = vmatpush1.msra.mxu0 %v4458
  %4524 = vmatprep.subr.mxu0 %v4461
  %4525 = vmatpush1.msra.mxu0 %v4460
  %4526 = vmatprep.subr.mxu0 %v4463
  %4527 = vmatpush1.msra.mxu0 %v4462
  %4528 = vmatprep.subr.mxu0 %v4465
  %4529 = vmatpush1.msra.mxu0 %v4464
  %4530 = vmatprep.subr.mxu0 %v4467
  %4531 = vmatpush1.msra.mxu0 %v4466
  %4532 = vmatprep.subr.mxu0 %v4469
  %4533 = vmatpush1.msra.mxu0 %v4468
  %4534 = vmatprep.subr.mxu0 %v4471
  %4535 = vmatpush1.msra.mxu0 %v4470
  %4536 = vmatprep.subr.mxu0 %v4473
  %4537 = vmatpush1.msra.mxu0 %v4472
  %4538 = vmatprep.subr.mxu0 %v4475
  %4539 = vmatpush1.msra.mxu0 %v4474
  %4540 = vmatprep.subr.mxu0 %v4477
  %4541 = vmatpush1.msra.mxu0 %v4476
  %4542 = vmatprep.subr.mxu0 %v4479
  %4543 = vmatpush1.msra.mxu0 %v4478
  %4544 = vmatprep.subr.mxu0 %v4481
  %4545 = vmatpush1.msra.mxu0 %v4480
  %4546 = vmatprep.subr.mxu0 %v4483
  %4547 = vmatpush1.msra.mxu0 %v4482
  %4548 = vmatprep.subr.mxu0 %v4485
  %4549 = vmatpush1.msra.mxu0 %v4484
  %4550 = vmatprep.subr.mxu0 %v4487
  %4551 = vmatpush1.msra.mxu0 %v4486
  %4552 = vmatprep.subr.mxu0 %v4489
  %4553 = vmatpush1.msra.mxu0 %v4488
  %4554 = vmatprep.subr.mxu0 %v4491
  %4555 = vmatpush1.msra.mxu0 %v4490
  %4556 = vmatprep.subr.mxu0 %v4493
  %4557 = vmatpush1.msra.mxu0 %v4492
  %4558 = vmatprep.subr.mxu0 %v4495
  %4559 = vmatpush1.msra.mxu0 %v4494
  %4560 = vmatprep.mubr.f32.mxu0 %v4401
  %4561 = vmatmul.mubr.f32.gmra.mrb[0].mxu0 %v4400
  %v4562 = vpop.f32.mrb[0].mxu0
  %v4563 = vadd.f32 0.0, %v4562
  %v4564 = vpop.f32.mrb[0].mxu0
  %v4565 = vadd.f32 0.0, %v4564
  %4566 = vmatprep.mubr.f32.mxu0 %v4403
  %4567 = vmatmul.mubr.f32.gmra.mrb[0].mxu0 %v4402
  %v4568 = vpop.f32.mrb[0].mxu0
  %v4569 = vadd.f32 0.0, %v4568
  %v4570 = vpop.f32.mrb[0].mxu0
  %v4571 = vadd.f32 0.0, %v4570
  %4572 = vmatprep.mubr.f32.mxu0 %v4405
  %4573 = vmatmul.mubr.f32.gmra.mrb[0].mxu0 %v4404
  %v4574 = vpop.f32.mrb[0].mxu0
  %v4575 = vadd.f32 0.0, %v4574
  %v4576 = vpop.f32.mrb[0].mxu0
  %v4577 = vadd.f32 0.0, %v4576
  %4578 = vmatprep.mubr.f32.mxu0 %v4407
  %4579 = vmatmul.mubr.f32.gmra.mrb[0].mxu0 %v4406
  %v4580 = vpop.f32.mrb[0].mxu0
  %v4581 = vadd.f32 0.0, %v4580
  %v4582 = vpop.f32.mrb[0].mxu0
  %v4583 = vadd.f32 0.0, %v4582
  %4584 = vmatprep.mubr.f32.mxu0 %v4409
  %4585 = vmatmul.mubr.f32.gmra.mrb[0].mxu0 %v4408
  %v4586 = vpop.f32.mrb[0].mxu0
  %v4587 = vadd.f32 0.0, %v4586
  %v4588 = vpop.f32.mrb[0].mxu0
  %v4589 = vadd.f32 0.0, %v4588
  %4590 = vmatprep.mubr.f32.mxu0 %v4411
  %4591 = vmatmul.mubr.f32.gmra.mrb[0].mxu0 %v4410
  %v4592 = vpop.f32.mrb[0].mxu0
  %v4593 = vadd.f32 0.0, %v4592
  %v4594 = vpop.f32.mrb[0].mxu0
  %v4595 = vadd.f32 0.0, %v4594
  %4596 = vmatprep.mubr.f32.mxu0 %v4413
  %4597 = vmatmul.mubr.f32.gmra.mrb[0].mxu0 %v4412
  %v4598 = vpop.f32.mrb[0].mxu0
  %v4599 = vadd.f32 0.0, %v4598
  %v4600 = vpop.f32.mrb[0].mxu0
  %v4601 = vadd.f32 0.0, %v4600
  %4602 = vmatprep.mubr.f32.mxu0 %v4415
  %4603 = vmatmul.mubr.f32.gmra.mrb[0].mxu0 %v4414
  %v4604 = vpop.f32.mrb[0].mxu0
  %v4605 = vadd.f32 0.0, %v4604
  %v4606 = vpop.f32.mrb[0].mxu0
  %v4607 = vadd.f32 0.0, %v4606
  %4608 = vmatprep.mubr.f32.mxu0 %v4417
  %4609 = vmatmul.mubr.f32.gmra.mrb[0].mxu0 %v4416
  %v4610 = vpop.f32.mrb[0].mxu0
  %v4611 = vadd.f32 0.0, %v4610
  %v4612 = vpop.f32.mrb[0].mxu0
  %v4613 = vadd.f32 0.0, %v4612
  %4614 = vmatprep.mubr.f32.mxu0 %v4419
  %4615 = vmatmul.mubr.f32.gmra.mrb[0].mxu0 %v4418
  %v4616 = vpop.f32.mrb[0].mxu0
  %v4617 = vadd.f32 0.0, %v4616
  %v4618 = vpop.f32.mrb[0].mxu0
  %v4619 = vadd.f32 0.0, %v4618
  %4620 = vmatprep.mubr.f32.mxu0 %v4421
  %4621 = vmatmul.mubr.f32.gmra.mrb[0].mxu0 %v4420
  %v4622 = vpop.f32.mrb[0].mxu0
  %v4623 = vadd.f32 0.0, %v4622
  %v4624 = vpop.f32.mrb[0].mxu0
  %v4625 = vadd.f32 0.0, %v4624
  %4626 = vmatprep.mubr.f32.mxu0 %v4423
  %4627 = vmatmul.mubr.f32.gmra.mrb[0].mxu0 %v4422
  %v4628 = vpop.f32.mrb[0].mxu0
  %v4629 = vadd.f32 0.0, %v4628
  %v4630 = vpop.f32.mrb[0].mxu0
  %v4631 = vadd.f32 0.0, %v4630
  %4632 = vmatprep.mubr.f32.mxu0 %v4425
  %4633 = vmatmul.mubr.f32.gmra.mrb[0].mxu0 %v4424
  %v4634 = vpop.f32.mrb[0].mxu0
  %v4635 = vadd.f32 0.0, %v4634
  %v4636 = vpop.f32.mrb[0].mxu0
  %v4637 = vadd.f32 0.0, %v4636
  %4638 = vmatprep.mubr.f32.mxu0 %v4427
  %4639 = vmatmul.mubr.f32.gmra.mrb[0].mxu0 %v4426
  %v4640 = vpop.f32.mrb[0].mxu0
  %v4641 = vadd.f32 0.0, %v4640
  %v4642 = vpop.f32.mrb[0].mxu0
  %v4643 = vadd.f32 0.0, %v4642
  %4644 = vmatprep.mubr.f32.mxu0 %v4429
  %4645 = vmatmul.mubr.f32.gmra.mrb[0].mxu0 %v4428
  %v4646 = vpop.f32.mrb[0].mxu0
  %v4647 = vadd.f32 0.0, %v4646
  %v4648 = vpop.f32.mrb[0].mxu0
  %v4649 = vadd.f32 0.0, %v4648
  %4650 = vmatprep.mubr.f32.mxu0 %v4431
  %4651 = vmatmul.mubr.f32.gmra.mrb[0].mxu0 %v4430
  %v4652 = vpop.f32.mrb[0].mxu0
  %v4653 = vadd.f32 0.0, %v4652
  %v4654 = vpop.f32.mrb[0].mxu0
  %v4655 = vadd.f32 0.0, %v4654
  %4656 = vdwg.mxu0
  %v4657 = vld [vmem:[%s5] sm:$0xff]
  %v4658 = vld [vmem:[%s5 + $0x8] sm:$0xff]
  %v4659 = vld [vmem:[%s5 + $0x10] sm:$0xff]
  %v4660 = vld [vmem:[%s5 + $0x18] sm:$0xff]
  %v4662 = vsel %vm95, %v4657, 0
  %v4665 = vsel %vm95, %v4658, 0
  %v4668 = vsel %vm95, %v4659, 0
  %v4671 = vsel %vm95, %v4660, 0
  %4673 = vmatprep.subr.mxu0 %v62
  %4674 = vmatpush1.msra.mxu0 %v61
  %4675 = vmatprep.subr.mxu0 %v64
  %4676 = vmatpush1.msra.mxu0 %v63
  %4677 = vmatprep.subr.mxu0 %v66
  %4678 = vmatpush1.msra.mxu0 %v65
  %4679 = vmatprep.subr.mxu0 %v68
  %4680 = vmatpush1.msra.mxu0 %v67
  %4681 = vmatprep.subr.mxu0 0.0
  %4682 = vmatpush1.msra.mxu0 0.0
  %4683 = vmatprep.subr.mxu0 0.0
  %4684 = vmatpush1.msra.mxu0 0.0
  %4685 = vmatprep.subr.mxu0 0.0
  %4686 = vmatpush1.msra.mxu0 0.0
  %4687 = vmatprep.subr.mxu0 0.0
  %4688 = vmatpush1.msra.mxu0 0.0
  %4689 = vmatprep.subr.mxu0 0.0
  %4690 = vmatpush1.msra.mxu0 0.0
  %4691 = vmatprep.subr.mxu0 0.0
  %4692 = vmatpush1.msra.mxu0 0.0
  %4693 = vmatprep.subr.mxu0 0.0
  %4694 = vmatpush1.msra.mxu0 0.0
  %4695 = vmatprep.subr.mxu0 0.0
  %4696 = vmatpush1.msra.mxu0 0.0
  %4697 = vmatprep.subr.mxu0 0.0
  %4698 = vmatpush1.msra.mxu0 0.0
  %4699 = vmatprep.subr.mxu0 0.0
  %4700 = vmatpush1.msra.mxu0 0.0
  %4701 = vmatprep.subr.mxu0 0.0
  %4702 = vmatpush1.msra.mxu0 0.0
  %4703 = vmatprep.subr.mxu0 0.0
  %4704 = vmatpush1.msra.mxu0 0.0
  %4705 = vmatprep.subr.mxu0 0.0
  %4706 = vmatpush1.msra.mxu0 0.0
  %4707 = vmatprep.subr.mxu0 0.0
  %4708 = vmatpush1.msra.mxu0 0.0
  %4709 = vmatprep.subr.mxu0 0.0
  %4710 = vmatpush1.msra.mxu0 0.0
  %4711 = vmatprep.subr.mxu0 0.0
  %4712 = vmatpush1.msra.mxu0 0.0
  %4713 = vmatprep.subr.mxu0 0.0
  %4714 = vmatpush1.msra.mxu0 0.0
  %4715 = vmatprep.subr.mxu0 0.0
  %4716 = vmatpush1.msra.mxu0 0.0
  %4717 = vmatprep.subr.mxu0 0.0
  %4718 = vmatpush1.msra.mxu0 0.0
  %4719 = vmatprep.subr.mxu0 0.0
  %4720 = vmatpush1.msra.mxu0 0.0
  %4721 = vmatprep.subr.mxu0 0.0
  %4722 = vmatpush1.msra.mxu0 0.0
  %4723 = vmatprep.subr.mxu0 0.0
  %4724 = vmatpush1.msra.mxu0 0.0
  %4725 = vmatprep.subr.mxu0 0.0
  %4726 = vmatpush1.msra.mxu0 0.0
  %4727 = vmatprep.subr.mxu0 0.0
  %4728 = vmatpush1.msra.mxu0 0.0
  %4729 = vmatprep.subr.mxu0 0.0
  %4730 = vmatpush1.msra.mxu0 0.0
  %4731 = vmatprep.subr.mxu0 0.0
  %4732 = vmatpush1.msra.mxu0 0.0
  %4733 = vmatprep.subr.mxu0 0.0
  %4734 = vmatpush1.msra.mxu0 0.0
  %4735 = vmatprep.subr.mxu0 0.0
  %4736 = vmatpush1.msra.mxu0 0.0
  %4737 = vmatprep.mubr.f32.mxu0 0.0
  %4738 = vmatmul.mubr.f32.gmra.mrb[0].mxu0 %v4662
  %v4739 = vpop.f32.mrb[0].mxu0
  %v4740 = vadd.f32 0.0, %v4739
  %v4741 = vpop.f32.mrb[0].mxu0
  %v4742 = vadd.f32 0.0, %v4741
  %4743 = vmatprep.mubr.f32.mxu0 0.0
  %4744 = vmatmul.mubr.f32.gmra.mrb[0].mxu0 %v4665
  %v4745 = vpop.f32.mrb[0].mxu0
  %v4746 = vadd.f32 0.0, %v4745
  %v4747 = vpop.f32.mrb[0].mxu0
  %v4748 = vadd.f32 0.0, %v4747
  %4749 = vmatprep.mubr.f32.mxu0 0.0
  %4750 = vmatmul.mubr.f32.gmra.mrb[0].mxu0 %v4668
  %v4751 = vpop.f32.mrb[0].mxu0
  %v4752 = vadd.f32 0.0, %v4751
  %v4753 = vpop.f32.mrb[0].mxu0
  %v4754 = vadd.f32 0.0, %v4753
  %4755 = vmatprep.mubr.f32.mxu0 0.0
  %4756 = vmatmul.mubr.f32.gmra.mrb[0].mxu0 %v4671
  %v4757 = vpop.f32.mrb[0].mxu0
  %v4758 = vadd.f32 0.0, %v4757
  %v4759 = vpop.f32.mrb[0].mxu0
  %v4760 = vadd.f32 0.0, %v4759
  %4761 = vdwg.mxu0
  %v4762 = vld [vmem:[%s6] sm:$0xff]
  %v4763 = vld [vmem:[%s6 + $0x8] sm:$0xff]
  %v4764 = vld [vmem:[%s6 + $0x10] sm:$0xff]
  %v4766 = vsel %vm335, %v4762, 0
  %v4769 = vsel %vm335, %v4763, 0
  %v4772 = vsel %vm335, %v4764, 0
  %4774 = vmatprep.subr.mxu0 %v70
  %4775 = vmatpush1.msra.mxu0 %v69
  %4776 = vmatprep.subr.mxu0 %v377
  %4777 = vmatpush1.msra.mxu0 %v374
  %4778 = vmatprep.subr.mxu0 0.0
  %4779 = vmatpush1.msra.mxu0 0.0
  %4780 = vmatprep.subr.mxu0 0.0
  %4781 = vmatpush1.msra.mxu0 0.0
  %4782 = vmatprep.subr.mxu0 0.0
  %4783 = vmatpush1.msra.mxu0 0.0
  %4784 = vmatprep.subr.mxu0 0.0
  %4785 = vmatpush1.msra.mxu0 0.0
  %4786 = vmatprep.subr.mxu0 0.0
  %4787 = vmatpush1.msra.mxu0 0.0
  %4788 = vmatprep.subr.mxu0 0.0
  %4789 = vmatpush1.msra.mxu0 0.0
  %4790 = vmatprep.subr.mxu0 0.0
  %4791 = vmatpush1.msra.mxu0 0.0
  %4792 = vmatprep.subr.mxu0 0.0
  %4793 = vmatpush1.msra.mxu0 0.0
  %4794 = vmatprep.subr.mxu0 0.0
  %4795 = vmatpush1.msra.mxu0 0.0
  %4796 = vmatprep.subr.mxu0 0.0
  %4797 = vmatpush1.msra.mxu0 0.0
  %4798 = vmatprep.subr.mxu0 0.0
  %4799 = vmatpush1.msra.mxu0 0.0
  %4800 = vmatprep.subr.mxu0 0.0
  %4801 = vmatpush1.msra.mxu0 0.0
  %4802 = vmatprep.subr.mxu0 0.0
  %4803 = vmatpush1.msra.mxu0 0.0
  %4804 = vmatprep.subr.mxu0 0.0
  %4805 = vmatpush1.msra.mxu0 0.0
  %4806 = vmatprep.subr.mxu0 0.0
  %4807 = vmatpush1.msra.mxu0 0.0
  %4808 = vmatprep.subr.mxu0 0.0
  %4809 = vmatpush1.msra.mxu0 0.0
  %4810 = vmatprep.subr.mxu0 0.0
  %4811 = vmatpush1.msra.mxu0 0.0
  %4812 = vmatprep.subr.mxu0 0.0
  %4813 = vmatpush1.msra.mxu0 0.0
  %4814 = vmatprep.subr.mxu0 0.0
  %4815 = vmatpush1.msra.mxu0 0.0
  %4816 = vmatprep.subr.mxu0 0.0
  %4817 = vmatpush1.msra.mxu0 0.0
  %4818 = vmatprep.subr.mxu0 0.0
  %4819 = vmatpush1.msra.mxu0 0.0
  %4820 = vmatprep.subr.mxu0 0.0
  %4821 = vmatpush1.msra.mxu0 0.0
  %4822 = vmatprep.subr.mxu0 0.0
  %4823 = vmatpush1.msra.mxu0 0.0
  %4824 = vmatprep.subr.mxu0 0.0
  %4825 = vmatpush1.msra.mxu0 0.0
  %4826 = vmatprep.subr.mxu0 0.0
  %4827 = vmatpush1.msra.mxu0 0.0
  %4828 = vmatprep.subr.mxu0 0.0
  %4829 = vmatpush1.msra.mxu0 0.0
  %4830 = vmatprep.subr.mxu0 0.0
  %4831 = vmatpush1.msra.mxu0 0.0
  %4832 = vmatprep.subr.mxu0 0.0
  %4833 = vmatpush1.msra.mxu0 0.0
  %4834 = vmatprep.subr.mxu0 0.0
  %4835 = vmatpush1.msra.mxu0 0.0
  %4836 = vmatprep.subr.mxu0 0.0
  %4837 = vmatpush1.msra.mxu0 0.0
  %4838 = vmatprep.mubr.f32.mxu0 0.0
  %4839 = vmatmul.mubr.f32.gmra.mrb[0].mxu0 %v4766
  %v4840 = vpop.f32.mrb[0].mxu0
  %v4841 = vadd.f32 0.0, %v4840
  %v4842 = vpop.f32.mrb[0].mxu0
  %v4843 = vadd.f32 0.0, %v4842
  %4844 = vmatprep.mubr.f32.mxu0 0.0
  %4845 = vmatmul.mubr.f32.gmra.mrb[0].mxu0 %v4769
  %v4846 = vpop.f32.mrb[0].mxu0
  %v4847 = vadd.f32 0.0, %v4846
  %v4848 = vpop.f32.mrb[0].mxu0
  %v4849 = vadd.f32 0.0, %v4848
  %4850 = vmatprep.mubr.f32.mxu0 0.0
  %4851 = vmatmul.mubr.f32.gmra.mrb[0].mxu0 %v4772
  %v4852 = vpop.f32.mrb[0].mxu0
  %v4853 = vadd.f32 0.0, %v4852
  %v4854 = vpop.f32.mrb[0].mxu0
  %v4855 = vadd.f32 0.0, %v4854
  %4856 = vdwg.mxu0
  %v4857 = vand.u32 2147483647, %v4740
  %vm4858 = vcmp.le.f32.partialorder %v4857, 0.7853982
  %vm4859 = vcmp.lt.s32.totalorder %v4740, 0
  %v4860 = vand.u32 %v4740, 2139095040
  %v4861 = vshrl.u32 %v4860, 23
  %v4862 = vsub.s32 %v4861, 127
  %v4863 = vand.u32 2147483647, %v4740
  %v4864 = vand.u32 %v4863, 8388607
  %v4865 = vor.u32 %v4864, 8388608
  %v4866 = vsub.s32 0, %v4865
  %v4867 = vadd.s32 %v4862, 1
  %vm4868 = vcmp.gt.s32.totalorder %v4867, 0
  %v4869 = vsel %vm4868, %v4867, 0
  %v4870 = vshrl.u32 %v4869, 5
  %v4871 = vand.u32 %v4869, 31
  %v4872 = vsub.s32 32, %v4871
  %v4873 = vshrl.u32 683565275, %v4872
  %v4874 = vshll.u32 683565275, %v4871
  %v4875 = vshrl.u32 2475754826, %v4872
  %v4876 = vor.u32 %v4874, %v4875
  %v4877 = vshll.u32 2475754826, %v4871
  %v4878 = vshrl.u32 2131351028, %v4872
  %v4879 = vor.u32 %v4877, %v4878
  %v4880 = vshll.u32 2131351028, %v4871
  %v4881 = vshrl.u32 2102212464, %v4872
  %v4882 = vor.u32 %v4880, %v4881
  %v4883 = vshll.u32 2102212464, %v4871
  %v4884 = vshrl.u32 920167782, %v4872
  %v4885 = vor.u32 %v4883, %v4884
  %v4886 = vshll.u32 920167782, %v4871
  %v4887 = vshrl.u32 1326507024, %v4872
  %v4888 = vor.u32 %v4886, %v4887
  %vm4889 = vcmp.lt.s32.totalorder %v4870, 1
  %vm4890 = vcmp.lt.s32.totalorder %v4870, 2
  %vm4891 = vcmp.lt.s32.totalorder %v4870, 3
  %vm4892 = vcmp.lt.s32.totalorder %v4870, 4
  %v4893 = vsel %vm4889, %v4873, %v4876
  %v4894 = vsel %vm4892, %v4882, 2102212464
  %v4895 = vsel %vm4891, %v4879, %v4894
  %v4896 = vsel %vm4890, %v4893, %v4895
  %v4897 = vsel %vm4889, %v4876, %v4879
  %v4898 = vsel %vm4892, %v4885, 920167782
  %v4899 = vsel %vm4891, %v4882, %v4898
  %v4900 = vsel %vm4890, %v4897, %v4899
  %v4901 = vsel %vm4889, %v4879, %v4882
  %v4902 = vsel %vm4892, %v4888, 1326507024
  %v4903 = vsel %vm4891, %v4885, %v4902
  %v4904 = vsel %vm4890, %v4901, %v4903
  %v4905 = vshll.u32 %v4865, 8
  %v4906 = vmul.u32.u64.compose %v4905, %v4904
  %v4907 = vextract.low.u32 %v4906
  %v4908 = vextract.high.u32 %v4906
  %v4909 = vmul.u32.u64.compose %v4905, %v4900
  %v4910 = vextract.low.u32 %v4909
  %v4911 = vextract.high.u32 %v4909
  %v4912 = vmul.u32 %v4905, %v4896
  %v4913 = vadd.s32 %v4908, %v4910
  %vm4914 = vc.u32 %v4908, %v4910
  %v4915 = vadd.s32 %v4911, 1
  %v4916 = vsel %vm4914, %v4915, %v4911
  %v4917 = vadd.s32 %v4912, %v4916
  %v4918 = vadd.s32 %v4917, 536870912
  %v4919 = vshrl.u32 %v4918, 30
  %v4920 = vshll.u32 %v4919, 30
  %v4921 = vsub.s32 %v4917, %v4920
  %vm4922 = vcmp.lt.s32.totalorder %v4921, 0
  %v4923 = vsub.s32 0, %v4921
  %v4924 = vsel %vm4922, %v4923, %v4921
  %v4925 = vclz %v4924
  %v4926 = vsub.s32 %v4925, 2
  %vm4927 = vcmp.gt.s32.totalorder 0, %v4926
  %v4928 = vsel %vm4927, 0, %v4926
  %v4929 = vsub.s32 32, %v4928
  %v4930 = vshll.u32 %v4921, %v4928
  %v4931 = vshrl.u32 %v4913, %v4929
  %v4932 = vor.u32 %v4930, %v4931
  %v4933 = vsub.s32 4294967266, %v4928
  %v4934 = vadd.s32 %v4933, 127
  %v4935 = vshll.u32 %v4934, 23
  %v4936 = vor.u32 4788187, %v4935
  %v4937 = vand.u32 2147483647, %v4936
  %v4939 = vcvt.s32.f32 %v4932
  %v4940 = vmul.f32 %v4939, %v4937
  %v4941 = vxor.u32 %v4940, 2147483648
  %v4942 = vsel %vm4859, %v4941, %v4940
  %v4943 = vsub.s32 4, %v4919
  %v4944 = vsel %vm4859, %v4943, %v4919
  %v4945 = vsel %vm4858, %v4740, %v4942
  %v4946 = vsel %vm4858, 0, %v4944
  %v4947 = vcosq.f32.pop %v4945
  %v4948 = vsinq.f32.pop %v4945
  %vm4949 = vweird.f32 %v4740
  %v4950 = vand.u32 %v4946, 3
  %vm4951 = vcmp.lt.s32.totalorder %v4950, 2
  %vm4952 = vcmp.eq.s32.totalorder %v4950, 0
  %v4953 = vxor.u32 %v4948, 2147483648
  %v4954 = vsel %vm4952, %v4947, %v4953
  %vm4955 = vcmp.eq.s32.totalorder %v4950, 2
  %v4956 = vxor.u32 %v4947, 2147483648
  %v4957 = vsel %vm4955, %v4956, %v4948
  %v4958 = vsel %vm4951, %v4954, %v4957
  %v4959 = vsel %vm4949, nan, %v4958
  %v4960 = vand.u32 2147483647, %v4742
  %vm4961 = vcmp.le.f32.partialorder %v4960, 0.7853982
  %vm4962 = vcmp.lt.s32.totalorder %v4742, 0
  %v4963 = vand.u32 %v4742, 2139095040
  %v4964 = vshrl.u32 %v4963, 23
  %v4965 = vsub.s32 %v4964, 127
  %v4966 = vand.u32 2147483647, %v4742
  %v4967 = vand.u32 %v4966, 8388607
  %v4968 = vor.u32 %v4967, 8388608
  %v4969 = vsub.s32 0, %v4968
  %v4970 = vadd.s32 %v4965, 1
  %vm4971 = vcmp.gt.s32.totalorder %v4970, 0
  %v4972 = vsel %vm4971, %v4970, 0
  %v4973 = vshrl.u32 %v4972, 5
  %v4974 = vand.u32 %v4972, 31
  %v4975 = vsub.s32 32, %v4974
  %v4976 = vshrl.u32 683565275, %v4975
  %v4977 = vshll.u32 683565275, %v4974
  %v4978 = vshrl.u32 2475754826, %v4975
  %v4979 = vor.u32 %v4977, %v4978
  %v4980 = vshll.u32 2475754826, %v4974
  %v4981 = vshrl.u32 2131351028, %v4975
  %v4982 = vor.u32 %v4980, %v4981
  %v4983 = vshll.u32 2131351028, %v4974
  %v4984 = vshrl.u32 2102212464, %v4975
  %v4985 = vor.u32 %v4983, %v4984
  %v4986 = vshll.u32 2102212464, %v4974
  %v4987 = vshrl.u32 920167782, %v4975
  %v4988 = vor.u32 %v4986, %v4987
  %v4989 = vshll.u32 920167782, %v4974
  %v4990 = vshrl.u32 1326507024, %v4975
  %v4991 = vor.u32 %v4989, %v4990
  %vm4992 = vcmp.lt.s32.totalorder %v4973, 1
  %vm4993 = vcmp.lt.s32.totalorder %v4973, 2
  %vm4994 = vcmp.lt.s32.totalorder %v4973, 3
  %vm4995 = vcmp.lt.s32.totalorder %v4973, 4
  %v4996 = vsel %vm4992, %v4976, %v4979
  %v4997 = vsel %vm4995, %v4985, 2102212464
  %v4998 = vsel %vm4994, %v4982, %v4997
  %v4999 = vsel %vm4993, %v4996, %v4998
  %v5000 = vsel %vm4992, %v4979, %v4982
  %v5001 = vsel %vm4995, %v4988, 920167782
  %v5002 = vsel %vm4994, %v4985, %v5001
  %v5003 = vsel %vm4993, %v5000, %v5002
  %v5004 = vsel %vm4992, %v4982, %v4985
  %v5005 = vsel %vm4995, %v4991, 1326507024
  %v5006 = vsel %vm4994, %v4988, %v5005
  %v5007 = vsel %vm4993, %v5004, %v5006
  %v5008 = vshll.u32 %v4968, 8
  %v5009 = vmul.u32.u64.compose %v5008, %v5007
  %v5010 = vextract.low.u32 %v5009
  %v5011 = vextract.high.u32 %v5009
  %v5012 = vmul.u32.u64.compose %v5008, %v5003
  %v5013 = vextract.low.u32 %v5012
  %v5014 = vextract.high.u32 %v5012
  %v5015 = vmul.u32 %v5008, %v4999
  %v5016 = vadd.s32 %v5011, %v5013
  %vm5017 = vc.u32 %v5011, %v5013
  %v5018 = vadd.s32 %v5014, 1
  %v5019 = vsel %vm5017, %v5018, %v5014
  %v5020 = vadd.s32 %v5015, %v5019
  %v5021 = vadd.s32 %v5020, 536870912
  %v5022 = vshrl.u32 %v5021, 30
  %v5023 = vshll.u32 %v5022, 30
  %v5024 = vsub.s32 %v5020, %v5023
  %vm5025 = vcmp.lt.s32.totalorder %v5024, 0
  %v5026 = vsub.s32 0, %v5024
  %v5027 = vsel %vm5025, %v5026, %v5024
  %v5028 = vclz %v5027
  %v5029 = vsub.s32 %v5028, 2
  %vm5030 = vcmp.gt.s32.totalorder 0, %v5029
  %v5031 = vsel %vm5030, 0, %v5029
  %v5032 = vsub.s32 32, %v5031
  %v5033 = vshll.u32 %v5024, %v5031
  %v5034 = vshrl.u32 %v5016, %v5032
  %v5035 = vor.u32 %v5033, %v5034
  %v5036 = vsub.s32 4294967266, %v5031
  %v5037 = vadd.s32 %v5036, 127
  %v5038 = vshll.u32 %v5037, 23
  %v5039 = vor.u32 4788187, %v5038
  %v5040 = vand.u32 2147483647, %v5039
  %v5042 = vcvt.s32.f32 %v5035
  %v5043 = vmul.f32 %v5042, %v5040
  %v5044 = vxor.u32 %v5043, 2147483648
  %v5045 = vsel %vm4962, %v5044, %v5043
  %v5046 = vsub.s32 4, %v5022
  %v5047 = vsel %vm4962, %v5046, %v5022
  %v5048 = vsel %vm4961, %v4742, %v5045
  %v5049 = vsel %vm4961, 0, %v5047
  %v5050 = vcosq.f32.pop %v5048
  %v5051 = vsinq.f32.pop %v5048
  %vm5052 = vweird.f32 %v4742
  %v5053 = vand.u32 %v5049, 3
  %vm5054 = vcmp.lt.s32.totalorder %v5053, 2
  %vm5055 = vcmp.eq.s32.totalorder %v5053, 0
  %v5056 = vxor.u32 %v5051, 2147483648
  %v5057 = vsel %vm5055, %v5050, %v5056
  %vm5058 = vcmp.eq.s32.totalorder %v5053, 2
  %v5059 = vxor.u32 %v5050, 2147483648
  %v5060 = vsel %vm5058, %v5059, %v5051
  %v5061 = vsel %vm5054, %v5057, %v5060
  %v5062 = vsel %vm5052, nan, %v5061
  %v5063 = vand.u32 2147483647, %v4740
  %vm5064 = vcmp.le.f32.partialorder %v5063, 0.7853982
  %vm5065 = vcmp.lt.s32.totalorder %v4740, 0
  %v5066 = vand.u32 %v4740, 2139095040
  %v5067 = vshrl.u32 %v5066, 23
  %v5068 = vsub.s32 %v5067, 127
  %v5069 = vand.u32 2147483647, %v4740
  %v5070 = vand.u32 %v5069, 8388607
  %v5071 = vor.u32 %v5070, 8388608
  %v5072 = vsub.s32 0, %v5071
  %v5073 = vadd.s32 %v5068, 1
  %vm5074 = vcmp.gt.s32.totalorder %v5073, 0
  %v5075 = vsel %vm5074, %v5073, 0
  %v5076 = vshrl.u32 %v5075, 5
  %v5077 = vand.u32 %v5075, 31
  %v5078 = vsub.s32 32, %v5077
  %v5079 = vshrl.u32 683565275, %v5078
  %v5080 = vshll.u32 683565275, %v5077
  %v5081 = vshrl.u32 2475754826, %v5078
  %v5082 = vor.u32 %v5080, %v5081
  %v5083 = vshll.u32 2475754826, %v5077
  %v5084 = vshrl.u32 2131351028, %v5078
  %v5085 = vor.u32 %v5083, %v5084
  %v5086 = vshll.u32 2131351028, %v5077
  %v5087 = vshrl.u32 2102212464, %v5078
  %v5088 = vor.u32 %v5086, %v5087
  %v5089 = vshll.u32 2102212464, %v5077
  %v5090 = vshrl.u32 920167782, %v5078
  %v5091 = vor.u32 %v5089, %v5090
  %v5092 = vshll.u32 920167782, %v5077
  %v5093 = vshrl.u32 1326507024, %v5078
  %v5094 = vor.u32 %v5092, %v5093
  %vm5095 = vcmp.lt.s32.totalorder %v5076, 1
  %vm5096 = vcmp.lt.s32.totalorder %v5076, 2
  %vm5097 = vcmp.lt.s32.totalorder %v5076, 3
  %vm5098 = vcmp.lt.s32.totalorder %v5076, 4
  %v5099 = vsel %vm5095, %v5079, %v5082
  %v5100 = vsel %vm5098, %v5088, 2102212464
  %v5101 = vsel %vm5097, %v5085, %v5100
  %v5102 = vsel %vm5096, %v5099, %v5101
  %v5103 = vsel %vm5095, %v5082, %v5085
  %v5104 = vsel %vm5098, %v5091, 920167782
  %v5105 = vsel %vm5097, %v5088, %v5104
  %v5106 = vsel %vm5096, %v5103, %v5105
  %v5107 = vsel %vm5095, %v5085, %v5088
  %v5108 = vsel %vm5098, %v5094, 1326507024
  %v5109 = vsel %vm5097, %v5091, %v5108
  %v5110 = vsel %vm5096, %v5107, %v5109
  %v5111 = vshll.u32 %v5071, 8
  %v5112 = vmul.u32.u64.compose %v5111, %v5110
  %v5113 = vextract.low.u32 %v5112
  %v5114 = vextract.high.u32 %v5112
  %v5115 = vmul.u32.u64.compose %v5111, %v5106
  %v5116 = vextract.low.u32 %v5115
  %v5117 = vextract.high.u32 %v5115
  %v5118 = vmul.u32 %v5111, %v5102
  %v5119 = vadd.s32 %v5114, %v5116
  %vm5120 = vc.u32 %v5114, %v5116
  %v5121 = vadd.s32 %v5117, 1
  %v5122 = vsel %vm5120, %v5121, %v5117
  %v5123 = vadd.s32 %v5118, %v5122
  %v5124 = vadd.s32 %v5123, 536870912
  %v5125 = vshrl.u32 %v5124, 30
  %v5126 = vshll.u32 %v5125, 30
  %v5127 = vsub.s32 %v5123, %v5126
  %vm5128 = vcmp.lt.s32.totalorder %v5127, 0
  %v5129 = vsub.s32 0, %v5127
  %v5130 = vsel %vm5128, %v5129, %v5127
  %v5131 = vclz %v5130
  %v5132 = vsub.s32 %v5131, 2
  %vm5133 = vcmp.gt.s32.totalorder 0, %v5132
  %v5134 = vsel %vm5133, 0, %v5132
  %v5135 = vsub.s32 32, %v5134
  %v5136 = vshll.u32 %v5127, %v5134
  %v5137 = vshrl.u32 %v5119, %v5135
  %v5138 = vor.u32 %v5136, %v5137
  %v5139 = vsub.s32 4294967266, %v5134
  %v5140 = vadd.s32 %v5139, 127
  %v5141 = vshll.u32 %v5140, 23
  %v5142 = vor.u32 4788187, %v5141
  %v5143 = vand.u32 2147483647, %v5142
  %v5145 = vcvt.s32.f32 %v5138
  %v5146 = vmul.f32 %v5145, %v5143
  %v5147 = vxor.u32 %v5146, 2147483648
  %v5148 = vsel %vm5065, %v5147, %v5146
  %v5149 = vsub.s32 4, %v5125
  %v5150 = vsel %vm5065, %v5149, %v5125
  %v5151 = vsel %vm5064, %v4740, %v5148
  %v5152 = vsel %vm5064, 0, %v5150
  %v5153 = vcosq.f32.pop %v5151
  %v5154 = vsinq.f32.pop %v5151
  %vm5155 = vweird.f32 %v4740
  %v5156 = vadd.s32 %v5152, 3
  %v5157 = vand.u32 %v5156, 3
  %vm5158 = vcmp.lt.s32.totalorder %v5157, 2
  %vm5159 = vcmp.eq.s32.totalorder %v5157, 0
  %v5160 = vxor.u32 %v5154, 2147483648
  %v5161 = vsel %vm5159, %v5153, %v5160
  %vm5162 = vcmp.eq.s32.totalorder %v5157, 2
  %v5163 = vxor.u32 %v5153, 2147483648
  %v5164 = vsel %vm5162, %v5163, %v5154
  %v5165 = vsel %vm5158, %v5161, %v5164
  %v5166 = vsel %vm5155, nan, %v5165
  %v5167 = vand.u32 2147483647, %v4742
  %vm5168 = vcmp.le.f32.partialorder %v5167, 0.7853982
  %vm5169 = vcmp.lt.s32.totalorder %v4742, 0
  %v5170 = vand.u32 %v4742, 2139095040
  %v5171 = vshrl.u32 %v5170, 23
  %v5172 = vsub.s32 %v5171, 127
  %v5173 = vand.u32 2147483647, %v4742
  %v5174 = vand.u32 %v5173, 8388607
  %v5175 = vor.u32 %v5174, 8388608
  %v5176 = vsub.s32 0, %v5175
  %v5177 = vadd.s32 %v5172, 1
  %vm5178 = vcmp.gt.s32.totalorder %v5177, 0
  %v5179 = vsel %vm5178, %v5177, 0
  %v5180 = vshrl.u32 %v5179, 5
  %v5181 = vand.u32 %v5179, 31
  %v5182 = vsub.s32 32, %v5181
  %v5183 = vshrl.u32 683565275, %v5182
  %v5184 = vshll.u32 683565275, %v5181
  %v5185 = vshrl.u32 2475754826, %v5182
  %v5186 = vor.u32 %v5184, %v5185
  %v5187 = vshll.u32 2475754826, %v5181
  %v5188 = vshrl.u32 2131351028, %v5182
  %v5189 = vor.u32 %v5187, %v5188
  %v5190 = vshll.u32 2131351028, %v5181
  %v5191 = vshrl.u32 2102212464, %v5182
  %v5192 = vor.u32 %v5190, %v5191
  %v5193 = vshll.u32 2102212464, %v5181
  %v5194 = vshrl.u32 920167782, %v5182
  %v5195 = vor.u32 %v5193, %v5194
  %v5196 = vshll.u32 920167782, %v5181
  %v5197 = vshrl.u32 1326507024, %v5182
  %v5198 = vor.u32 %v5196, %v5197
  %vm5199 = vcmp.lt.s32.totalorder %v5180, 1
  %vm5200 = vcmp.lt.s32.totalorder %v5180, 2
  %vm5201 = vcmp.lt.s32.totalorder %v5180, 3
  %vm5202 = vcmp.lt.s32.totalorder %v5180, 4
  %v5203 = vsel %vm5199, %v5183, %v5186
  %v5204 = vsel %vm5202, %v5192, 2102212464
  %v5205 = vsel %vm5201, %v5189, %v5204
  %v5206 = vsel %vm5200, %v5203, %v5205
  %v5207 = vsel %vm5199, %v5186, %v5189
  %v5208 = vsel %vm5202, %v5195, 920167782
  %v5209 = vsel %vm5201, %v5192, %v5208
  %v5210 = vsel %vm5200, %v5207, %v5209
  %v5211 = vsel %vm5199, %v5189, %v5192
  %v5212 = vsel %vm5202, %v5198, 1326507024
  %v5213 = vsel %vm5201, %v5195, %v5212
  %v5214 = vsel %vm5200, %v5211, %v5213
  %v5215 = vshll.u32 %v5175, 8
  %v5216 = vmul.u32.u64.compose %v5215, %v5214
  %v5217 = vextract.low.u32 %v5216
  %v5218 = vextract.high.u32 %v5216
  %v5219 = vmul.u32.u64.compose %v5215, %v5210
  %v5220 = vextract.low.u32 %v5219
  %v5221 = vextract.high.u32 %v5219
  %v5222 = vmul.u32 %v5215, %v5206
  %v5223 = vadd.s32 %v5218, %v5220
  %vm5224 = vc.u32 %v5218, %v5220
  %v5225 = vadd.s32 %v5221, 1
  %v5226 = vsel %vm5224, %v5225, %v5221
  %v5227 = vadd.s32 %v5222, %v5226
  %v5228 = vadd.s32 %v5227, 536870912
  %v5229 = vshrl.u32 %v5228, 30
  %v5230 = vshll.u32 %v5229, 30
  %v5231 = vsub.s32 %v5227, %v5230
  %vm5232 = vcmp.lt.s32.totalorder %v5231, 0
  %v5233 = vsub.s32 0, %v5231
  %v5234 = vsel %vm5232, %v5233, %v5231
  %v5235 = vclz %v5234
  %v5236 = vsub.s32 %v5235, 2
  %vm5237 = vcmp.gt.s32.totalorder 0, %v5236
  %v5238 = vsel %vm5237, 0, %v5236
  %v5239 = vsub.s32 32, %v5238
  %v5240 = vshll.u32 %v5231, %v5238
  %v5241 = vshrl.u32 %v5223, %v5239
  %v5242 = vor.u32 %v5240, %v5241
  %v5243 = vsub.s32 4294967266, %v5238
  %v5244 = vadd.s32 %v5243, 127
  %v5245 = vshll.u32 %v5244, 23
  %v5246 = vor.u32 4788187, %v5245
  %v5247 = vand.u32 2147483647, %v5246
  %v5249 = vcvt.s32.f32 %v5242
  %v5250 = vmul.f32 %v5249, %v5247
  %v5251 = vxor.u32 %v5250, 2147483648
  %v5252 = vsel %vm5169, %v5251, %v5250
  %v5253 = vsub.s32 4, %v5229
  %v5254 = vsel %vm5169, %v5253, %v5229
  %v5255 = vsel %vm5168, %v4742, %v5252
  %v5256 = vsel %vm5168, 0, %v5254
  %v5257 = vcosq.f32.pop %v5255
  %v5258 = vsinq.f32.pop %v5255
  %vm5259 = vweird.f32 %v4742
  %v5260 = vadd.s32 %v5256, 3
  %v5261 = vand.u32 %v5260, 3
  %vm5262 = vcmp.lt.s32.totalorder %v5261, 2
  %vm5263 = vcmp.eq.s32.totalorder %v5261, 0
  %v5264 = vxor.u32 %v5258, 2147483648
  %v5265 = vsel %vm5263, %v5257, %v5264
  %vm5266 = vcmp.eq.s32.totalorder %v5261, 2
  %v5267 = vxor.u32 %v5257, 2147483648
  %v5268 = vsel %vm5266, %v5267, %v5258
  %v5269 = vsel %vm5262, %v5265, %v5268
  %v5270 = vsel %vm5259, nan, %v5269
  %v5271 = vmul.f32 %v4959, %v4746
  %v5272 = vmul.f32 %v5062, %v4748
  %v5273 = vmul.f32 %v5166, %v4752
  %v5274 = vmul.f32 %v5270, %v4754
  %v5275 = vadd.f32 %v5271, %v5273
  %v5276 = vadd.f32 %v5272, %v5274
  %v5277 = vsub.f32 0.0, %v5166
  %v5278 = vsub.f32 0.0, %v5270
  %v5279 = vmul.f32 %v5277, %v4746
  %v5280 = vmul.f32 %v5278, %v4748
  %v5281 = vmul.f32 %v4959, %v4752
  %v5282 = vmul.f32 %v5062, %v4754
  %v5283 = vadd.f32 %v5279, %v5281
  %v5284 = vadd.f32 %v5280, %v5282
  %v5285 = vld [vmem:[%s14] sm:$0xff]
  %v5286 = vld [vmem:[%s14 + $0x8] sm:$0xff]
  %v5287 = vld [vmem:[%s14 + $0x10] sm:$0xff]
  %v5288 = vld [vmem:[%s14 + $0x18] sm:$0xff]
  %v5289 = vld [vmem:[%s14 + $0x20] sm:$0xff]
  %v5290 = vld [vmem:[%s14 + $0x28] sm:$0xff]
  %v5291 = vld [vmem:[%s14 + $0x30] sm:$0xff]
  %v5292 = vld [vmem:[%s14 + $0x38] sm:$0xff]
  %v5293 = vld [vmem:[%s14 + $0x40] sm:$0xff]
  %v5294 = vld [vmem:[%s14 + $0x48] sm:$0xff]
  %v5295 = vld [vmem:[%s14 + $0x50] sm:$0xff]
  %v5296 = vld [vmem:[%s14 + $0x58] sm:$0xff]
  %v5297 = vld [vmem:[%s14 + $0x60] sm:$0xff]
  %v5298 = vld [vmem:[%s14 + $0x68] sm:$0xff]
  %v5299 = vld [vmem:[%s14 + $0x70] sm:$0xff]
  %v5300 = vld [vmem:[%s14 + $0x78] sm:$0xff]
  %v5301 = vld [vmem:[%s14 + $0x80] sm:$0xff]
  %v5302 = vld [vmem:[%s14 + $0x88] sm:$0xff]
  %v5303 = vld [vmem:[%s14 + $0x90] sm:$0xff]
  %v5304 = vld [vmem:[%s14 + $0x98] sm:$0xff]
  %v5305 = vld [vmem:[%s14 + $0xa0] sm:$0xff]
  %v5306 = vld [vmem:[%s14 + $0xa8] sm:$0xff]
  %v5307 = vld [vmem:[%s14 + $0xb0] sm:$0xff]
  %v5308 = vld [vmem:[%s14 + $0xb8] sm:$0xff]
  %v5309 = vld [vmem:[%s14 + $0xc0] sm:$0xff]
  %v5310 = vld [vmem:[%s14 + $0xc8] sm:$0xff]
  %v5311 = vld [vmem:[%s14 + $0xd0] sm:$0xff]
  %v5312 = vld [vmem:[%s14 + $0xd8] sm:$0xff]
  %v5313 = vld [vmem:[%s14 + $0xe0] sm:$0xff]
  %v5314 = vld [vmem:[%s14 + $0xe8] sm:$0xff]
  %v5315 = vld [vmem:[%s14 + $0xf0] sm:$0xff]
  %v5316 = vld [vmem:[%s14 + $0xf8] sm:$0xff]
  %v5317 = vld [vmem:[%s14 + $0x100] sm:$0xff]
  %v5318 = vld [vmem:[%s14 + $0x108] sm:$0xff]
  %v5319 = vld [vmem:[%s14 + $0x110] sm:$0xff]
  %v5320 = vld [vmem:[%s14 + $0x118] sm:$0xff]
  %v5321 = vld [vmem:[%s14 + $0x120] sm:$0xff]
  %v5322 = vld [vmem:[%s14 + $0x128] sm:$0xff]
  %v5323 = vld [vmem:[%s14 + $0x130] sm:$0xff]
  %v5324 = vld [vmem:[%s14 + $0x138] sm:$0xff]
  %v5325 = vld [vmem:[%s14 + $0x140] sm:$0xff]
  %v5326 = vld [vmem:[%s14 + $0x148] sm:$0xff]
  %v5327 = vld [vmem:[%s14 + $0x150] sm:$0xff]
  %v5328 = vld [vmem:[%s14 + $0x158] sm:$0xff]
  %v5329 = vld [vmem:[%s14 + $0x160] sm:$0xff]
  %v5330 = vld [vmem:[%s14 + $0x168] sm:$0xff]
  %v5331 = vld [vmem:[%s14 + $0x170] sm:$0xff]
  %v5332 = vld [vmem:[%s14 + $0x178] sm:$0xff]
  %v5333 = vld [vmem:[%s14 + $0x180] sm:$0xff]
  %v5334 = vld [vmem:[%s14 + $0x188] sm:$0xff]
  %v5335 = vld [vmem:[%s14 + $0x190] sm:$0xff]
  %v5336 = vld [vmem:[%s14 + $0x198] sm:$0xff]
  %v5337 = vld [vmem:[%s14 + $0x1a0] sm:$0xff]
  %v5338 = vld [vmem:[%s14 + $0x1a8] sm:$0xff]
  %v5339 = vld [vmem:[%s14 + $0x1b0] sm:$0xff]
  %v5340 = vld [vmem:[%s14 + $0x1b8] sm:$0xff]
  %v5341 = vld [vmem:[%s14 + $0x1c0] sm:$0xff]
  %v5342 = vld [vmem:[%s14 + $0x1c8] sm:$0xff]
  %v5343 = vld [vmem:[%s14 + $0x1d0] sm:$0xff]
  %v5344 = vld [vmem:[%s14 + $0x1d8] sm:$0xff]
  %v5345 = vld [vmem:[%s14 + $0x1e0] sm:$0xff]
  %v5346 = vld [vmem:[%s14 + $0x1e8] sm:$0xff]
  %v5347 = vld [vmem:[%s14 + $0x1f0] sm:$0xff]
  %v5348 = vld [vmem:[%s14 + $0x1f8] sm:$0xff]
  %v5349 = vld [vmem:[%s15] sm:$0xff]
  %v5350 = vld [vmem:[%s15 + $0x8] sm:$0xff]
  %v5351 = vld [vmem:[%s15 + $0x10] sm:$0xff]
  %v5352 = vld [vmem:[%s15 + $0x18] sm:$0xff]
  %v5353 = vld [vmem:[%s15 + $0x20] sm:$0xff]
  %v5354 = vld [vmem:[%s15 + $0x28] sm:$0xff]
  %v5355 = vld [vmem:[%s15 + $0x30] sm:$0xff]
  %v5356 = vld [vmem:[%s15 + $0x38] sm:$0xff]
  %v5357 = vld [vmem:[%s15 + $0x40] sm:$0xff]
  %v5358 = vld [vmem:[%s15 + $0x48] sm:$0xff]
  %v5359 = vld [vmem:[%s15 + $0x50] sm:$0xff]
  %v5360 = vld [vmem:[%s15 + $0x58] sm:$0xff]
  %v5361 = vld [vmem:[%s15 + $0x60] sm:$0xff]
  %v5362 = vld [vmem:[%s15 + $0x68] sm:$0xff]
  %v5363 = vld [vmem:[%s15 + $0x70] sm:$0xff]
  %v5364 = vld [vmem:[%s15 + $0x78] sm:$0xff]
  %v5365 = vld [vmem:[%s15 + $0x80] sm:$0xff]
  %v5366 = vld [vmem:[%s15 + $0x88] sm:$0xff]
  %v5367 = vld [vmem:[%s15 + $0x90] sm:$0xff]
  %v5368 = vld [vmem:[%s15 + $0x98] sm:$0xff]
  %v5369 = vld [vmem:[%s15 + $0xa0] sm:$0xff]
  %v5370 = vld [vmem:[%s15 + $0xa8] sm:$0xff]
  %v5371 = vld [vmem:[%s15 + $0xb0] sm:$0xff]
  %v5372 = vld [vmem:[%s15 + $0xb8] sm:$0xff]
  %v5373 = vld [vmem:[%s15 + $0xc0] sm:$0xff]
  %v5374 = vld [vmem:[%s15 + $0xc8] sm:$0xff]
  %v5375 = vld [vmem:[%s15 + $0xd0] sm:$0xff]
  %v5376 = vld [vmem:[%s15 + $0xd8] sm:$0xff]
  %v5377 = vld [vmem:[%s15 + $0xe0] sm:$0xff]
  %v5378 = vld [vmem:[%s15 + $0xe8] sm:$0xff]
  %v5379 = vld [vmem:[%s15 + $0xf0] sm:$0xff]
  %v5380 = vld [vmem:[%s15 + $0xf8] sm:$0xff]
  %5382 = vset.pattern.permute.xlu0 0
  %5383 = vperm.xlu0 %5382, %v5349
  %v5384 = vpop.permute.xlu0 %5383
  %5387 = vset.pattern.permute.xlu0 0
  %5388 = vperm.xlu0 %5387, %v5350
  %v5389 = vpop.permute.xlu0 %5388
  %5392 = vset.pattern.permute.xlu0 0
  %5393 = vperm.xlu0 %5392, %v5351
  %v5394 = vpop.permute.xlu0 %5393
  %5397 = vset.pattern.permute.xlu0 0
  %5398 = vperm.xlu0 %5397, %v5352
  %v5399 = vpop.permute.xlu0 %5398
  %5402 = vset.pattern.permute.xlu0 0
  %5403 = vperm.xlu0 %5402, %v5353
  %v5404 = vpop.permute.xlu0 %5403
  %5407 = vset.pattern.permute.xlu0 0
  %5408 = vperm.xlu0 %5407, %v5354
  %v5409 = vpop.permute.xlu0 %5408
  %5412 = vset.pattern.permute.xlu0 0
  %5413 = vperm.xlu0 %5412, %v5355
  %v5414 = vpop.permute.xlu0 %5413
  %5417 = vset.pattern.permute.xlu0 0
  %5418 = vperm.xlu0 %5417, %v5356
  %v5419 = vpop.permute.xlu0 %5418
  %5422 = vset.pattern.permute.xlu0 0
  %5423 = vperm.xlu0 %5422, %v5357
  %v5424 = vpop.permute.xlu0 %5423
  %5427 = vset.pattern.permute.xlu0 0
  %5428 = vperm.xlu0 %5427, %v5358
  %v5429 = vpop.permute.xlu0 %5428
  %5432 = vset.pattern.permute.xlu0 0
  %5433 = vperm.xlu0 %5432, %v5359
  %v5434 = vpop.permute.xlu0 %5433
  %5437 = vset.pattern.permute.xlu0 0
  %5438 = vperm.xlu0 %5437, %v5360
  %v5439 = vpop.permute.xlu0 %5438
  %5442 = vset.pattern.permute.xlu0 0
  %5443 = vperm.xlu0 %5442, %v5361
  %v5444 = vpop.permute.xlu0 %5443
  %5447 = vset.pattern.permute.xlu0 0
  %5448 = vperm.xlu0 %5447, %v5362
  %v5449 = vpop.permute.xlu0 %5448
  %5452 = vset.pattern.permute.xlu0 0
  %5453 = vperm.xlu0 %5452, %v5363
  %v5454 = vpop.permute.xlu0 %5453
  %5457 = vset.pattern.permute.xlu0 0
  %5458 = vperm.xlu0 %5457, %v5364
  %v5459 = vpop.permute.xlu0 %5458
  %5462 = vset.pattern.permute.xlu0 0
  %5463 = vperm.xlu0 %5462, %v5365
  %v5464 = vpop.permute.xlu0 %5463
  %5467 = vset.pattern.permute.xlu0 0
  %5468 = vperm.xlu0 %5467, %v5366
  %v5469 = vpop.permute.xlu0 %5468
  %5472 = vset.pattern.permute.xlu0 0
  %5473 = vperm.xlu0 %5472, %v5367
  %v5474 = vpop.permute.xlu0 %5473
  %5477 = vset.pattern.permute.xlu0 0
  %5478 = vperm.xlu0 %5477, %v5368
  %v5479 = vpop.permute.xlu0 %5478
  %5482 = vset.pattern.permute.xlu0 0
  %5483 = vperm.xlu0 %5482, %v5369
  %v5484 = vpop.permute.xlu0 %5483
  %5487 = vset.pattern.permute.xlu0 0
  %5488 = vperm.xlu0 %5487, %v5370
  %v5489 = vpop.permute.xlu0 %5488
  %5492 = vset.pattern.permute.xlu0 0
  %5493 = vperm.xlu0 %5492, %v5371
  %v5494 = vpop.permute.xlu0 %5493
  %5497 = vset.pattern.permute.xlu0 0
  %5498 = vperm.xlu0 %5497, %v5372
  %v5499 = vpop.permute.xlu0 %5498
  %5502 = vset.pattern.permute.xlu0 0
  %5503 = vperm.xlu0 %5502, %v5373
  %v5504 = vpop.permute.xlu0 %5503
  %5507 = vset.pattern.permute.xlu0 0
  %5508 = vperm.xlu0 %5507, %v5374
  %v5509 = vpop.permute.xlu0 %5508
  %5512 = vset.pattern.permute.xlu0 0
  %5513 = vperm.xlu0 %5512, %v5375
  %v5514 = vpop.permute.xlu0 %5513
  %5517 = vset.pattern.permute.xlu0 0
  %5518 = vperm.xlu0 %5517, %v5376
  %v5519 = vpop.permute.xlu0 %5518
  %5522 = vset.pattern.permute.xlu0 0
  %5523 = vperm.xlu0 %5522, %v5377
  %v5524 = vpop.permute.xlu0 %5523
  %5527 = vset.pattern.permute.xlu0 0
  %5528 = vperm.xlu0 %5527, %v5378
  %v5529 = vpop.permute.xlu0 %5528
  %5532 = vset.pattern.permute.xlu0 0
  %5533 = vperm.xlu0 %5532, %v5379
  %v5534 = vpop.permute.xlu0 %5533
  %5537 = vset.pattern.permute.xlu0 0
  %5538 = vperm.xlu0 %5537, %v5380
  %v5539 = vpop.permute.xlu0 %5538
  %vm5541 = vcmask 392192
  %v5543 = vsel %vm5541, %v5286, 0
  %v5546 = vsel %vm5541, %v5288, 0
  %v5549 = vsel %vm5541, %v5290, 0
  %v5552 = vsel %vm5541, %v5292, 0
  %v5555 = vsel %vm5541, %v5294, 0
  %v5558 = vsel %vm5541, %v5296, 0
  %v5561 = vsel %vm5541, %v5298, 0
  %v5564 = vsel %vm5541, %v5300, 0
  %v5567 = vsel %vm5541, %v5302, 0
  %v5570 = vsel %vm5541, %v5304, 0
  %v5573 = vsel %vm5541, %v5306, 0
  %v5576 = vsel %vm5541, %v5308, 0
  %v5579 = vsel %vm5541, %v5310, 0
  %v5582 = vsel %vm5541, %v5312, 0
  %v5585 = vsel %vm5541, %v5314, 0
  %v5588 = vsel %vm5541, %v5316, 0
  %v5591 = vsel %vm5541, %v5318, 0
  %v5594 = vsel %vm5541, %v5320, 0
  %v5597 = vsel %vm5541, %v5322, 0
  %v5600 = vsel %vm5541, %v5324, 0
  %v5603 = vsel %vm5541, %v5326, 0
  %v5606 = vsel %vm5541, %v5328, 0
  %v5609 = vsel %vm5541, %v5330, 0
  %v5612 = vsel %vm5541, %v5332, 0
  %v5615 = vsel %vm5541, %v5334, 0
  %v5618 = vsel %vm5541, %v5336, 0
  %v5621 = vsel %vm5541, %v5338, 0
  %v5624 = vsel %vm5541, %v5340, 0
  %v5627 = vsel %vm5541, %v5342, 0
  %v5630 = vsel %vm5541, %v5344, 0
  %v5633 = vsel %vm5541, %v5346, 0
  %v5636 = vsel %vm5541, %v5348, 0
  %5638 = vmatprep.subr.mxu0 %v5276
  %5639 = vmatpush1.msra.mxu0 %v5275
  %5640 = vmatprep.subr.mxu0 %v5284
  %5641 = vmatpush1.msra.mxu0 %v5283
  %5642 = vmatprep.subr.mxu0 %v4760
  %5643 = vmatpush1.msra.mxu0 %v4758
  %5644 = vmatprep.subr.mxu0 %v4843
  %5645 = vmatpush1.msra.mxu0 %v4841
  %5646 = vmatprep.subr.mxu0 %v4849
  %5647 = vmatpush1.msra.mxu0 %v4847
  %5648 = vmatprep.subr.mxu0 %v4855
  %5649 = vmatpush1.msra.mxu0 %v4853
  %5650 = vmatprep.subr.mxu0 %v4565
  %5651 = vmatpush1.msra.mxu0 %v4563
  %5652 = vmatprep.subr.mxu0 %v4571
  %5653 = vmatpush1.msra.mxu0 %v4569
  %5654 = vmatprep.subr.mxu0 %v4577
  %5655 = vmatpush1.msra.mxu0 %v4575
  %5656 = vmatprep.subr.mxu0 %v4583
  %5657 = vmatpush1.msra.mxu0 %v4581
  %5658 = vmatprep.subr.mxu0 %v4589
  %5659 = vmatpush1.msra.mxu0 %v4587
  %5660 = vmatprep.subr.mxu0 %v4595
  %5661 = vmatpush1.msra.mxu0 %v4593
  %5662 = vmatprep.subr.mxu0 %v4601
  %5663 = vmatpush1.msra.mxu0 %v4599
  %5664 = vmatprep.subr.mxu0 %v4607
  %5665 = vmatpush1.msra.mxu0 %v4605
  %5666 = vmatprep.subr.mxu0 %v4613
  %5667 = vmatpush1.msra.mxu0 %v4611
  %5668 = vmatprep.subr.mxu0 %v4619
  %5669 = vmatpush1.msra.mxu0 %v4617
  %5670 = vmatprep.subr.mxu0 %v4625
  %5671 = vmatpush1.msra.mxu0 %v4623
  %5672 = vmatprep.subr.mxu0 %v4631
  %5673 = vmatpush1.msra.mxu0 %v4629
  %5674 = vmatprep.subr.mxu0 %v4637
  %5675 = vmatpush1.msra.mxu0 %v4635
  %5676 = vmatprep.subr.mxu0 %v4643
  %5677 = vmatpush1.msra.mxu0 %v4641
  %5678 = vmatprep.subr.mxu0 %v4649
  %5679 = vmatpush1.msra.mxu0 %v4647
  %5680 = vmatprep.subr.mxu0 %v4655
  %5681 = vmatpush1.msra.mxu0 %v4653
  %5682 = vmatprep.subr.mxu0 0.0
  %5683 = vmatpush1.msra.mxu0 0.0
  %5684 = vmatprep.subr.mxu0 0.0
  %5685 = vmatpush1.msra.mxu0 0.0
  %5686 = vmatprep.subr.mxu0 0.0
  %5687 = vmatpush1.msra.mxu0 0.0
  %5688 = vmatprep.subr.mxu0 0.0
  %5689 = vmatpush1.msra.mxu0 0.0
  %5690 = vmatprep.subr.mxu0 0.0
  %5691 = vmatpush1.msra.mxu0 0.0
  %5692 = vmatprep.subr.mxu0 0.0
  %5693 = vmatpush1.msra.mxu0 0.0
  %5694 = vmatprep.subr.mxu0 0.0
  %5695 = vmatpush1.msra.mxu0 0.0
  %5696 = vmatprep.subr.mxu0 0.0
  %5697 = vmatpush1.msra.mxu0 0.0
  %5698 = vmatprep.subr.mxu0 0.0
  %5699 = vmatpush1.msra.mxu0 0.0
  %5700 = vmatprep.subr.mxu0 0.0
  %5701 = vmatpush1.msra.mxu0 0.0
  %5702 = vmatprep.mubr.f32.mxu0 %v5543
  %5703 = vmatmul.mubr.f32.gmra.mrb[0].mxu0 %v5285
  %v5704 = vpop.f32.mrb[0].mxu0
  %v5705 = vadd.f32 %v5384, %v5704
  %v5706 = vpop.f32.mrb[0].mxu0
  %v5707 = vadd.f32 %v5384, %v5706
  %5708 = vmatprep.mubr.f32.mxu0 %v5546
  %5709 = vmatmul.mubr.f32.gmra.mrb[0].mxu0 %v5287
  %v5710 = vpop.f32.mrb[0].mxu0
  %v5711 = vadd.f32 %v5389, %v5710
  %v5712 = vpop.f32.mrb[0].mxu0
  %v5713 = vadd.f32 %v5389, %v5712
  %5714 = vmatprep.mubr.f32.mxu0 %v5549
  %5715 = vmatmul.mubr.f32.gmra.mrb[0].mxu0 %v5289
  %v5716 = vpop.f32.mrb[0].mxu0
  %v5717 = vadd.f32 %v5394, %v5716
  %v5718 = vpop.f32.mrb[0].mxu0
  %v5719 = vadd.f32 %v5394, %v5718
  %5720 = vmatprep.mubr.f32.mxu0 %v5552
  %5721 = vmatmul.mubr.f32.gmra.mrb[0].mxu0 %v5291
  %v5722 = vpop.f32.mrb[0].mxu0
  %v5723 = vadd.f32 %v5399, %v5722
  %v5724 = vpop.f32.mrb[0].mxu0
  %v5725 = vadd.f32 %v5399, %v5724
  %5726 = vmatprep.mubr.f32.mxu0 %v5555
  %5727 = vmatmul.mubr.f32.gmra.mrb[0].mxu0 %v5293
  %v5728 = vpop.f32.mrb[0].mxu0
  %v5729 = vadd.f32 %v5404, %v5728
  %v5730 = vpop.f32.mrb[0].mxu0
  %v5731 = vadd.f32 %v5404, %v5730
  %5732 = vmatprep.mubr.f32.mxu0 %v5558
  %5733 = vmatmul.mubr.f32.gmra.mrb[0].mxu0 %v5295
  %v5734 = vpop.f32.mrb[0].mxu0
  %v5735 = vadd.f32 %v5409, %v5734
  %v5736 = vpop.f32.mrb[0].mxu0
  %v5737 = vadd.f32 %v5409, %v5736
  %5738 = vmatprep.mubr.f32.mxu0 %v5561
  %5739 = vmatmul.mubr.f32.gmra.mrb[0].mxu0 %v5297
  %v5740 = vpop.f32.mrb[0].mxu0
  %v5741 = vadd.f32 %v5414, %v5740
  %v5742 = vpop.f32.mrb[0].mxu0
  %v5743 = vadd.f32 %v5414, %v5742
  %5744 = vmatprep.mubr.f32.mxu0 %v5564
  %5745 = vmatmul.mubr.f32.gmra.mrb[0].mxu0 %v5299
  %v5746 = vpop.f32.mrb[0].mxu0
  %v5747 = vadd.f32 %v5419, %v5746
  %v5748 = vpop.f32.mrb[0].mxu0
  %v5749 = vadd.f32 %v5419, %v5748
  %5750 = vmatprep.mubr.f32.mxu0 %v5567
  %5751 = vmatmul.mubr.f32.gmra.mrb[0].mxu0 %v5301
  %v5752 = vpop.f32.mrb[0].mxu0
  %v5753 = vadd.f32 %v5424, %v5752
  %v5754 = vpop.f32.mrb[0].mxu0
  %v5755 = vadd.f32 %v5424, %v5754
  %5756 = vmatprep.mubr.f32.mxu0 %v5570
  %5757 = vmatmul.mubr.f32.gmra.mrb[0].mxu0 %v5303
  %v5758 = vpop.f32.mrb[0].mxu0
  %v5759 = vadd.f32 %v5429, %v5758
  %v5760 = vpop.f32.mrb[0].mxu0
  %v5761 = vadd.f32 %v5429, %v5760
  %5762 = vmatprep.mubr.f32.mxu0 %v5573
  %5763 = vmatmul.mubr.f32.gmra.mrb[0].mxu0 %v5305
  %v5764 = vpop.f32.mrb[0].mxu0
  %v5765 = vadd.f32 %v5434, %v5764
  %v5766 = vpop.f32.mrb[0].mxu0
  %v5767 = vadd.f32 %v5434, %v5766
  %5768 = vmatprep.mubr.f32.mxu0 %v5576
  %5769 = vmatmul.mubr.f32.gmra.mrb[0].mxu0 %v5307
  %v5770 = vpop.f32.mrb[0].mxu0
  %v5771 = vadd.f32 %v5439, %v5770
  %v5772 = vpop.f32.mrb[0].mxu0
  %v5773 = vadd.f32 %v5439, %v5772
  %5774 = vmatprep.mubr.f32.mxu0 %v5579
  %5775 = vmatmul.mubr.f32.gmra.mrb[0].mxu0 %v5309
  %v5776 = vpop.f32.mrb[0].mxu0
  %v5777 = vadd.f32 %v5444, %v5776
  %v5778 = vpop.f32.mrb[0].mxu0
  %v5779 = vadd.f32 %v5444, %v5778
  %5780 = vmatprep.mubr.f32.mxu0 %v5582
  %5781 = vmatmul.mubr.f32.gmra.mrb[0].mxu0 %v5311
  %v5782 = vpop.f32.mrb[0].mxu0
  %v5783 = vadd.f32 %v5449, %v5782
  %v5784 = vpop.f32.mrb[0].mxu0
  %v5785 = vadd.f32 %v5449, %v5784
  %5786 = vmatprep.mubr.f32.mxu0 %v5585
  %5787 = vmatmul.mubr.f32.gmra.mrb[0].mxu0 %v5313
  %v5788 = vpop.f32.mrb[0].mxu0
  %v5789 = vadd.f32 %v5454, %v5788
  %v5790 = vpop.f32.mrb[0].mxu0
  %v5791 = vadd.f32 %v5454, %v5790
  %5792 = vmatprep.mubr.f32.mxu0 %v5588
  %5793 = vmatmul.mubr.f32.gmra.mrb[0].mxu0 %v5315
  %v5794 = vpop.f32.mrb[0].mxu0
  %v5795 = vadd.f32 %v5459, %v5794
  %v5796 = vpop.f32.mrb[0].mxu0
  %v5797 = vadd.f32 %v5459, %v5796
  %5798 = vmatprep.mubr.f32.mxu0 %v5591
  %5799 = vmatmul.mubr.f32.gmra.mrb[0].mxu0 %v5317
  %v5800 = vpop.f32.mrb[0].mxu0
  %v5801 = vadd.f32 %v5464, %v5800
  %v5802 = vpop.f32.mrb[0].mxu0
  %v5803 = vadd.f32 %v5464, %v5802
  %5804 = vmatprep.mubr.f32.mxu0 %v5594
  %5805 = vmatmul.mubr.f32.gmra.mrb[0].mxu0 %v5319
  %v5806 = vpop.f32.mrb[0].mxu0
  %v5807 = vadd.f32 %v5469, %v5806
  %v5808 = vpop.f32.mrb[0].mxu0
  %v5809 = vadd.f32 %v5469, %v5808
  %5810 = vmatprep.mubr.f32.mxu0 %v5597
  %5811 = vmatmul.mubr.f32.gmra.mrb[0].mxu0 %v5321
  %v5812 = vpop.f32.mrb[0].mxu0
  %v5813 = vadd.f32 %v5474, %v5812
  %v5814 = vpop.f32.mrb[0].mxu0
  %v5815 = vadd.f32 %v5474, %v5814
  %5816 = vmatprep.mubr.f32.mxu0 %v5600
  %5817 = vmatmul.mubr.f32.gmra.mrb[0].mxu0 %v5323
  %v5818 = vpop.f32.mrb[0].mxu0
  %v5819 = vadd.f32 %v5479, %v5818
  %v5820 = vpop.f32.mrb[0].mxu0
  %v5821 = vadd.f32 %v5479, %v5820
  %5822 = vmatprep.mubr.f32.mxu0 %v5603
  %5823 = vmatmul.mubr.f32.gmra.mrb[0].mxu0 %v5325
  %v5824 = vpop.f32.mrb[0].mxu0
  %v5825 = vadd.f32 %v5484, %v5824
  %v5826 = vpop.f32.mrb[0].mxu0
  %v5827 = vadd.f32 %v5484, %v5826
  %5828 = vmatprep.mubr.f32.mxu0 %v5606
  %5829 = vmatmul.mubr.f32.gmra.mrb[0].mxu0 %v5327
  %v5830 = vpop.f32.mrb[0].mxu0
  %v5831 = vadd.f32 %v5489, %v5830
  %v5832 = vpop.f32.mrb[0].mxu0
  %v5833 = vadd.f32 %v5489, %v5832
  %5834 = vmatprep.mubr.f32.mxu0 %v5609
  %5835 = vmatmul.mubr.f32.gmra.mrb[0].mxu0 %v5329
  %v5836 = vpop.f32.mrb[0].mxu0
  %v5837 = vadd.f32 %v5494, %v5836
  %v5838 = vpop.f32.mrb[0].mxu0
  %v5839 = vadd.f32 %v5494, %v5838
  %5840 = vmatprep.mubr.f32.mxu0 %v5612
  %5841 = vmatmul.mubr.f32.gmra.mrb[0].mxu0 %v5331
  %v5842 = vpop.f32.mrb[0].mxu0
  %v5843 = vadd.f32 %v5499, %v5842
  %v5844 = vpop.f32.mrb[0].mxu0
  %v5845 = vadd.f32 %v5499, %v5844
  %5846 = vmatprep.mubr.f32.mxu0 %v5615
  %5847 = vmatmul.mubr.f32.gmra.mrb[0].mxu0 %v5333
  %v5848 = vpop.f32.mrb[0].mxu0
  %v5849 = vadd.f32 %v5504, %v5848
  %v5850 = vpop.f32.mrb[0].mxu0
  %v5851 = vadd.f32 %v5504, %v5850
  %5852 = vmatprep.mubr.f32.mxu0 %v5618
  %5853 = vmatmul.mubr.f32.gmra.mrb[0].mxu0 %v5335
  %v5854 = vpop.f32.mrb[0].mxu0
  %v5855 = vadd.f32 %v5509, %v5854
  %v5856 = vpop.f32.mrb[0].mxu0
  %v5857 = vadd.f32 %v5509, %v5856
  %5858 = vmatprep.mubr.f32.mxu0 %v5621
  %5859 = vmatmul.mubr.f32.gmra.mrb[0].mxu0 %v5337
  %v5860 = vpop.f32.mrb[0].mxu0
  %v5861 = vadd.f32 %v5514, %v5860
  %v5862 = vpop.f32.mrb[0].mxu0
  %v5863 = vadd.f32 %v5514, %v5862
  %5864 = vmatprep.mubr.f32.mxu0 %v5624
  %5865 = vmatmul.mubr.f32.gmra.mrb[0].mxu0 %v5339
  %v5866 = vpop.f32.mrb[0].mxu0
  %v5867 = vadd.f32 %v5519, %v5866
  %v5868 = vpop.f32.mrb[0].mxu0
  %v5869 = vadd.f32 %v5519, %v5868
  %5870 = vmatprep.mubr.f32.mxu0 %v5627
  %5871 = vmatmul.mubr.f32.gmra.mrb[0].mxu0 %v5341
  %v5872 = vpop.f32.mrb[0].mxu0
  %v5873 = vadd.f32 %v5524, %v5872
  %v5874 = vpop.f32.mrb[0].mxu0
  %v5875 = vadd.f32 %v5524, %v5874
  %5876 = vmatprep.mubr.f32.mxu0 %v5630
  %5877 = vmatmul.mubr.f32.gmra.mrb[0].mxu0 %v5343
  %v5878 = vpop.f32.mrb[0].mxu0
  %v5879 = vadd.f32 %v5529, %v5878
  %v5880 = vpop.f32.mrb[0].mxu0
  %v5881 = vadd.f32 %v5529, %v5880
  %5882 = vmatprep.mubr.f32.mxu0 %v5633
  %5883 = vmatmul.mubr.f32.gmra.mrb[0].mxu0 %v5345
  %v5884 = vpop.f32.mrb[0].mxu0
  %v5885 = vadd.f32 %v5534, %v5884
  %v5886 = vpop.f32.mrb[0].mxu0
  %v5887 = vadd.f32 %v5534, %v5886
  %5888 = vmatprep.mubr.f32.mxu0 %v5636
  %5889 = vmatmul.mubr.f32.gmra.mrb[0].mxu0 %v5347
  %v5890 = vpop.f32.mrb[0].mxu0
  %v5891 = vadd.f32 %v5539, %v5890
  %v5892 = vpop.f32.mrb[0].mxu0
  %v5893 = vadd.f32 %v5539, %v5892
  %5894 = vdwg.mxu0
  %v5895 = vmax.f32 %v5705, 0.0
  %v5896 = vmax.f32 %v5707, 0.0
  %v5897 = vmax.f32 %v5711, 0.0
  %v5898 = vmax.f32 %v5713, 0.0
  %v5899 = vmax.f32 %v5717, 0.0
  %v5900 = vmax.f32 %v5719, 0.0
  %v5901 = vmax.f32 %v5723, 0.0
  %v5902 = vmax.f32 %v5725, 0.0
  %v5903 = vmax.f32 %v5729, 0.0
  %v5904 = vmax.f32 %v5731, 0.0
  %v5905 = vmax.f32 %v5735, 0.0
  %v5906 = vmax.f32 %v5737, 0.0
  %v5907 = vmax.f32 %v5741, 0.0
  %v5908 = vmax.f32 %v5743, 0.0
  %v5909 = vmax.f32 %v5747, 0.0
  %v5910 = vmax.f32 %v5749, 0.0
  %v5911 = vmax.f32 %v5753, 0.0
  %v5912 = vmax.f32 %v5755, 0.0
  %v5913 = vmax.f32 %v5759, 0.0
  %v5914 = vmax.f32 %v5761, 0.0
  %v5915 = vmax.f32 %v5765, 0.0
  %v5916 = vmax.f32 %v5767, 0.0
  %v5917 = vmax.f32 %v5771, 0.0
  %v5918 = vmax.f32 %v5773, 0.0
  %v5919 = vmax.f32 %v5777, 0.0
  %v5920 = vmax.f32 %v5779, 0.0
  %v5921 = vmax.f32 %v5783, 0.0
  %v5922 = vmax.f32 %v5785, 0.0
  %v5923 = vmax.f32 %v5789, 0.0
  %v5924 = vmax.f32 %v5791, 0.0
  %v5925 = vmax.f32 %v5795, 0.0
  %v5926 = vmax.f32 %v5797, 0.0
  %v5927 = vmax.f32 %v5801, 0.0
  %v5928 = vmax.f32 %v5803, 0.0
  %v5929 = vmax.f32 %v5807, 0.0
  %v5930 = vmax.f32 %v5809, 0.0
  %v5931 = vmax.f32 %v5813, 0.0
  %v5932 = vmax.f32 %v5815, 0.0
  %v5933 = vmax.f32 %v5819, 0.0
  %v5934 = vmax.f32 %v5821, 0.0
  %v5935 = vmax.f32 %v5825, 0.0
  %v5936 = vmax.f32 %v5827, 0.0
  %v5937 = vmax.f32 %v5831, 0.0
  %v5938 = vmax.f32 %v5833, 0.0
  %v5939 = vmax.f32 %v5837, 0.0
  %v5940 = vmax.f32 %v5839, 0.0
  %v5941 = vmax.f32 %v5843, 0.0
  %v5942 = vmax.f32 %v5845, 0.0
  %v5943 = vmax.f32 %v5849, 0.0
  %v5944 = vmax.f32 %v5851, 0.0
  %v5945 = vmax.f32 %v5855, 0.0
  %v5946 = vmax.f32 %v5857, 0.0
  %v5947 = vmax.f32 %v5861, 0.0
  %v5948 = vmax.f32 %v5863, 0.0
  %v5949 = vmax.f32 %v5867, 0.0
  %v5950 = vmax.f32 %v5869, 0.0
  %v5951 = vmax.f32 %v5873, 0.0
  %v5952 = vmax.f32 %v5875, 0.0
  %v5953 = vmax.f32 %v5879, 0.0
  %v5954 = vmax.f32 %v5881, 0.0
  %v5955 = vmax.f32 %v5885, 0.0
  %v5956 = vmax.f32 %v5887, 0.0
  %v5957 = vmax.f32 %v5891, 0.0
  %v5958 = vmax.f32 %v5893, 0.0
  %v5959 = vld [vmem:[%s16] sm:$0xff]
  %v5960 = vld [vmem:[%s16 + $0x8] sm:$0xff]
  %v5961 = vld [vmem:[%s17] sm:$0xff]
  %5963 = vset.pattern.permute.xlu0 0
  %5964 = vperm.xlu0 %5963, %v5961
  %v5965 = vpop.permute.xlu0 %5964
  %5967 = vmatprep.subr.mxu0 %v5896
  %5968 = vmatpush1.msra.mxu0 %v5895
  %5969 = vmatprep.subr.mxu0 %v5898
  %5970 = vmatpush1.msra.mxu0 %v5897
  %5971 = vmatprep.subr.mxu0 %v5900
  %5972 = vmatpush1.msra.mxu0 %v5899
  %5973 = vmatprep.subr.mxu0 %v5902
  %5974 = vmatpush1.msra.mxu0 %v5901
  %5975 = vmatprep.subr.mxu0 %v5904
  %5976 = vmatpush1.msra.mxu0 %v5903
  %5977 = vmatprep.subr.mxu0 %v5906
  %5978 = vmatpush1.msra.mxu0 %v5905
  %5979 = vmatprep.subr.mxu0 %v5908
  %5980 = vmatpush1.msra.mxu0 %v5907
  %5981 = vmatprep.subr.mxu0 %v5910
  %5982 = vmatpush1.msra.mxu0 %v5909
  %5983 = vmatprep.subr.mxu0 %v5912
  %5984 = vmatpush1.msra.mxu0 %v5911
  %5985 = vmatprep.subr.mxu0 %v5914
  %5986 = vmatpush1.msra.mxu0 %v5913
  %5987 = vmatprep.subr.mxu0 %v5916
  %5988 = vmatpush1.msra.mxu0 %v5915
  %5989 = vmatprep.subr.mxu0 %v5918
  %5990 = vmatpush1.msra.mxu0 %v5917
  %5991 = vmatprep.subr.mxu0 %v5920
  %5992 = vmatpush1.msra.mxu0 %v5919
  %5993 = vmatprep.subr.mxu0 %v5922
  %5994 = vmatpush1.msra.mxu0 %v5921
  %5995 = vmatprep.subr.mxu0 %v5924
  %5996 = vmatpush1.msra.mxu0 %v5923
  %5997 = vmatprep.subr.mxu0 %v5926
  %5998 = vmatpush1.msra.mxu0 %v5925
  %5999 = vmatprep.subr.mxu0 %v5928
  %6000 = vmatpush1.msra.mxu0 %v5927
  %6001 = vmatprep.subr.mxu0 %v5930
  %6002 = vmatpush1.msra.mxu0 %v5929
  %6003 = vmatprep.subr.mxu0 %v5932
  %6004 = vmatpush1.msra.mxu0 %v5931
  %6005 = vmatprep.subr.mxu0 %v5934
  %6006 = vmatpush1.msra.mxu0 %v5933
  %6007 = vmatprep.subr.mxu0 %v5936
  %6008 = vmatpush1.msra.mxu0 %v5935
  %6009 = vmatprep.subr.mxu0 %v5938
  %6010 = vmatpush1.msra.mxu0 %v5937
  %6011 = vmatprep.subr.mxu0 %v5940
  %6012 = vmatpush1.msra.mxu0 %v5939
  %6013 = vmatprep.subr.mxu0 %v5942
  %6014 = vmatpush1.msra.mxu0 %v5941
  %6015 = vmatprep.subr.mxu0 %v5944
  %6016 = vmatpush1.msra.mxu0 %v5943
  %6017 = vmatprep.subr.mxu0 %v5946
  %6018 = vmatpush1.msra.mxu0 %v5945
  %6019 = vmatprep.subr.mxu0 %v5948
  %6020 = vmatpush1.msra.mxu0 %v5947
  %6021 = vmatprep.subr.mxu0 %v5950
  %6022 = vmatpush1.msra.mxu0 %v5949
  %6023 = vmatprep.subr.mxu0 %v5952
  %6024 = vmatpush1.msra.mxu0 %v5951
  %6025 = vmatprep.subr.mxu0 %v5954
  %6026 = vmatpush1.msra.mxu0 %v5953
  %6027 = vmatprep.subr.mxu0 %v5956
  %6028 = vmatpush1.msra.mxu0 %v5955
  %6029 = vmatprep.subr.mxu0 %v5958
  %6030 = vmatpush1.msra.mxu0 %v5957
  %6031 = vmatprep.mubr.f32.mxu0 %v5960
  %6032 = vmatmul.mubr.f32.gmra.mrb[0].mxu0 %v5959
  %v6033 = vpop.f32.mrb[0].mxu0
  %v6034 = vadd.f32 %v5965, %v6033
  %v6035 = vpop.f32.mrb[0].mxu0
  %v6036 = vadd.f32 %v5965, %v6035
  %6037 = vdwg.mxu0
  %6038 = vst [vmem:[%s18] sm:$0xff] %v6034
  %6039 = vst [vmem:[%s18 + $0x8] sm:$0xff] %v6036
  // Predicated region
  $region74: #{graph_belief_regulator_forward.1} parent=0 // pred_check
    _
  $region75: #{graph_belief_regulator_forward.1} parent=0 // pred_check_branch
    %6041 = sbr.rel (0) target = $region77
  $region76: #{graph_belief_regulator_forward.1} parent=0 // pred_region
    _
  $region77: #{graph_belief_regulator_forward.1} parent=0 // pred_fallthru
    _
  // Predicated region
  $region78: #{graph_belief_regulator_forward.1} parent=0 // pred_check
    _
  $region79: #{graph_belief_regulator_forward.1} parent=0 // pred_check_branch
    %6043 = sbr.rel (0) target = $region81
  $region80: #{graph_belief_regulator_forward.1} parent=0 // pred_region
    _
  $region81: #{graph_belief_regulator_forward.1} parent=0 // pred_fallthru
    _
  // Predicated region
  $region82: #{graph_belief_regulator_forward.1} parent=0 // pred_check
    _
  $region83: #{graph_belief_regulator_forward.1} parent=0 // pred_check_branch
    %6045 = sbr.rel (0) target = $region85
  $region84: #{graph_belief_regulator_forward.1} parent=0 // pred_region
    _
  $region85: #{graph_belief_regulator_forward.1} parent=0 // pred_fallthru
    _
  // Predicated region
  $region86: #{graph_belief_regulator_forward.1} parent=0 // pred_check
    _
  $region87: #{graph_belief_regulator_forward.1} parent=0 // pred_check_branch
    %6047 = sbr.rel (0) target = $region89
  $region88: #{graph_belief_regulator_forward.1} parent=0 // pred_region
    _
  $region89: #{graph_belief_regulator_forward.1} parent=0 // pred_fallthru
    _

</llo_original>
